<compile_context>
chip_gen: v5e
topology: v5e:2x2
jax: 0.10.0
libtpu: 0.0.40
codegen_flags: <defaults>
</compile_context>

<pallas_src>
import functools

import jax
import jax.numpy as jnp
from jax import lax
from jax.experimental import pallas as pl
from jax.experimental.pallas import tpu as pltpu
import numpy as np


def _round_up(n, m=128):
    return (n + m - 1) // m * m


# Interior column start inside the haloed bf16 scratch; 16 keeps the interior
# store on a (16,128) bf16 sublane-tile boundary.
_COL0 = 16


# ---------------------------------------------------------------------------
# Kernel
# ---------------------------------------------------------------------------
def _double_conv_kernel(x_ref, w1_ref, b1_ref, w2_ref, b2_ref, o_ref, hp_ref,
                        *, w_valid):
    # x_ref : (1, H, W, C1P)          bf16  one image, channels padded to 128,
    #                                       W padded to a multiple of 16
    # w1_ref: (C1P, MIDP)             bf16  1x1 conv weight, BN scale folded in
    # b1_ref: (1, MIDP)               f32   folded conv-bias + BN bias
    # w2_ref: (9, MIDP, OUTP)         bf16  3x3 conv weight (k = ky*3+kx)
    # b2_ref: (1, OUTP)               f32
    # o_ref : (1, H, W, OUTP)         f32   output block
    # hp_ref: (H+2, W+2*_COL0, MIDP)  bf16  zero-haloed conv1 output; interior
    #         at rows [1, H+1), columns [_COL0, _COL0+W).
    # w_valid: number of real (unpadded) image columns; padded conv1 columns
    #         are forced to zero so the 3x3 conv sees the same zero padding
    #         as the PyTorch module.
    _, H, W, C1P = x_ref.shape
    MIDP = w1_ref.shape[1]
    OUTP = w2_ref.shape[2]
    WS = hp_ref.shape[1]

    # ---- zero only the halo cells the 3x3 taps read (cheap, every step) ----
    zrow = jnp.zeros((1, WS, MIDP), hp_ref.dtype)
    hp_ref[pl.ds(0, 1), :, :] = zrow
    hp_ref[pl.ds(H + 1, 1), :, :] = zrow
    zcol = jnp.zeros((H, _COL0, MIDP), hp_ref.dtype)
    hp_ref[pl.ds(1, H), pl.ds(0, _COL0), :] = zcol
    hp_ref[pl.ds(1, H), pl.ds(_COL0 + W, _COL0), :] = zcol

    # ---- conv 1x1 (+ folded BN) + ReLU -> bf16 haloed scratch ---------------
    x = x_ref[0].reshape(H * W, C1P)          # layout-free reshape (W % 16 == 0)
    h = jnp.dot(x, w1_ref[...], preferred_element_type=jnp.float32)
    h = jnp.maximum(h + b1_ref[...], 0.0).reshape(H, W, MIDP)
    if w_valid != W:                          # static branch: only if W padded
        col = lax.broadcasted_iota(jnp.int32, (1, W, 1), 1)
        h = jnp.where(col < w_valid, h, 0.0)
    hp_ref[pl.ds(1, H), pl.ds(_COL0, W), :] = h.astype(hp_ref.dtype)

    # ---- conv 3x3 (padding=1, + folded BN) + ReLU ---------------------------
    # 9 MXU matmuls (K = MIDP) accumulated in a traced f32 value; bias + ReLU
    # fused into the single final store of the output block.
    acc = None
    for k in range(9):
        ky, kx = divmod(k, 3)
        patch = hp_ref[pl.ds(ky, H), pl.ds(_COL0 - 1 + kx, W), :]
        tap = jnp.dot(patch.reshape(H * W, MIDP), w2_ref[k],
                      preferred_element_type=jnp.float32)
        acc = tap if acc is None else acc + tap
    o_ref[0] = jnp.maximum(acc + b2_ref[...], 0.0).reshape(H, W, OUTP)


# ---------------------------------------------------------------------------
# Wrapper
# ---------------------------------------------------------------------------
def _vmem_limit_bytes(H, W, C1P, MIDP, OUTP):
    ws = W + 2 * _COL0
    x_blk = 2 * H * W * C1P * 2            # bf16 input block, double-buffered
    o_blk = 2 * H * W * OUTP * 4           # f32 output block, double-buffered
    wgt = 2 * (C1P * MIDP * 2 + MIDP * 4 + 9 * MIDP * OUTP * 2 + OUTP * 4)
    scr = (H + 2) * ws * MIDP * 2          # bf16 haloed conv1 scratch
    tmp = H * W * (MIDP + OUTP) * 4        # f32 h / acc live values
    est = x_blk + o_blk + wgt + scr + tmp
    # 2x headroom for compiler temporaries; clamp to [32 MiB, 64 MiB]
    # (64 MiB = v7x physical per-TC VMEM, v5e/v6e have 128 MiB).
    return int(min(max(2 * est, 32 << 20), 64 << 20))


@functools.partial(jax.jit, static_argnums=(2,))
def double_conv_pallas(x_nhwc, kernel_params, out_ch):
    """Fused double_conv forward.

    x_nhwc: (N, H, W, in_ch+mid_ch) f32, channels-last.  Returns
    (N, H, W, out_ch) f32.  Keeping activations channels-last avoids an HBM
    NCHW<->NHWC round trip per layer.
    """
    w1, b1, w2, b2 = kernel_params
    N, H, W, C1 = x_nhwc.shape
    C1P, MIDP = w1.shape
    OUTP = w2.shape[2]

    Wp = ((W + 15) // 16) * 16             # bf16 sublane-tile aligned width
    pad_w, pad_c = Wp - W, C1P - C1
    x = x_nhwc
    if pad_w or pad_c:                     # zero pad: padded weights/cols are 0
        x = jnp.pad(x, ((0, 0), (0, 0), (0, pad_w), (0, pad_c)))
    x = x.astype(jnp.bfloat16)             # bf16 matmul operands, f32 accumulate

    kernel = functools.partial(_double_conv_kernel, w_valid=W)

    out = pl.pallas_call(
        kernel,
        out_shape=jax.ShapeDtypeStruct((N, H, Wp, OUTP), jnp.float32),
        grid=(N,),
        in_specs=[
            pl.BlockSpec((1, H, Wp, C1P), lambda n: (n, 0, 0, 0)),
            pl.BlockSpec((C1P, MIDP), lambda n: (0, 0)),
            pl.BlockSpec((1, MIDP), lambda n: (0, 0)),
            pl.BlockSpec((9, MIDP, OUTP), lambda n: (0, 0, 0)),
            pl.BlockSpec((1, OUTP), lambda n: (0, 0)),
        ],
        out_specs=pl.BlockSpec((1, H, Wp, OUTP), lambda n: (n, 0, 0, 0)),
        scratch_shapes=[
            pltpu.VMEM((H + 2, Wp + 2 * _COL0, MIDP), jnp.bfloat16),
        ],
        compiler_params=pltpu.CompilerParams(
            dimension_semantics=("parallel",),
            vmem_limit_bytes=_vmem_limit_bytes(H, Wp, C1P, MIDP, OUTP)),
    )(x, w1, b1, w2, b2)

    return out[:, :, :W, :out_ch]


# ---------------------------------------------------------------------------
# Parameters
# ---------------------------------------------------------------------------
def make_raw_params(key, in_ch, mid_ch, out_ch):
    """Deterministic synthetic PyTorch-shaped parameters (eval-mode BN)."""
    c1 = in_ch + mid_ch
    ks = jax.random.split(key, 12)
    w1 = 0.1 * jax.random.normal(ks[0], (mid_ch, c1, 1, 1), jnp.float32)     # OIHW
    cb1 = 0.1 * jax.random.normal(ks[1], (mid_ch,), jnp.float32)
    g1 = 1.0 + 0.1 * jax.random.normal(ks[2], (mid_ch,), jnp.float32)
    be1 = 0.1 * jax.random.normal(ks[3], (mid_ch,), jnp.float32)
    rm1 = 0.1 * jax.random.normal(ks[4], (mid_ch,), jnp.float32)
    rv1 = 1.0 + 0.1 * jnp.abs(jax.random.normal(ks[5], (mid_ch,), jnp.float32))
    w2 = 0.1 * jax.random.normal(ks[6], (out_ch, mid_ch, 3, 3), jnp.float32)  # OIHW
    cb2 = 0.1 * jax.random.normal(ks[7], (out_ch,), jnp.float32)
    g2 = 1.0 + 0.1 * jax.random.normal(ks[8], (out_ch,), jnp.float32)
    be2 = 0.1 * jax.random.normal(ks[9], (out_ch,), jnp.float32)
    rm2 = 0.1 * jax.random.normal(ks[10], (out_ch,), jnp.float32)
    rv2 = 1.0 + 0.1 * jnp.abs(jax.random.normal(ks[11], (out_ch,), jnp.float32))
    return (w1, cb1, g1, be1, rm1, rv1, w2, cb2, g2, be2, rm2, rv2)


def prepare_kernel_params(raw_params, eps=1e-5):
    """Fold conv bias + eval-mode BN into weights/biases, pad channels to
    multiples of 128 and cast matmul operands to bf16.  Done once."""
    (w1, cb1, g1, be1, rm1, rv1, w2, cb2, g2, be2, rm2, rv2) = raw_params
    mid_ch, c1 = w1.shape[0], w1.shape[1]
    out_ch = w2.shape[0]

    sc1 = g1 / jnp.sqrt(rv1 + eps)
    bi1 = (cb1 - rm1) * sc1 + be1
    sc2 = g2 / jnp.sqrt(rv2 + eps)
    bi2 = (cb2 - rm2) * sc2 + be2

    # Fold BN scale into the conv weights (f32), convert layouts.
    w1_mat = jnp.transpose(w1[:, :, 0, 0] * sc1[:, None], (1, 0))            # (C1, MID)
    w2_hwio = jnp.transpose(w2 * sc2[:, None, None, None], (2, 3, 1, 0))     # (3,3,MID,OUT)

    # Zero-pad every channel dim to a multiple of 128 (lane-dense, exact).
    c1p, midp, outp = _round_up(c1), _round_up(mid_ch), _round_up(out_ch)
    w1_p = jnp.zeros((c1p, midp), jnp.float32).at[:c1, :mid_ch].set(w1_mat)
    b1_p = jnp.zeros((1, midp), jnp.float32).at[0, :mid_ch].set(bi1)
    w2_p = jnp.zeros((3, 3, midp, outp), jnp.float32)
    w2_p = w2_p.at[:, :, :mid_ch, :out_ch].set(w2_hwio)
    b2_p = jnp.zeros((1, outp), jnp.float32).at[0, :out_ch].set(bi2)

    return (w1_p.astype(jnp.bfloat16), b1_p,
            w2_p.reshape(9, midp, outp).astype(jnp.bfloat16), b2_p)


# ---------------------------------------------------------------------------
# References
# ---------------------------------------------------------------------------
def double_conv_reference(x_nhwc, raw_params, eps=1e-5):
    """Pure-JAX f32 reference of the PyTorch eval-mode forward (NHWC layout,
    mathematically identical to the NCHW module)."""
    (w1, cb1, g1, be1, rm1, rv1, w2, cb2, g2, be2, rm2, rv2) = raw_params
    dn = ("NHWC", "HWIO", "NHWC")
    hi = lax.Precision.HIGHEST

    y = lax.conv_general_dilated(x_nhwc, jnp.transpose(w1, (2, 3, 1, 0)),
                                 (1, 1), "VALID", dimension_numbers=dn,
                                 precision=hi)
    y = (y + cb1 - rm1) / jnp.sqrt(rv1 + eps) * g1 + be1
    y = jnp.maximum(y, 0.0)

    y = lax.conv_general_dilated(y, jnp.transpose(w2, (2, 3, 1, 0)),
                                 (1, 1), [(1, 1), (1, 1)],
                                 dimension_numbers=dn, precision=hi)
    y = (y + cb2 - rm2) / jnp.sqrt(rv2 + eps) * g2 + be2
    y = jnp.maximum(y, 0.0)
    return y


def double_conv_reference_quantized(x_nhwc, kernel_params, out_ch):
    """Reference applying the same bf16 quantization / BN folding as the
    kernel, so it matches to f32 accumulation-order noise."""
    w1, b1, w2, b2 = kernel_params
    c1p, midp = w1.shape
    outp = w2.shape[2]
    _, H, W, c1 = x_nhwc.shape
    dn = ("NHWC", "HWIO", "NHWC")
    hi = lax.Precision.HIGHEST

    xq = jnp.pad(x_nhwc, ((0, 0), (0, 0), (0, 0), (0, c1p - c1)))
    xq = xq.astype(jnp.bfloat16).astype(jnp.float32)

    h = jnp.einsum("nhwc,cm->nhwm", xq, w1.astype(jnp.float32),
                   precision=hi) + b1[0]
    h = jnp.maximum(h, 0.0).astype(jnp.bfloat16).astype(jnp.float32)

    w2_hwio = w2.astype(jnp.float32).reshape(3, 3, midp, outp)
    y = lax.conv_general_dilated(h, w2_hwio, (1, 1), [(1, 1), (1, 1)],
                                 dimension_numbers=dn, precision=hi)
    y = jnp.maximum(y + b2[0], 0.0)
    return y[..., :out_ch]


# ---------------------------------------------------------------------------
if __name__ == "__main__":
    # double_conv(in_ch=4, mid_ch=4, out_ch=8): input has in_ch+mid_ch = 8
    # channels.  Activations are channels-last (NHWC).
    N, in_ch, mid_ch, out_ch, H, W = 2, 4, 4, 8, 16, 16

    key = jax.random.PRNGKey(0)
    kx, kp = jax.random.split(key)
    x = jax.random.normal(kx, (N, H, W, in_ch + mid_ch), jnp.float32)

    raw_params = make_raw_params(kp, in_ch, mid_ch, out_ch)
    kernel_params = prepare_kernel_params(raw_params)

    out = jax.block_until_ready(double_conv_pallas(x, kernel_params, out_ch))

    # 1) Tight check against a quantization-matched reference (same folded
    #    bf16 operands; differences are accumulation order only).
    ref_q = jax.block_until_ready(
        double_conv_reference_quantized(x, kernel_params, out_ch))
    np.testing.assert_allclose(np.asarray(out), np.asarray(ref_q),
                               rtol=1e-3, atol=1e-3)

    # 2) Looser check against the full-f32 PyTorch-style forward; the gap is
    #    bf16 quantization of the matmul operands.
    ref_f = jax.block_until_ready(double_conv_reference(x, raw_params))
    np.testing.assert_allclose(np.asarray(out), np.asarray(ref_f),
                               rtol=2e-2, atol=2e-2)

    print("KERNEL_OK")
</pallas_src>

<mosaic_0001>
module attributes {stable_mosaic.version = 11 : i64} {
  func.func @_double_conv_kernel(%arg0: i32, %arg1: memref<1x16x16x128xbf16, #tpu.memory_space<vmem>>, %arg2: memref<128x128xbf16, #tpu.memory_space<vmem>>, %arg3: memref<1x128xf32, #tpu.memory_space<vmem>>, %arg4: memref<9x128x128xbf16, #tpu.memory_space<vmem>>, %arg5: memref<1x128xf32, #tpu.memory_space<vmem>>, %arg6: memref<1x16x16x128xf32, #tpu.memory_space<vmem>>, %arg7: memref<18x48x128xbf16, #tpu.memory_space<vmem>>) attributes {dimension_semantics = [#tpu.dimension_semantics<parallel>], iteration_bounds = array<i64: 2>, scalar_prefetch = 0 : i64, scratch_operands = 1 : i64, tpu.core_type = #tpu.core_type<tc>, window_params = [{transform_indices = @transform_0, window_bounds = array<i64: 1, 16, 16, 128>}, {pipeline_mode = #tpu.pipeline_mode<synchronous>, transform_indices = @transform_1, window_bounds = array<i64: 128, 128>}, {pipeline_mode = #tpu.pipeline_mode<synchronous>, transform_indices = @transform_2, window_bounds = array<i64: 1, 128>}, {pipeline_mode = #tpu.pipeline_mode<synchronous>, transform_indices = @transform_3, window_bounds = array<i64: 9, 128, 128>}, {pipeline_mode = #tpu.pipeline_mode<synchronous>, transform_indices = @transform_4, window_bounds = array<i64: 1, 128>}, {transform_indices = @transform_5, window_bounds = array<i64: 1, 16, 16, 128>}]} {
    %cst = arith.constant 0.000000e+00 : bf16
    %0 = vector.broadcast %cst : bf16 to vector<1x48x128xbf16>
    %c0 = arith.constant 0 : index
    %c0_0 = arith.constant 0 : index
    %c0_1 = arith.constant 0 : index
    %1 = vector.load %arg7[%c0, %c0_0, %c0_1] : memref<18x48x128xbf16, #tpu.memory_space<vmem>>, vector<1x48x128xbf16>
    tpu.vector_store %arg7[%c0, %c0_0, %c0_1], %0 {strides = array<i32>} : memref<18x48x128xbf16, #tpu.memory_space<vmem>>, vector<1x48x128xbf16>,
    %c17 = arith.constant 17 : index
    %c0_2 = arith.constant 0 : index
    %c0_3 = arith.constant 0 : index
    %2 = vector.load %arg7[%c17, %c0_2, %c0_3] : memref<18x48x128xbf16, #tpu.memory_space<vmem>>, vector<1x48x128xbf16>
    tpu.vector_store %arg7[%c17, %c0_2, %c0_3], %0 {strides = array<i32>} : memref<18x48x128xbf16, #tpu.memory_space<vmem>>, vector<1x48x128xbf16>,
    %cst_4 = arith.constant 0.000000e+00 : bf16
    %3 = vector.broadcast %cst_4 : bf16 to vector<16x16x128xbf16>
    %c1 = arith.constant 1 : index
    %c0_5 = arith.constant 0 : index
    %c0_6 = arith.constant 0 : index
    %4 = vector.load %arg7[%c1, %c0_5, %c0_6] : memref<18x48x128xbf16, #tpu.memory_space<vmem>>, vector<16x16x128xbf16>
    tpu.vector_store %arg7[%c1, %c0_5, %c0_6], %3 {strides = array<i32>} : memref<18x48x128xbf16, #tpu.memory_space<vmem>>, vector<16x16x128xbf16>,
    %c1_7 = arith.constant 1 : index
    %c32 = arith.constant 32 : index
    %c0_8 = arith.constant 0 : index
    %5 = vector.load %arg7[%c1_7, %c32, %c0_8] : memref<18x48x128xbf16, #tpu.memory_space<vmem>>, vector<16x16x128xbf16>
    tpu.vector_store %arg7[%c1_7, %c32, %c0_8], %3 {strides = array<i32>} : memref<18x48x128xbf16, #tpu.memory_space<vmem>>, vector<16x16x128xbf16>,
    %c0_9 = arith.constant 0 : index
    %c0_10 = arith.constant 0 : index
    %c0_11 = arith.constant 0 : index
    %c0_12 = arith.constant 0 : index
    %6 = vector.load %arg1[%c0_9, %c0_10, %c0_11, %c0_12] : memref<1x16x16x128xbf16, #tpu.memory_space<vmem>>, vector<1x16x16x128xbf16>
    %7 = vector.shape_cast %6 : vector<1x16x16x128xbf16> to vector<16x16x128xbf16>
    %8 = vector.shape_cast %7 : vector<16x16x128xbf16> to vector<256x128xbf16>
    %c0_13 = arith.constant 0 : index
    %c0_14 = arith.constant 0 : index
    %9 = vector.load %arg2[%c0_13, %c0_14] : memref<128x128xbf16, #tpu.memory_space<vmem>>, vector<128x128xbf16>
    %cst_15 = arith.constant dense<0.000000e+00> : vector<256x128xf32>
    %10 = tpu.matmul %8, %9, %cst_15 {dimension_numbers = #tpu.dot_dimension_numbers<[1], [0], [0], [1], [0, 0, 1, 1], [], []>} : vector<256x128xbf16>, vector<128x128xbf16>, vector<256x128xf32> -> vector<256x128xf32>
    %c0_16 = arith.constant 0 : index
    %c0_17 = arith.constant 0 : index
    %11 = vector.load %arg3[%c0_16, %c0_17] : memref<1x128xf32, #tpu.memory_space<vmem>>, vector<1x128xf32>
    %12 = vector.broadcast %11 : vector<1x128xf32> to vector<256x128xf32>
    %13 = arith.addf %10, %12 : vector<256x128xf32>
    %cst_18 = arith.constant 0.000000e+00 : f32
    %14 = vector.broadcast %cst_18 : f32 to vector<256x128xf32>
    %15 = arith.maximumf %13, %14 : vector<256x128xf32>
    %16 = vector.shape_cast %15 : vector<256x128xf32> to vector<16x16x128xf32>
    %17 = arith.truncf %16 : vector<16x16x128xf32> to vector<16x16x128xbf16>
    %c1_19 = arith.constant 1 : index
    %c16 = arith.constant 16 : index
    %c0_20 = arith.constant 0 : index
    %18 = vector.load %arg7[%c1_19, %c16, %c0_20] : memref<18x48x128xbf16, #tpu.memory_space<vmem>>, vector<16x16x128xbf16>
    tpu.vector_store %arg7[%c1_19, %c16, %c0_20], %17 {strides = array<i32>} : memref<18x48x128xbf16, #tpu.memory_space<vmem>>, vector<16x16x128xbf16>,
    %c0_21 = arith.constant 0 : index
    %c15 = arith.constant 15 : index
    %c0_22 = arith.constant 0 : index
    %19 = vector.load %arg7[%c0_21, %c15, %c0_22] : memref<18x48x128xbf16, #tpu.memory_space<vmem>>, vector<16x16x128xbf16>
    %20 = vector.shape_cast %19 : vector<16x16x128xbf16> to vector<256x128xbf16>
    %c0_23 = arith.constant 0 : index
    %c0_24 = arith.constant 0 : index
    %c0_25 = arith.constant 0 : index
    %21 = vector.load %arg4[%c0_23, %c0_24, %c0_25] : memref<9x128x128xbf16, #tpu.memory_space<vmem>>, vector<1x128x128xbf16>
    %22 = vector.shape_cast %21 : vector<1x128x128xbf16> to vector<128x128xbf16>
    %cst_26 = arith.constant dense<0.000000e+00> : vector<256x128xf32>
    %23 = tpu.matmul %20, %22, %cst_26 {dimension_numbers = #tpu.dot_dimension_numbers<[1], [0], [0], [1], [0, 0, 1, 1], [], []>} : vector<256x128xbf16>, vector<128x128xbf16>, vector<256x128xf32> -> vector<256x128xf32>
    %c0_27 = arith.constant 0 : index
    %c16_28 = arith.constant 16 : index
    %c0_29 = arith.constant 0 : index
    %24 = vector.load %arg7[%c0_27, %c16_28, %c0_29] : memref<18x48x128xbf16, #tpu.memory_space<vmem>>, vector<16x16x128xbf16>
    %25 = vector.shape_cast %24 : vector<16x16x128xbf16> to vector<256x128xbf16>
    %c1_30 = arith.constant 1 : index
    %c0_31 = arith.constant 0 : index
    %c0_32 = arith.constant 0 : index
    %26 = vector.load %arg4[%c1_30, %c0_31, %c0_32] : memref<9x128x128xbf16, #tpu.memory_space<vmem>>, vector<1x128x128xbf16>
    %27 = vector.shape_cast %26 : vector<1x128x128xbf16> to vector<128x128xbf16>
    %cst_33 = arith.constant dense<0.000000e+00> : vector<256x128xf32>
    %28 = tpu.matmul %25, %27, %cst_33 {dimension_numbers = #tpu.dot_dimension_numbers<[1], [0], [0], [1], [0, 0, 1, 1], [], []>} : vector<256x128xbf16>, vector<128x128xbf16>, vector<256x128xf32> -> vector<256x128xf32>
    %29 = arith.addf %23, %28 : vector<256x128xf32>
    %c0_34 = arith.constant 0 : index
    %c17_35 = arith.constant 17 : index
    %c0_36 = arith.constant 0 : index
    %30 = vector.load %arg7[%c0_34, %c17_35, %c0_36] : memref<18x48x128xbf16, #tpu.memory_space<vmem>>, vector<16x16x128xbf16>
    %31 = vector.shape_cast %30 : vector<16x16x128xbf16> to vector<256x128xbf16>
    %c2 = arith.constant 2 : index
    %c0_37 = arith.constant 0 : index
    %c0_38 = arith.constant 0 : index
    %32 = vector.load %arg4[%c2, %c0_37, %c0_38] : memref<9x128x128xbf16, #tpu.memory_space<vmem>>, vector<1x128x128xbf16>
    %33 = vector.shape_cast %32 : vector<1x128x128xbf16> to vector<128x128xbf16>
    %cst_39 = arith.constant dense<0.000000e+00> : vector<256x128xf32>
    %34 = tpu.matmul %31, %33, %cst_39 {dimension_numbers = #tpu.dot_dimension_numbers<[1], [0], [0], [1], [0, 0, 1, 1], [], []>} : vector<256x128xbf16>, vector<128x128xbf16>, vector<256x128xf32> -> vector<256x128xf32>
    %35 = arith.addf %29, %34 : vector<256x128xf32>
    %c1_40 = arith.constant 1 : index
    %c15_41 = arith.constant 15 : index
    %c0_42 = arith.constant 0 : index
    %36 = vector.load %arg7[%c1_40, %c15_41, %c0_42] : memref<18x48x128xbf16, #tpu.memory_space<vmem>>, vector<16x16x128xbf16>
    %37 = vector.shape_cast %36 : vector<16x16x128xbf16> to vector<256x128xbf16>
    %c3 = arith.constant 3 : index
    %c0_43 = arith.constant 0 : index
    %c0_44 = arith.constant 0 : index
    %38 = vector.load %arg4[%c3, %c0_43, %c0_44] : memref<9x128x128xbf16, #tpu.memory_space<vmem>>, vector<1x128x128xbf16>
    %39 = vector.shape_cast %38 : vector<1x128x128xbf16> to vector<128x128xbf16>
    %cst_45 = arith.constant dense<0.000000e+00> : vector<256x128xf32>
    %40 = tpu.matmul %37, %39, %cst_45 {dimension_numbers = #tpu.dot_dimension_numbers<[1], [0], [0], [1], [0, 0, 1, 1], [], []>} : vector<256x128xbf16>, vector<128x128xbf16>, vector<256x128xf32> -> vector<256x128xf32>
    %41 = arith.addf %35, %40 : vector<256x128xf32>
    %c1_46 = arith.constant 1 : index
    %c16_47 = arith.constant 16 : index
    %c0_48 = arith.constant 0 : index
    %42 = vector.load %arg7[%c1_46, %c16_47, %c0_48] : memref<18x48x128xbf16, #tpu.memory_space<vmem>>, vector<16x16x128xbf16>
    %43 = vector.shape_cast %42 : vector<16x16x128xbf16> to vector<256x128xbf16>
    %c4 = arith.constant 4 : index
    %c0_49 = arith.constant 0 : index
    %c0_50 = arith.constant 0 : index
    %44 = vector.load %arg4[%c4, %c0_49, %c0_50] : memref<9x128x128xbf16, #tpu.memory_space<vmem>>, vector<1x128x128xbf16>
    %45 = vector.shape_cast %44 : vector<1x128x128xbf16> to vector<128x128xbf16>
    %cst_51 = arith.constant dense<0.000000e+00> : vector<256x128xf32>
    %46 = tpu.matmul %43, %45, %cst_51 {dimension_numbers = #tpu.dot_dimension_numbers<[1], [0], [0], [1], [0, 0, 1, 1], [], []>} : vector<256x128xbf16>, vector<128x128xbf16>, vector<256x128xf32> -> vector<256x128xf32>
    %47 = arith.addf %41, %46 : vector<256x128xf32>
    %c1_52 = arith.constant 1 : index
    %c17_53 = arith.constant 17 : index
    %c0_54 = arith.constant 0 : index
    %48 = vector.load %arg7[%c1_52, %c17_53, %c0_54] : memref<18x48x128xbf16, #tpu.memory_space<vmem>>, vector<16x16x128xbf16>
    %49 = vector.shape_cast %48 : vector<16x16x128xbf16> to vector<256x128xbf16>
    %c5 = arith.constant 5 : index
    %c0_55 = arith.constant 0 : index
    %c0_56 = arith.constant 0 : index
    %50 = vector.load %arg4[%c5, %c0_55, %c0_56] : memref<9x128x128xbf16, #tpu.memory_space<vmem>>, vector<1x128x128xbf16>
    %51 = vector.shape_cast %50 : vector<1x128x128xbf16> to vector<128x128xbf16>
    %cst_57 = arith.constant dense<0.000000e+00> : vector<256x128xf32>
    %52 = tpu.matmul %49, %51, %cst_57 {dimension_numbers = #tpu.dot_dimension_numbers<[1], [0], [0], [1], [0, 0, 1, 1], [], []>} : vector<256x128xbf16>, vector<128x128xbf16>, vector<256x128xf32> -> vector<256x128xf32>
    %53 = arith.addf %47, %52 : vector<256x128xf32>
    %c2_58 = arith.constant 2 : index
    %c15_59 = arith.constant 15 : index
    %c0_60 = arith.constant 0 : index
    %54 = vector.load %arg7[%c2_58, %c15_59, %c0_60] : memref<18x48x128xbf16, #tpu.memory_space<vmem>>, vector<16x16x128xbf16>
    %55 = vector.shape_cast %54 : vector<16x16x128xbf16> to vector<256x128xbf16>
    %c6 = arith.constant 6 : index
    %c0_61 = arith.constant 0 : index
    %c0_62 = arith.constant 0 : index
    %56 = vector.load %arg4[%c6, %c0_61, %c0_62] : memref<9x128x128xbf16, #tpu.memory_space<vmem>>, vector<1x128x128xbf16>
    %57 = vector.shape_cast %56 : vector<1x128x128xbf16> to vector<128x128xbf16>
    %cst_63 = arith.constant dense<0.000000e+00> : vector<256x128xf32>
    %58 = tpu.matmul %55, %57, %cst_63 {dimension_numbers = #tpu.dot_dimension_numbers<[1], [0], [0], [1], [0, 0, 1, 1], [], []>} : vector<256x128xbf16>, vector<128x128xbf16>, vector<256x128xf32> -> vector<256x128xf32>
    %59 = arith.addf %53, %58 : vector<256x128xf32>
    %c2_64 = arith.constant 2 : index
    %c16_65 = arith.constant 16 : index
    %c0_66 = arith.constant 0 : index
    %60 = vector.load %arg7[%c2_64, %c16_65, %c0_66] : memref<18x48x128xbf16, #tpu.memory_space<vmem>>, vector<16x16x128xbf16>
    %61 = vector.shape_cast %60 : vector<16x16x128xbf16> to vector<256x128xbf16>
    %c7 = arith.constant 7 : index
    %c0_67 = arith.constant 0 : index
    %c0_68 = arith.constant 0 : index
    %62 = vector.load %arg4[%c7, %c0_67, %c0_68] : memref<9x128x128xbf16, #tpu.memory_space<vmem>>, vector<1x128x128xbf16>
    %63 = vector.shape_cast %62 : vector<1x128x128xbf16> to vector<128x128xbf16>
    %cst_69 = arith.constant dense<0.000000e+00> : vector<256x128xf32>
    %64 = tpu.matmul %61, %63, %cst_69 {dimension_numbers = #tpu.dot_dimension_numbers<[1], [0], [0], [1], [0, 0, 1, 1], [], []>} : vector<256x128xbf16>, vector<128x128xbf16>, vector<256x128xf32> -> vector<256x128xf32>
    %65 = arith.addf %59, %64 : vector<256x128xf32>
    %c2_70 = arith.constant 2 : index
    %c17_71 = arith.constant 17 : index
    %c0_72 = arith.constant 0 : index
    %66 = vector.load %arg7[%c2_70, %c17_71, %c0_72] : memref<18x48x128xbf16, #tpu.memory_space<vmem>>, vector<16x16x128xbf16>
    %67 = vector.shape_cast %66 : vector<16x16x128xbf16> to vector<256x128xbf16>
    %c8 = arith.constant 8 : index
    %c0_73 = arith.constant 0 : index
    %c0_74 = arith.constant 0 : index
    %68 = vector.load %arg4[%c8, %c0_73, %c0_74] : memref<9x128x128xbf16, #tpu.memory_space<vmem>>, vector<1x128x128xbf16>
    %69 = vector.shape_cast %68 : vector<1x128x128xbf16> to vector<128x128xbf16>
    %cst_75 = arith.constant dense<0.000000e+00> : vector<256x128xf32>
    %70 = tpu.matmul %67, %69, %cst_75 {dimension_numbers = #tpu.dot_dimension_numbers<[1], [0], [0], [1], [0, 0, 1, 1], [], []>} : vector<256x128xbf16>, vector<128x128xbf16>, vector<256x128xf32> -> vector<256x128xf32>
    %71 = arith.addf %65, %70 : vector<256x128xf32>
    %c0_76 = arith.constant 0 : index
    %c0_77 = arith.constant 0 : index
    %72 = vector.load %arg5[%c0_76, %c0_77] : memref<1x128xf32, #tpu.memory_space<vmem>>, vector<1x128xf32>
    %73 = vector.broadcast %72 : vector<1x128xf32> to vector<256x128xf32>
    %74 = arith.addf %71, %73 : vector<256x128xf32>
    %cst_78 = arith.constant 0.000000e+00 : f32
    %75 = vector.broadcast %cst_78 : f32 to vector<256x128xf32>
    %76 = arith.maximumf %74, %75 : vector<256x128xf32>
    %77 = vector.shape_cast %76 : vector<256x128xf32> to vector<16x16x128xf32>
    %c0_79 = arith.constant 0 : index
    %c0_80 = arith.constant 0 : index
    %c0_81 = arith.constant 0 : index
    %c0_82 = arith.constant 0 : index
    %78 = vector.load %arg6[%c0_79, %c0_80, %c0_81, %c0_82] : memref<1x16x16x128xf32, #tpu.memory_space<vmem>>, vector<1x16x16x128xf32>
    %79 = vector.shape_cast %78 : vector<1x16x16x128xf32> to vector<16x16x128xf32>
    %80 = vector.shape_cast %77 : vector<16x16x128xf32> to vector<1x16x16x128xf32>
    tpu.vector_store %arg6[%c0_79, %c0_80, %c0_81, %c0_82], %80 {strides = array<i32>} : memref<1x16x16x128xf32, #tpu.memory_space<vmem>>, vector<1x16x16x128xf32>,
    return
  }
  func.func @transform_0(%arg0: i32) -> (i32, i32, i32, i32) {
    %c0_i32 = arith.constant 0 : i32
    %c0_i32_0 = arith.constant 0 : i32
    %c0_i32_1 = arith.constant 0 : i32
    %c0_i32_2 = arith.constant 0 : i32
    return %arg0, %c0_i32, %c0_i32_0, %c0_i32_1 : i32, i32, i32, i32
  }
  func.func @transform_1(%arg0: i32) -> (i32, i32) {
    %c0_i32 = arith.constant 0 : i32
    %c0_i32_0 = arith.constant 0 : i32
    %c0_i32_1 = arith.constant 0 : i32
    return %c0_i32, %c0_i32_0 : i32, i32
  }
  func.func @transform_2(%arg0: i32) -> (i32, i32) {
    %c0_i32 = arith.constant 0 : i32
    %c0_i32_0 = arith.constant 0 : i32
    %c0_i32_1 = arith.constant 0 : i32
    return %c0_i32, %c0_i32_0 : i32, i32
  }
  func.func @transform_3(%arg0: i32) -> (i32, i32, i32) {
    %c0_i32 = arith.constant 0 : i32
    %c0_i32_0 = arith.constant 0 : i32
    %c0_i32_1 = arith.constant 0 : i32
    %c0_i32_2 = arith.constant 0 : i32
    return %c0_i32, %c0_i32_0, %c0_i32_1 : i32, i32, i32
  }
  func.func @transform_4(%arg0: i32) -> (i32, i32) {
    %c0_i32 = arith.constant 0 : i32
    %c0_i32_0 = arith.constant 0 : i32
    %c0_i32_1 = arith.constant 0 : i32
    return %c0_i32, %c0_i32_0 : i32, i32
  }
  func.func @transform_5(%arg0: i32) -> (i32, i32, i32, i32) {
    %c0_i32 = arith.constant 0 : i32
    %c0_i32_0 = arith.constant 0 : i32
    %c0_i32_1 = arith.constant 0 : i32
    %c0_i32_2 = arith.constant 0 : i32
    return %arg0, %c0_i32, %c0_i32_0, %c0_i32_1 : i32, i32, i32, i32
  }
}

</mosaic_0001>

<llo_original>
// kernel: double_conv_pallas.1
$region0: #{double_conv_pallas.1}
  #allocation0 [shape = 'u32[]', space=smem, size = 0x4, offset = 0x4, fixed_abs, tag = 'smem constant byte address 0x4 - core index']
  #allocation1 [shape = 'u32[72,128]{1,0:T(1,128)}', space=vmem, size = 0x9000, scoped, tag = 'internal scratch']
  #allocation2 [shape = 'bf16[18,48,128]{2,1,0:T(8,128)(2,1)}', space=vmem, size = 0x36000, scoped, tag = 'scratch operand']
  %s0 = inlined_call_operand.vmem [shape: bf16[2,16,16,128], index: 0, kind: input, shape index: {}]
  %s1 = inlined_call_operand.vmem [shape: bf16[128,128], index: 1, kind: input, shape index: {}]
  %s2 = inlined_call_operand.vmem [shape: f32[1,128], index: 2, kind: input, shape index: {}]
  %s3 = inlined_call_operand.vmem [shape: bf16[9,128,128], index: 3, kind: input, shape index: {}]
  %s4 = inlined_call_operand.vmem [shape: f32[1,128], index: 4, kind: input, shape index: {}]
  %s5 = inlined_call_operand.vmem [shape: f32[2,16,16,128], index: 5, kind: output, shape index: {}]
  %s6 = sld [smem:[#allocation0]]
  $region53: #{double_conv_pallas.1} parent=0
    _
  %s8 = ssub.s32 1, %s6
  %s9 = scalar_select 0, %s8, %s6
  loop: start=0, step=1, limit=4
  $region2: #{double_conv_pallas.1} parent=0 // loop_pre_header
    _
  $region3: #{double_conv_pallas.1} parent=0 // loop_header
    %s11 = sphi 0, %s15
    %p12 = scmp.ge.s32.totalorder %s11, 4
    %s21 = sphi 0, %s23
    %s24 = sphi 0, %s21
    %s25 = sphi 0, %s24
    %s41 = sphi 0, %s25
    %s45 = sphi 0, %s45
    %s47 = sphi 0, %s45
    %s48 = sphi 0, %s47
    %s62 = sphi 0, %s48
    %s66 = sphi 0, %s66
    %s68 = sphi 0, %s66
    %s69 = sphi 0, %s68
    %s83 = sphi 0, %s69
    %s87 = sphi 0, %s87
    %s89 = sphi 0, %s87
    %s90 = sphi 0, %s89
    %s104 = sphi 0, %s90
    %s108 = sphi 0, %s108
    %s110 = sphi 0, %s108
    %s111 = sphi 0, %s110
    %s125 = sphi 0, %s111
    %s131 = sphi 0, %s133
    %s134 = sphi 0, %s131
    %s135 = sphi 0, %s134
    %s151 = sphi 0, %s135
  $region4: #{double_conv_pallas.1} parent=0 // loop_header_branch
    %14 = sbr.rel (%p12) target = $region8
  $region5: #{double_conv_pallas.1} parent=0 // loop_body
    %s16 = ssub.s32 %s11, 1
    %s17 = ssub.s32 %s11, 2
    %s18 = sadd.s32 %s11, 1
    %s19 = ssub.s32 %s11, %s18
    %p20 = scmp.eq.s32.totalorder %s19, 0
    %s22 = sadd.s32 %s21, 1
    %s23 = scalar_select %p20, %s21, %s22
    %p26 = pneg %p20
    %p27 = scmp.eq.s32.totalorder %s11, 1
    %p28 = por %p26, %p27
    %p29 = scmp.ne.s32.totalorder %s21, %s24
    %p30 = scmp.eq.s32.totalorder %s11, 0
    %p31 = por %p29, %p30
    %p32 = scmp.ne.s32.totalorder %s21, %s24
    %p33 = scmp.eq.s32.totalorder %s16, 1
    %p34 = por %p32, %p33
    %p35 = scmp.ne.s32.totalorder %s24, %s25
    %p36 = scmp.eq.s32.totalorder %s16, 0
    %p37 = por %p35, %p36
    %p38 = scmp.ne.s32.totalorder %s24, %s25
    %p39 = scmp.eq.s32.totalorder %s17, 1
    %p40 = por %p38, %p39
    %p42 = scmp.ne.s32.totalorder %s25, %s41
    %p43 = scmp.eq.s32.totalorder %s17, 0
    %p44 = por %p42, %p43
    %s46 = sadd.s32 %s45, 1
    %p49 = scmp.eq.s32.totalorder %s11, 1
    %p50 = scmp.ne.s32.totalorder %s45, %s47
    %p51 = scmp.eq.s32.totalorder %s11, 0
    %p52 = por %p50, %p51
    %p53 = scmp.ne.s32.totalorder %s45, %s47
    %p54 = scmp.eq.s32.totalorder %s16, 1
    %p55 = por %p53, %p54
    %p56 = scmp.ne.s32.totalorder %s47, %s48
    %p57 = scmp.eq.s32.totalorder %s16, 0
    %p58 = por %p56, %p57
    %p59 = scmp.ne.s32.totalorder %s47, %s48
    %p60 = scmp.eq.s32.totalorder %s17, 1
    %p61 = por %p59, %p60
    %p63 = scmp.ne.s32.totalorder %s48, %s62
    %p64 = scmp.eq.s32.totalorder %s17, 0
    %p65 = por %p63, %p64
    %s67 = sadd.s32 %s66, 1
    %p70 = scmp.eq.s32.totalorder %s11, 1
    %p71 = scmp.ne.s32.totalorder %s66, %s68
    %p72 = scmp.eq.s32.totalorder %s11, 0
    %p73 = por %p71, %p72
    %p74 = scmp.ne.s32.totalorder %s66, %s68
    %p75 = scmp.eq.s32.totalorder %s16, 1
    %p76 = por %p74, %p75
    %p77 = scmp.ne.s32.totalorder %s68, %s69
    %p78 = scmp.eq.s32.totalorder %s16, 0
    %p79 = por %p77, %p78
    %p80 = scmp.ne.s32.totalorder %s68, %s69
    %p81 = scmp.eq.s32.totalorder %s17, 1
    %p82 = por %p80, %p81
    %p84 = scmp.ne.s32.totalorder %s69, %s83
    %p85 = scmp.eq.s32.totalorder %s17, 0
    %p86 = por %p84, %p85
    %s88 = sadd.s32 %s87, 1
    %p91 = scmp.eq.s32.totalorder %s11, 1
    %p92 = scmp.ne.s32.totalorder %s87, %s89
    %p93 = scmp.eq.s32.totalorder %s11, 0
    %p94 = por %p92, %p93
    %p95 = scmp.ne.s32.totalorder %s87, %s89
    %p96 = scmp.eq.s32.totalorder %s16, 1
    %p97 = por %p95, %p96
    %p98 = scmp.ne.s32.totalorder %s89, %s90
    %p99 = scmp.eq.s32.totalorder %s16, 0
    %p100 = por %p98, %p99
    %p101 = scmp.ne.s32.totalorder %s89, %s90
    %p102 = scmp.eq.s32.totalorder %s17, 1
    %p103 = por %p101, %p102
    %p105 = scmp.ne.s32.totalorder %s90, %s104
    %p106 = scmp.eq.s32.totalorder %s17, 0
    %p107 = por %p105, %p106
    %s109 = sadd.s32 %s108, 1
    %p112 = scmp.eq.s32.totalorder %s11, 1
    %p113 = scmp.ne.s32.totalorder %s108, %s110
    %p114 = scmp.eq.s32.totalorder %s11, 0
    %p115 = por %p113, %p114
    %p116 = scmp.ne.s32.totalorder %s108, %s110
    %p117 = scmp.eq.s32.totalorder %s16, 1
    %p118 = por %p116, %p117
    %p119 = scmp.ne.s32.totalorder %s110, %s111
    %p120 = scmp.eq.s32.totalorder %s16, 0
    %p121 = por %p119, %p120
    %p122 = scmp.ne.s32.totalorder %s110, %s111
    %p123 = scmp.eq.s32.totalorder %s17, 1
    %p124 = por %p122, %p123
    %p126 = scmp.ne.s32.totalorder %s111, %s125
    %p127 = scmp.eq.s32.totalorder %s17, 0
    %p128 = por %p126, %p127
    %s129 = ssub.s32 %s11, %s18
    %p130 = scmp.eq.s32.totalorder %s129, 0
    %s132 = sadd.s32 %s131, 1
    %s133 = scalar_select %p130, %s131, %s132
    %p136 = pneg %p130
    %p137 = scmp.eq.s32.totalorder %s11, 1
    %p138 = por %p136, %p137
    %p139 = scmp.ne.s32.totalorder %s131, %s134
    %p140 = scmp.eq.s32.totalorder %s11, 0
    %p141 = por %p139, %p140
    %p142 = scmp.ne.s32.totalorder %s131, %s134
    %p143 = scmp.eq.s32.totalorder %s16, 1
    %p144 = por %p142, %p143
    %p145 = scmp.ne.s32.totalorder %s134, %s135
    %p146 = scmp.eq.s32.totalorder %s16, 0
    %p147 = por %p145, %p146
    %p148 = scmp.ne.s32.totalorder %s134, %s135
    %p149 = scmp.eq.s32.totalorder %s17, 1
    %p150 = por %p148, %p149
    %p152 = scmp.ne.s32.totalorder %s135, %s151
    %p153 = scmp.eq.s32.totalorder %s17, 0
    %p154 = por %p152, %p153
    %p155 = scmp.le.s32.totalorder 1, %s11
    %p156 = scmp.lt.s32.totalorder %s11, 3
    %p157 = pnand %p155, %p156
    %p158 = pneg %p157
    // Predicated region
    $region9: #{double_conv_pallas.1} parent=5 // pred_check
      _
    $region10: #{double_conv_pallas.1} parent=5 // pred_check_branch
      %160 = sbr.rel (%p157) target = $region12
    $region11: #{double_conv_pallas.1} parent=5 // pred_region
      %s161 = ssub.s32 %s11, 1
      // Predicated region
      $region13: #{double_conv_pallas.1} parent=11 // pred_check
        %p162 = pneg %p58
      $region14: #{double_conv_pallas.1} parent=11 // pred_check_branch
        %164 = sbr.rel (%p162) target = $region16
      $region15: #{double_conv_pallas.1} parent=11 // pred_region
        _
      $region16: #{double_conv_pallas.1} parent=11 // pred_fallthru
        _
      // Predicated region
      $region17: #{double_conv_pallas.1} parent=11 // pred_check
        %p165 = pneg %p79
      $region18: #{double_conv_pallas.1} parent=11 // pred_check_branch
        %167 = sbr.rel (%p165) target = $region20
      $region19: #{double_conv_pallas.1} parent=11 // pred_region
        _
      $region20: #{double_conv_pallas.1} parent=11 // pred_fallthru
        _
      // Predicated region
      $region21: #{double_conv_pallas.1} parent=11 // pred_check
        %p168 = pneg %p100
      $region22: #{double_conv_pallas.1} parent=11 // pred_check_branch
        %170 = sbr.rel (%p168) target = $region24
      $region23: #{double_conv_pallas.1} parent=11 // pred_region
        _
      $region24: #{double_conv_pallas.1} parent=11 // pred_fallthru
        _
      // Predicated region
      $region25: #{double_conv_pallas.1} parent=11 // pred_check
        %p171 = pneg %p121
      $region26: #{double_conv_pallas.1} parent=11 // pred_check_branch
        %173 = sbr.rel (%p171) target = $region28
      $region27: #{double_conv_pallas.1} parent=11 // pred_region
        _
      $region28: #{double_conv_pallas.1} parent=11 // pred_fallthru
        _
    $region12: #{double_conv_pallas.1} parent=5 // pred_fallthru
      _
    %p174 = scmp.lt.s32.totalorder %s11, 2
    // Predicated region
    $region29: #{double_conv_pallas.1} parent=5 // pred_check
      %p175 = pneg %p174
    $region30: #{double_conv_pallas.1} parent=5 // pred_check_branch
      %177 = sbr.rel (%p175) target = $region32
    $region31: #{double_conv_pallas.1} parent=5 // pred_region
      // Predicated region
      $region33: #{double_conv_pallas.1} parent=31 // pred_check
        %p178 = pneg %p31
      $region34: #{double_conv_pallas.1} parent=31 // pred_check_branch
        %180 = sbr.rel (%p178) target = $region36
      $region35: #{double_conv_pallas.1} parent=31 // pred_region
        %p181 = scmp.lt.s32.totalorder %s11, 1
        %s182 = scalar_select %p181, %s11, 1
        %s183 = smul.addr %s182, 32
        %s184 = smul.addr %s183, 4
        %s185 = scalar_lea.vmem %s0, %s184
      $region36: #{double_conv_pallas.1} parent=31 // pred_fallthru
        _
    $region32: #{double_conv_pallas.1} parent=5 // pred_fallthru
      _
    %p186 = scmp.le.s32.totalorder 1, %s11
    %p187 = scmp.lt.s32.totalorder %s11, 3
    %p188 = pnand %p186, %p187
    %p189 = pneg %p188
    // Predicated region
    $region37: #{double_conv_pallas.1} parent=5 // pred_check
      _
    $region38: #{double_conv_pallas.1} parent=5 // pred_check_branch
      %191 = sbr.rel (%p188) target = $region40
    $region39: #{double_conv_pallas.1} parent=5 // pred_region
      %s192 = ssub.s32 %s11, 1
      %p193 = scmp.lt.s32.totalorder %s16, 1
      %s194 = scalar_select %p193, %s16, 1
      %s195 = smul.addr %s194, 32
      %s196 = smul.addr %s195, 4
      %s197 = scalar_lea.vmem %s0, %s196
      %p198 = pneg %p37
      %p199 = pneg %p34
      %p200 = pneg %p58
      %p201 = pneg %p55
      %p202 = pneg %p79
      %p203 = pneg %p76
      %p204 = pneg %p100
      %p205 = pneg %p97
      %p206 = pneg %p121
      %p207 = pneg %p118
      %p208 = pneg %p147
      %p209 = pneg %p144
      %p210 = scmp.lt.s32.totalorder %s16, 1
      %s211 = scalar_select %p210, %s16, 1
      %s212 = smul.addr %s211, 32
      %s213 = smul.addr %s212, 8
      %s214 = scalar_lea.vmem %s5, %s213
      %p215 = scmp.lt.s32.totalorder %s16, 1
      %s216 = scalar_select %p215, %s16, 1
      %s217 = smul.addr %s216, 32
      %s218 = smul.addr %s217, 4
      %s219 = scalar_lea.vmem %s0, %s218
      %p220 = scmp.lt.s32.totalorder %s16, 1
      %s221 = scalar_select %p220, %s16, 1
      %s222 = smul.addr %s221, 32
      %s223 = smul.addr %s222, 8
      %s224 = scalar_lea.vmem %s5, %s223
      %226 = vst [vmem:[#allocation2] sm:$0xf] 0
      %227 = vst [vmem:[#allocation2 + $0x4] sm:$0xf] 0
      %228 = vst [vmem:[#allocation2 + $0x8] sm:$0xf] 0
      %229 = vst [vmem:[#allocation2 + $0xc] sm:$0xf] 0
      %230 = vst [vmem:[#allocation2 + $0x10] sm:$0xf] 0
      %231 = vst [vmem:[#allocation2 + $0x14] sm:$0xf] 0
      %s232 = scalar_lea.vmem [#allocation2], 408
      %233 = vst [vmem:[%s232] sm:$0xf] 0
      %234 = vst [vmem:[%s232 + $0x4] sm:$0xf] 0
      %235 = vst [vmem:[%s232 + $0x8] sm:$0xf] 0
      %236 = vst [vmem:[%s232 + $0xc] sm:$0xf] 0
      %237 = vst [vmem:[%s232 + $0x10] sm:$0xf] 0
      %238 = vst [vmem:[%s232 + $0x14] sm:$0xf] 0
      %s239 = scalar_lea.vmem [#allocation2], 24
      %240 = vst [vmem:[%s239] sm:$0xf] 0
      %241 = vst [vmem:[%s239 + $0x4] sm:$0xf] 0
      %242 = vst [vmem:[%s239 + $0x18] sm:$0xf] 0
      %243 = vst [vmem:[%s239 + $0x1c] sm:$0xf] 0
      %244 = vst [vmem:[%s239 + $0x30] sm:$0xf] 0
      %245 = vst [vmem:[%s239 + $0x34] sm:$0xf] 0
      %246 = vst [vmem:[%s239 + $0x48] sm:$0xf] 0
      %247 = vst [vmem:[%s239 + $0x4c] sm:$0xf] 0
      %248 = vst [vmem:[%s239 + $0x60] sm:$0xf] 0
      %249 = vst [vmem:[%s239 + $0x64] sm:$0xf] 0
      %250 = vst [vmem:[%s239 + $0x78] sm:$0xf] 0
      %251 = vst [vmem:[%s239 + $0x7c] sm:$0xf] 0
      %252 = vst [vmem:[%s239 + $0x90] sm:$0xf] 0
      %253 = vst [vmem:[%s239 + $0x94] sm:$0xf] 0
      %254 = vst [vmem:[%s239 + $0xa8] sm:$0xf] 0
      %255 = vst [vmem:[%s239 + $0xac] sm:$0xf] 0
      %256 = vst [vmem:[%s239 + $0xc0] sm:$0xf] 0
      %257 = vst [vmem:[%s239 + $0xc4] sm:$0xf] 0
      %258 = vst [vmem:[%s239 + $0xd8] sm:$0xf] 0
      %259 = vst [vmem:[%s239 + $0xdc] sm:$0xf] 0
      %260 = vst [vmem:[%s239 + $0xf0] sm:$0xf] 0
      %261 = vst [vmem:[%s239 + $0xf4] sm:$0xf] 0
      %262 = vst [vmem:[%s239 + $0x108] sm:$0xf] 0
      %263 = vst [vmem:[%s239 + $0x10c] sm:$0xf] 0
      %264 = vst [vmem:[%s239 + $0x120] sm:$0xf] 0
      %265 = vst [vmem:[%s239 + $0x124] sm:$0xf] 0
      %266 = vst [vmem:[%s239 + $0x138] sm:$0xf] 0
      %267 = vst [vmem:[%s239 + $0x13c] sm:$0xf] 0
      %268 = vst [vmem:[%s239 + $0x150] sm:$0xf] 0
      %269 = vst [vmem:[%s239 + $0x154] sm:$0xf] 0
      %270 = vst [vmem:[%s239 + $0x168] sm:$0xf] 0
      %271 = vst [vmem:[%s239 + $0x16c] sm:$0xf] 0
      %272 = vst [vmem:[%s239 + $0x10] sm:$0xf] 0
      %273 = vst [vmem:[%s239 + $0x14] sm:$0xf] 0
      %274 = vst [vmem:[%s239 + $0x28] sm:$0xf] 0
      %275 = vst [vmem:[%s239 + $0x2c] sm:$0xf] 0
      %276 = vst [vmem:[%s239 + $0x40] sm:$0xf] 0
      %277 = vst [vmem:[%s239 + $0x44] sm:$0xf] 0
      %278 = vst [vmem:[%s239 + $0x58] sm:$0xf] 0
      %279 = vst [vmem:[%s239 + $0x5c] sm:$0xf] 0
      %280 = vst [vmem:[%s239 + $0x70] sm:$0xf] 0
      %281 = vst [vmem:[%s239 + $0x74] sm:$0xf] 0
      %282 = vst [vmem:[%s239 + $0x88] sm:$0xf] 0
      %283 = vst [vmem:[%s239 + $0x8c] sm:$0xf] 0
      %284 = vst [vmem:[%s239 + $0xa0] sm:$0xf] 0
      %285 = vst [vmem:[%s239 + $0xa4] sm:$0xf] 0
      %286 = vst [vmem:[%s239 + $0xb8] sm:$0xf] 0
      %287 = vst [vmem:[%s239 + $0xbc] sm:$0xf] 0
      %288 = vst [vmem:[%s239 + $0xd0] sm:$0xf] 0
      %289 = vst [vmem:[%s239 + $0xd4] sm:$0xf] 0
      %290 = vst [vmem:[%s239 + $0xe8] sm:$0xf] 0
      %291 = vst [vmem:[%s239 + $0xec] sm:$0xf] 0
      %292 = vst [vmem:[%s239 + $0x100] sm:$0xf] 0
      %293 = vst [vmem:[%s239 + $0x104] sm:$0xf] 0
      %294 = vst [vmem:[%s239 + $0x118] sm:$0xf] 0
      %295 = vst [vmem:[%s239 + $0x11c] sm:$0xf] 0
      %296 = vst [vmem:[%s239 + $0x130] sm:$0xf] 0
      %297 = vst [vmem:[%s239 + $0x134] sm:$0xf] 0
      %298 = vst [vmem:[%s239 + $0x148] sm:$0xf] 0
      %299 = vst [vmem:[%s239 + $0x14c] sm:$0xf] 0
      %300 = vst [vmem:[%s239 + $0x160] sm:$0xf] 0
      %301 = vst [vmem:[%s239 + $0x164] sm:$0xf] 0
      %302 = vst [vmem:[%s239 + $0x178] sm:$0xf] 0
      %303 = vst [vmem:[%s239 + $0x17c] sm:$0xf] 0
      %v304 = vld [vmem:[%s219] sm:$0xf]
      %v305 = vld [vmem:[%s219 + $0x4] sm:$0xf]
      %v306 = vld [vmem:[%s219 + $0x8] sm:$0xf]
      %v307 = vld [vmem:[%s219 + $0xc] sm:$0xf]
      %v308 = vld [vmem:[%s219 + $0x10] sm:$0xf]
      %v309 = vld [vmem:[%s219 + $0x14] sm:$0xf]
      %v310 = vld [vmem:[%s219 + $0x18] sm:$0xf]
      %v311 = vld [vmem:[%s219 + $0x1c] sm:$0xf]
      %v312 = vld [vmem:[%s219 + $0x20] sm:$0xf]
      %v313 = vld [vmem:[%s219 + $0x24] sm:$0xf]
      %v314 = vld [vmem:[%s219 + $0x28] sm:$0xf]
      %v315 = vld [vmem:[%s219 + $0x2c] sm:$0xf]
      %v316 = vld [vmem:[%s219 + $0x30] sm:$0xf]
      %v317 = vld [vmem:[%s219 + $0x34] sm:$0xf]
      %v318 = vld [vmem:[%s219 + $0x38] sm:$0xf]
      %v319 = vld [vmem:[%s219 + $0x3c] sm:$0xf]
      %v320 = vld [vmem:[%s219 + $0x40] sm:$0xf]
      %v321 = vld [vmem:[%s219 + $0x44] sm:$0xf]
      %v322 = vld [vmem:[%s219 + $0x48] sm:$0xf]
      %v323 = vld [vmem:[%s219 + $0x4c] sm:$0xf]
      %v324 = vld [vmem:[%s219 + $0x50] sm:$0xf]
      %v325 = vld [vmem:[%s219 + $0x54] sm:$0xf]
      %v326 = vld [vmem:[%s219 + $0x58] sm:$0xf]
      %v327 = vld [vmem:[%s219 + $0x5c] sm:$0xf]
      %v328 = vld [vmem:[%s219 + $0x60] sm:$0xf]
      %v329 = vld [vmem:[%s219 + $0x64] sm:$0xf]
      %v330 = vld [vmem:[%s219 + $0x68] sm:$0xf]
      %v331 = vld [vmem:[%s219 + $0x6c] sm:$0xf]
      %v332 = vld [vmem:[%s219 + $0x70] sm:$0xf]
      %v333 = vld [vmem:[%s219 + $0x74] sm:$0xf]
      %v334 = vld [vmem:[%s219 + $0x78] sm:$0xf]
      %v335 = vld [vmem:[%s219 + $0x7c] sm:$0xf]
      %v336 = vld [vmem:[%s1] sm:$0xf]
      %v337 = vld [vmem:[%s1 + $0x4] sm:$0xf]
      %v338 = vld [vmem:[%s1 + $0x8] sm:$0xf]
      %v339 = vld [vmem:[%s1 + $0xc] sm:$0xf]
      %v340 = vld [vmem:[%s1 + $0x10] sm:$0xf]
      %v341 = vld [vmem:[%s1 + $0x14] sm:$0xf]
      %v342 = vld [vmem:[%s1 + $0x18] sm:$0xf]
      %v343 = vld [vmem:[%s1 + $0x1c] sm:$0xf]
      %v344 = vld [vmem:[%s1 + $0x20] sm:$0xf]
      %v345 = vld [vmem:[%s1 + $0x24] sm:$0xf]
      %v346 = vld [vmem:[%s1 + $0x28] sm:$0xf]
      %v347 = vld [vmem:[%s1 + $0x2c] sm:$0xf]
      %v348 = vld [vmem:[%s1 + $0x30] sm:$0xf]
      %v349 = vld [vmem:[%s1 + $0x34] sm:$0xf]
      %v350 = vld [vmem:[%s1 + $0x38] sm:$0xf]
      %v351 = vld [vmem:[%s1 + $0x3c] sm:$0xf]
      %v352 = vld [vmem:[%s2] sm:$0x1]
      %v354 = vperm.slane %v352, 0
      %v388 = vunpack.c.l.b16 %v304
      %v389 = vunpack.c.l.b16 %v305
      %v390 = vunpack.c.l.b16 %v306
      %v391 = vunpack.c.l.b16 %v307
      %v392 = vunpack.c.l.b16 %v308
      %v393 = vunpack.c.l.b16 %v309
      %v394 = vunpack.c.l.b16 %v310
      %v395 = vunpack.c.l.b16 %v311
      %v396 = vunpack.c.l.b16 %v312
      %v397 = vunpack.c.l.b16 %v313
      %v398 = vunpack.c.l.b16 %v314
      %v399 = vunpack.c.l.b16 %v315
      %v400 = vunpack.c.l.b16 %v316
      %v401 = vunpack.c.l.b16 %v317
      %v402 = vunpack.c.l.b16 %v318
      %v403 = vunpack.c.l.b16 %v319
      %v404 = vunpack.c.l.b16 %v320
      %v405 = vunpack.c.l.b16 %v321
      %v406 = vunpack.c.l.b16 %v322
      %v407 = vunpack.c.l.b16 %v323
      %v408 = vunpack.c.l.b16 %v324
      %v409 = vunpack.c.l.b16 %v325
      %v410 = vunpack.c.l.b16 %v326
      %v411 = vunpack.c.l.b16 %v327
      %v412 = vunpack.c.l.b16 %v328
      %v413 = vunpack.c.l.b16 %v329
      %v414 = vunpack.c.l.b16 %v330
      %v415 = vunpack.c.l.b16 %v331
      %v416 = vunpack.c.l.b16 %v332
      %v417 = vunpack.c.l.b16 %v333
      %v418 = vunpack.c.l.b16 %v334
      %v419 = vunpack.c.l.b16 %v335
      %v420 = vpack.c.b16 %v389, %v388
      %v421 = vpack.c.b16 %v391, %v390
      %v422 = vpack.c.b16 %v393, %v392
      %v423 = vpack.c.b16 %v395, %v394
      %v424 = vpack.c.b16 %v397, %v396
      %v425 = vpack.c.b16 %v399, %v398
      %v426 = vpack.c.b16 %v401, %v400
      %v427 = vpack.c.b16 %v403, %v402
      %v428 = vpack.c.b16 %v405, %v404
      %v429 = vpack.c.b16 %v407, %v406
      %v430 = vpack.c.b16 %v409, %v408
      %v431 = vpack.c.b16 %v411, %v410
      %v432 = vpack.c.b16 %v413, %v412
      %v433 = vpack.c.b16 %v415, %v414
      %v434 = vpack.c.b16 %v417, %v416
      %v435 = vpack.c.b16 %v419, %v418
      %v468 = vunpack.c.l.b16 %v336
      %v469 = vunpack.c.l.b16 %v337
      %v470 = vunpack.c.l.b16 %v338
      %v471 = vunpack.c.l.b16 %v339
      %v472 = vunpack.c.l.b16 %v340
      %v473 = vunpack.c.l.b16 %v341
      %v474 = vunpack.c.l.b16 %v342
      %v475 = vunpack.c.l.b16 %v343
      %v476 = vunpack.c.l.b16 %v344
      %v477 = vunpack.c.l.b16 %v345
      %v478 = vunpack.c.l.b16 %v346
      %v479 = vunpack.c.l.b16 %v347
      %v480 = vunpack.c.l.b16 %v348
      %v481 = vunpack.c.l.b16 %v349
      %v482 = vunpack.c.l.b16 %v350
      %v483 = vunpack.c.l.b16 %v351
      %v484 = vpack.c.b16 %v469, %v468
      %v485 = vpack.c.b16 %v471, %v470
      %v486 = vpack.c.b16 %v473, %v472
      %v487 = vpack.c.b16 %v475, %v474
      %v488 = vpack.c.b16 %v477, %v476
      %v489 = vpack.c.b16 %v479, %v478
      %v490 = vpack.c.b16 %v481, %v480
      %v491 = vpack.c.b16 %v483, %v482
      %500 = vmatpush.bf16.msra.mxu0 %v491
      %501 = vmatpush.bf16.msra.mxu0 %v490
      %502 = vmatpush.bf16.msra.mxu0 %v489
      %503 = vmatpush.bf16.msra.mxu0 %v488
      %504 = vmatpush.bf16.msra.mxu0 %v487
      %505 = vmatpush.bf16.msra.mxu0 %v486
      %506 = vmatpush.bf16.msra.mxu0 %v485
      %507 = vmatpush.bf16.msra.mxu0 %v484
      %508 = vmatmul.bf16.gmra.mxu0 %v420
      %v509 = vpop.f32.mrf.mxu0
      %v510 = vadd.f32 %v354, %v509
      %v511 = vpop.f32.mrf.mxu0
      %v512 = vadd.f32 %v354, %v511
      %513 = vmatmul.bf16.gmra.mxu0 %v421
      %v514 = vpop.f32.mrf.mxu0
      %v515 = vadd.f32 %v354, %v514
      %v516 = vpop.f32.mrf.mxu0
      %v517 = vadd.f32 %v354, %v516
      %518 = vmatmul.bf16.gmra.mxu0 %v422
      %v519 = vpop.f32.mrf.mxu0
      %v520 = vadd.f32 %v354, %v519
      %v521 = vpop.f32.mrf.mxu0
      %v522 = vadd.f32 %v354, %v521
      %523 = vmatmul.bf16.gmra.mxu0 %v423
      %v524 = vpop.f32.mrf.mxu0
      %v525 = vadd.f32 %v354, %v524
      %v526 = vpop.f32.mrf.mxu0
      %v527 = vadd.f32 %v354, %v526
      %528 = vmatmul.bf16.gmra.mxu0 %v424
      %v529 = vpop.f32.mrf.mxu0
      %v530 = vadd.f32 %v354, %v529
      %v531 = vpop.f32.mrf.mxu0
      %v532 = vadd.f32 %v354, %v531
      %533 = vmatmul.bf16.gmra.mxu0 %v425
      %v534 = vpop.f32.mrf.mxu0
      %v535 = vadd.f32 %v354, %v534
      %v536 = vpop.f32.mrf.mxu0
      %v537 = vadd.f32 %v354, %v536
      %538 = vmatmul.bf16.gmra.mxu0 %v426
      %v539 = vpop.f32.mrf.mxu0
      %v540 = vadd.f32 %v354, %v539
      %v541 = vpop.f32.mrf.mxu0
      %v542 = vadd.f32 %v354, %v541
      %543 = vmatmul.bf16.gmra.mxu0 %v427
      %v544 = vpop.f32.mrf.mxu0
      %v545 = vadd.f32 %v354, %v544
      %v546 = vpop.f32.mrf.mxu0
      %v547 = vadd.f32 %v354, %v546
      %548 = vmatmul.bf16.gmra.mxu0 %v428
      %v549 = vpop.f32.mrf.mxu0
      %v550 = vadd.f32 %v354, %v549
      %v551 = vpop.f32.mrf.mxu0
      %v552 = vadd.f32 %v354, %v551
      %553 = vmatmul.bf16.gmra.mxu0 %v429
      %v554 = vpop.f32.mrf.mxu0
      %v555 = vadd.f32 %v354, %v554
      %v556 = vpop.f32.mrf.mxu0
      %v557 = vadd.f32 %v354, %v556
      %558 = vmatmul.bf16.gmra.mxu0 %v430
      %v559 = vpop.f32.mrf.mxu0
      %v560 = vadd.f32 %v354, %v559
      %v561 = vpop.f32.mrf.mxu0
      %v562 = vadd.f32 %v354, %v561
      %563 = vmatmul.bf16.gmra.mxu0 %v431
      %v564 = vpop.f32.mrf.mxu0
      %v565 = vadd.f32 %v354, %v564
      %v566 = vpop.f32.mrf.mxu0
      %v567 = vadd.f32 %v354, %v566
      %568 = vmatmul.bf16.gmra.mxu0 %v432
      %v569 = vpop.f32.mrf.mxu0
      %v570 = vadd.f32 %v354, %v569
      %v571 = vpop.f32.mrf.mxu0
      %v572 = vadd.f32 %v354, %v571
      %573 = vmatmul.bf16.gmra.mxu0 %v433
      %v574 = vpop.f32.mrf.mxu0
      %v575 = vadd.f32 %v354, %v574
      %v576 = vpop.f32.mrf.mxu0
      %v577 = vadd.f32 %v354, %v576
      %578 = vmatmul.bf16.gmra.mxu0 %v434
      %v579 = vpop.f32.mrf.mxu0
      %v580 = vadd.f32 %v354, %v579
      %v581 = vpop.f32.mrf.mxu0
      %v582 = vadd.f32 %v354, %v581
      %583 = vmatmul.bf16.gmra.mxu0 %v435
      %v584 = vpop.f32.mrf.mxu0
      %v585 = vadd.f32 %v354, %v584
      %v586 = vpop.f32.mrf.mxu0
      %v587 = vadd.f32 %v354, %v586
      %588 = vdwg.mxu0
      %v589 = vmax.f32 %v510, 0.0
      %v590 = vmax.f32 %v512, 0.0
      %v591 = vmax.f32 %v515, 0.0
      %v592 = vmax.f32 %v517, 0.0
      %v593 = vmax.f32 %v520, 0.0
      %v594 = vmax.f32 %v522, 0.0
      %v595 = vmax.f32 %v525, 0.0
      %v596 = vmax.f32 %v527, 0.0
      %v597 = vmax.f32 %v530, 0.0
      %v598 = vmax.f32 %v532, 0.0
      %v599 = vmax.f32 %v535, 0.0
      %v600 = vmax.f32 %v537, 0.0
      %v601 = vmax.f32 %v540, 0.0
      %v602 = vmax.f32 %v542, 0.0
      %v603 = vmax.f32 %v545, 0.0
      %v604 = vmax.f32 %v547, 0.0
      %v605 = vmax.f32 %v550, 0.0
      %v606 = vmax.f32 %v552, 0.0
      %v607 = vmax.f32 %v555, 0.0
      %v608 = vmax.f32 %v557, 0.0
      %v609 = vmax.f32 %v560, 0.0
      %v610 = vmax.f32 %v562, 0.0
      %v611 = vmax.f32 %v565, 0.0
      %v612 = vmax.f32 %v567, 0.0
      %v613 = vmax.f32 %v570, 0.0
      %v614 = vmax.f32 %v572, 0.0
      %v615 = vmax.f32 %v575, 0.0
      %v616 = vmax.f32 %v577, 0.0
      %v617 = vmax.f32 %v580, 0.0
      %v618 = vmax.f32 %v582, 0.0
      %v619 = vmax.f32 %v585, 0.0
      %v620 = vmax.f32 %v587, 0.0
      %v621 = vpack.c.bf16 %v589, %v589
      %v622 = vpack.c.bf16 %v590, %v590
      %v623 = vpack.c.bf16 %v591, %v591
      %v624 = vpack.c.bf16 %v592, %v592
      %v625 = vpack.c.bf16 %v593, %v593
      %v626 = vpack.c.bf16 %v594, %v594
      %v627 = vpack.c.bf16 %v595, %v595
      %v628 = vpack.c.bf16 %v596, %v596
      %v629 = vpack.c.bf16 %v597, %v597
      %v630 = vpack.c.bf16 %v598, %v598
      %v631 = vpack.c.bf16 %v599, %v599
      %v632 = vpack.c.bf16 %v600, %v600
      %v633 = vpack.c.bf16 %v601, %v601
      %v634 = vpack.c.bf16 %v602, %v602
      %v635 = vpack.c.bf16 %v603, %v603
      %v636 = vpack.c.bf16 %v604, %v604
      %v637 = vpack.c.bf16 %v605, %v605
      %v638 = vpack.c.bf16 %v606, %v606
      %v639 = vpack.c.bf16 %v607, %v607
      %v640 = vpack.c.bf16 %v608, %v608
      %v641 = vpack.c.bf16 %v609, %v609
      %v642 = vpack.c.bf16 %v610, %v610
      %v643 = vpack.c.bf16 %v611, %v611
      %v644 = vpack.c.bf16 %v612, %v612
      %v645 = vpack.c.bf16 %v613, %v613
      %v646 = vpack.c.bf16 %v614, %v614
      %v647 = vpack.c.bf16 %v615, %v615
      %v648 = vpack.c.bf16 %v616, %v616
      %v649 = vpack.c.bf16 %v617, %v617
      %v650 = vpack.c.bf16 %v618, %v618
      %v651 = vpack.c.bf16 %v619, %v619
      %v652 = vpack.c.bf16 %v620, %v620
      %653 = vst [vmem:[%s239 + $0x8] sm:$0xf] %v621
      %654 = vst [vmem:[%s239 + $0xc] sm:$0xf] %v622
      %655 = vst [vmem:[%s239 + $0x20] sm:$0xf] %v623
      %656 = vst [vmem:[%s239 + $0x24] sm:$0xf] %v624
      %657 = vst [vmem:[%s239 + $0x38] sm:$0xf] %v625
      %658 = vst [vmem:[%s239 + $0x3c] sm:$0xf] %v626
      %659 = vst [vmem:[%s239 + $0x50] sm:$0xf] %v627
      %660 = vst [vmem:[%s239 + $0x54] sm:$0xf] %v628
      %661 = vst [vmem:[%s239 + $0x68] sm:$0xf] %v629
      %662 = vst [vmem:[%s239 + $0x6c] sm:$0xf] %v630
      %663 = vst [vmem:[%s239 + $0x80] sm:$0xf] %v631
      %664 = vst [vmem:[%s239 + $0x84] sm:$0xf] %v632
      %665 = vst [vmem:[%s239 + $0x98] sm:$0xf] %v633
      %666 = vst [vmem:[%s239 + $0x9c] sm:$0xf] %v634
      %667 = vst [vmem:[%s239 + $0xb0] sm:$0xf] %v635
      %668 = vst [vmem:[%s239 + $0xb4] sm:$0xf] %v636
      %669 = vst [vmem:[%s239 + $0xc8] sm:$0xf] %v637
      %670 = vst [vmem:[%s239 + $0xcc] sm:$0xf] %v638
      %671 = vst [vmem:[%s239 + $0xe0] sm:$0xf] %v639
      %672 = vst [vmem:[%s239 + $0xe4] sm:$0xf] %v640
      %673 = vst [vmem:[%s239 + $0xf8] sm:$0xf] %v641
      %674 = vst [vmem:[%s239 + $0xfc] sm:$0xf] %v642
      %675 = vst [vmem:[%s239 + $0x110] sm:$0xf] %v643
      %676 = vst [vmem:[%s239 + $0x114] sm:$0xf] %v644
      %677 = vst [vmem:[%s239 + $0x128] sm:$0xf] %v645
      %678 = vst [vmem:[%s239 + $0x12c] sm:$0xf] %v646
      %679 = vst [vmem:[%s239 + $0x140] sm:$0xf] %v647
      %680 = vst [vmem:[%s239 + $0x144] sm:$0xf] %v648
      %681 = vst [vmem:[%s239 + $0x158] sm:$0xf] %v649
      %682 = vst [vmem:[%s239 + $0x15c] sm:$0xf] %v650
      %683 = vst [vmem:[%s239 + $0x170] sm:$0xf] %v651
      %684 = vst [vmem:[%s239 + $0x174] sm:$0xf] %v652
      %v685 = vld [vmem:[#allocation2 + $0x4] sm:$0x8]
      %v686 = vld [vmem:[#allocation2 + $0x8] sm:$0xf]
      %v687 = vld [vmem:[#allocation2 + $0xc] sm:$0xf]
      %v688 = vld [vmem:[#allocation2 + $0x1c] sm:$0x8]
      %v689 = vld [vmem:[#allocation2 + $0x20] sm:$0xf]
      %v690 = vld [vmem:[#allocation2 + $0x24] sm:$0xf]
      %v691 = vld [vmem:[#allocation2 + $0x34] sm:$0x8]
      %v692 = vld [vmem:[#allocation2 + $0x38] sm:$0xf]
      %v693 = vld [vmem:[#allocation2 + $0x3c] sm:$0xf]
      %v694 = vld [vmem:[#allocation2 + $0x4c] sm:$0x8]
      %v695 = vld [vmem:[#allocation2 + $0x50] sm:$0xf]
      %v696 = vld [vmem:[#allocation2 + $0x54] sm:$0xf]
      %v697 = vld [vmem:[#allocation2 + $0x64] sm:$0x8]
      %v698 = vld [vmem:[#allocation2 + $0x68] sm:$0xf]
      %v699 = vld [vmem:[#allocation2 + $0x6c] sm:$0xf]
      %v700 = vld [vmem:[#allocation2 + $0x7c] sm:$0x8]
      %v701 = vld [vmem:[#allocation2 + $0x80] sm:$0xf]
      %v702 = vld [vmem:[#allocation2 + $0x84] sm:$0xf]
      %v703 = vld [vmem:[#allocation2 + $0x94] sm:$0x8]
      %v704 = vld [vmem:[#allocation2 + $0x98] sm:$0xf]
      %v705 = vld [vmem:[#allocation2 + $0x9c] sm:$0xf]
      %v706 = vld [vmem:[#allocation2 + $0xac] sm:$0x8]
      %v707 = vld [vmem:[#allocation2 + $0xb0] sm:$0xf]
      %v708 = vld [vmem:[#allocation2 + $0xb4] sm:$0xf]
      %v709 = vld [vmem:[#allocation2 + $0xc4] sm:$0x8]
      %v710 = vld [vmem:[#allocation2 + $0xc8] sm:$0xf]
      %v711 = vld [vmem:[#allocation2 + $0xcc] sm:$0xf]
      %v712 = vld [vmem:[#allocation2 + $0xdc] sm:$0x8]
      %v713 = vld [vmem:[#allocation2 + $0xe0] sm:$0xf]
      %v714 = vld [vmem:[#allocation2 + $0xe4] sm:$0xf]
      %v715 = vld [vmem:[#allocation2 + $0xf4] sm:$0x8]
      %v716 = vld [vmem:[#allocation2 + $0xf8] sm:$0xf]
      %v717 = vld [vmem:[#allocation2 + $0xfc] sm:$0xf]
      %v718 = vld [vmem:[#allocation2 + $0x10c] sm:$0x8]
      %v719 = vld [vmem:[#allocation2 + $0x110] sm:$0xf]
      %v720 = vld [vmem:[#allocation2 + $0x114] sm:$0xf]
      %v721 = vld [vmem:[#allocation2 + $0x124] sm:$0x8]
      %v722 = vld [vmem:[#allocation2 + $0x128] sm:$0xf]
      %v723 = vld [vmem:[#allocation2 + $0x12c] sm:$0xf]
      %v724 = vld [vmem:[#allocation2 + $0x13c] sm:$0x8]
      %v725 = vld [vmem:[#allocation2 + $0x140] sm:$0xf]
      %v726 = vld [vmem:[#allocation2 + $0x144] sm:$0xf]
      %v727 = vld [vmem:[#allocation2 + $0x154] sm:$0x8]
      %v728 = vld [vmem:[#allocation2 + $0x158] sm:$0xf]
      %v729 = vld [vmem:[#allocation2 + $0x15c] sm:$0xf]
      %v730 = vld [vmem:[#allocation2 + $0x16c] sm:$0x8]
      %v731 = vld [vmem:[#allocation2 + $0x170] sm:$0xf]
      %v732 = vld [vmem:[#allocation2 + $0x174] sm:$0xf]
      %vm733 = vsmask.f32 256
      %vm734 = vsmask.f32 4368
      %vm735 = vmor %vm733, %vm734
      %v737 = vshrl.u32 %v685, 16
      %v739 = vrot.slane %v737, 7
      %v740 = vrot.slane %v739, 4
      %v742 = vshrl.u32 %v686, 16
      %v744 = vrot.slane %v742, 7
      %v745 = vshll.u32 %v686, 16
      %v747 = vor.u32 %v744, %v745
      %v748 = vsel %vm735, %v740, %v747
      %v749 = vrot.slane %v744, 4
      %v751 = vshrl.u32 %v687, 16
      %v753 = vrot.slane %v751, 7
      %v754 = vshll.u32 %v687, 16
      %v756 = vor.u32 %v753, %v754
      %v757 = vsel %vm735, %v749, %v756
      %v759 = vshrl.u32 %v688, 16
      %v761 = vrot.slane %v759, 7
      %v762 = vrot.slane %v761, 4
      %v764 = vshrl.u32 %v689, 16
      %v766 = vrot.slane %v764, 7
      %v767 = vshll.u32 %v689, 16
      %v769 = vor.u32 %v766, %v767
      %v770 = vsel %vm735, %v762, %v769
      %v771 = vrot.slane %v766, 4
      %v773 = vshrl.u32 %v690, 16
      %v775 = vrot.slane %v773, 7
      %v776 = vshll.u32 %v690, 16
      %v778 = vor.u32 %v775, %v776
      %v779 = vsel %vm735, %v771, %v778
      %v781 = vshrl.u32 %v691, 16
      %v783 = vrot.slane %v781, 7
      %v784 = vrot.slane %v783, 4
      %v786 = vshrl.u32 %v692, 16
      %v788 = vrot.slane %v786, 7
      %v789 = vshll.u32 %v692, 16
      %v791 = vor.u32 %v788, %v789
      %v792 = vsel %vm735, %v784, %v791
      %v793 = vrot.slane %v788, 4
      %v795 = vshrl.u32 %v693, 16
      %v797 = vrot.slane %v795, 7
      %v798 = vshll.u32 %v693, 16
      %v800 = vor.u32 %v797, %v798
      %v801 = vsel %vm735, %v793, %v800
      %v803 = vshrl.u32 %v694, 16
      %v805 = vrot.slane %v803, 7
      %v806 = vrot.slane %v805, 4
      %v808 = vshrl.u32 %v695, 16
      %v810 = vrot.slane %v808, 7
      %v811 = vshll.u32 %v695, 16
      %v813 = vor.u32 %v810, %v811
      %v814 = vsel %vm735, %v806, %v813
      %v815 = vrot.slane %v810, 4
      %v817 = vshrl.u32 %v696, 16
      %v819 = vrot.slane %v817, 7
      %v820 = vshll.u32 %v696, 16
      %v822 = vor.u32 %v819, %v820
      %v823 = vsel %vm735, %v815, %v822
      %v825 = vshrl.u32 %v697, 16
      %v827 = vrot.slane %v825, 7
      %v828 = vrot.slane %v827, 4
      %v830 = vshrl.u32 %v698, 16
      %v832 = vrot.slane %v830, 7
      %v833 = vshll.u32 %v698, 16
      %v835 = vor.u32 %v832, %v833
      %v836 = vsel %vm735, %v828, %v835
      %v837 = vrot.slane %v832, 4
      %v839 = vshrl.u32 %v699, 16
      %v841 = vrot.slane %v839, 7
      %v842 = vshll.u32 %v699, 16
      %v844 = vor.u32 %v841, %v842
      %v845 = vsel %vm735, %v837, %v844
      %v847 = vshrl.u32 %v700, 16
      %v849 = vrot.slane %v847, 7
      %v850 = vrot.slane %v849, 4
      %v852 = vshrl.u32 %v701, 16
      %v854 = vrot.slane %v852, 7
      %v855 = vshll.u32 %v701, 16
      %v857 = vor.u32 %v854, %v855
      %v858 = vsel %vm735, %v850, %v857
      %v859 = vrot.slane %v854, 4
      %v861 = vshrl.u32 %v702, 16
      %v863 = vrot.slane %v861, 7
      %v864 = vshll.u32 %v702, 16
      %v866 = vor.u32 %v863, %v864
      %v867 = vsel %vm735, %v859, %v866
      %v869 = vshrl.u32 %v703, 16
      %v871 = vrot.slane %v869, 7
      %v872 = vrot.slane %v871, 4
      %v874 = vshrl.u32 %v704, 16
      %v876 = vrot.slane %v874, 7
      %v877 = vshll.u32 %v704, 16
      %v879 = vor.u32 %v876, %v877
      %v880 = vsel %vm735, %v872, %v879
      %v881 = vrot.slane %v876, 4
      %v883 = vshrl.u32 %v705, 16
      %v885 = vrot.slane %v883, 7
      %v886 = vshll.u32 %v705, 16
      %v888 = vor.u32 %v885, %v886
      %v889 = vsel %vm735, %v881, %v888
      %v891 = vshrl.u32 %v706, 16
      %v893 = vrot.slane %v891, 7
      %v894 = vrot.slane %v893, 4
      %v896 = vshrl.u32 %v707, 16
      %v898 = vrot.slane %v896, 7
      %v899 = vshll.u32 %v707, 16
      %v901 = vor.u32 %v898, %v899
      %v902 = vsel %vm735, %v894, %v901
      %v903 = vrot.slane %v898, 4
      %v905 = vshrl.u32 %v708, 16
      %v907 = vrot.slane %v905, 7
      %v908 = vshll.u32 %v708, 16
      %v910 = vor.u32 %v907, %v908
      %v911 = vsel %vm735, %v903, %v910
      %v913 = vshrl.u32 %v709, 16
      %v915 = vrot.slane %v913, 7
      %v916 = vrot.slane %v915, 4
      %v918 = vshrl.u32 %v710, 16
      %v920 = vrot.slane %v918, 7
      %v921 = vshll.u32 %v710, 16
      %v923 = vor.u32 %v920, %v921
      %v924 = vsel %vm735, %v916, %v923
      %v925 = vrot.slane %v920, 4
      %v927 = vshrl.u32 %v711, 16
      %v929 = vrot.slane %v927, 7
      %v930 = vshll.u32 %v711, 16
      %v932 = vor.u32 %v929, %v930
      %v933 = vsel %vm735, %v925, %v932
      %v935 = vshrl.u32 %v712, 16
      %v937 = vrot.slane %v935, 7
      %v938 = vrot.slane %v937, 4
      %v940 = vshrl.u32 %v713, 16
      %v942 = vrot.slane %v940, 7
      %v943 = vshll.u32 %v713, 16
      %v945 = vor.u32 %v942, %v943
      %v946 = vsel %vm735, %v938, %v945
      %v947 = vrot.slane %v942, 4
      %v949 = vshrl.u32 %v714, 16
      %v951 = vrot.slane %v949, 7
      %v952 = vshll.u32 %v714, 16
      %v954 = vor.u32 %v951, %v952
      %v955 = vsel %vm735, %v947, %v954
      %v957 = vshrl.u32 %v715, 16
      %v959 = vrot.slane %v957, 7
      %v960 = vrot.slane %v959, 4
      %v962 = vshrl.u32 %v716, 16
      %v964 = vrot.slane %v962, 7
      %v965 = vshll.u32 %v716, 16
      %v967 = vor.u32 %v964, %v965
      %v968 = vsel %vm735, %v960, %v967
      %v969 = vrot.slane %v964, 4
      %v971 = vshrl.u32 %v717, 16
      %v973 = vrot.slane %v971, 7
      %v974 = vshll.u32 %v717, 16
      %v976 = vor.u32 %v973, %v974
      %v977 = vsel %vm735, %v969, %v976
      %v979 = vshrl.u32 %v718, 16
      %v981 = vrot.slane %v979, 7
      %v982 = vrot.slane %v981, 4
      %v984 = vshrl.u32 %v719, 16
      %v986 = vrot.slane %v984, 7
      %v987 = vshll.u32 %v719, 16
      %v989 = vor.u32 %v986, %v987
      %v990 = vsel %vm735, %v982, %v989
      %v991 = vrot.slane %v986, 4
      %v993 = vshrl.u32 %v720, 16
      %v995 = vrot.slane %v993, 7
      %v996 = vshll.u32 %v720, 16
      %v998 = vor.u32 %v995, %v996
      %v999 = vsel %vm735, %v991, %v998
      %v1001 = vshrl.u32 %v721, 16
      %v1003 = vrot.slane %v1001, 7
      %v1004 = vrot.slane %v1003, 4
      %v1006 = vshrl.u32 %v722, 16
      %v1008 = vrot.slane %v1006, 7
      %v1009 = vshll.u32 %v722, 16
      %v1011 = vor.u32 %v1008, %v1009
      %v1012 = vsel %vm735, %v1004, %v1011
      %v1013 = vrot.slane %v1008, 4
      %v1015 = vshrl.u32 %v723, 16
      %v1017 = vrot.slane %v1015, 7
      %v1018 = vshll.u32 %v723, 16
      %v1020 = vor.u32 %v1017, %v1018
      %v1021 = vsel %vm735, %v1013, %v1020
      %v1023 = vshrl.u32 %v724, 16
      %v1025 = vrot.slane %v1023, 7
      %v1026 = vrot.slane %v1025, 4
      %v1028 = vshrl.u32 %v725, 16
      %v1030 = vrot.slane %v1028, 7
      %v1031 = vshll.u32 %v725, 16
      %v1033 = vor.u32 %v1030, %v1031
      %v1034 = vsel %vm735, %v1026, %v1033
      %v1035 = vrot.slane %v1030, 4
      %v1037 = vshrl.u32 %v726, 16
      %v1039 = vrot.slane %v1037, 7
      %v1040 = vshll.u32 %v726, 16
      %v1042 = vor.u32 %v1039, %v1040
      %v1043 = vsel %vm735, %v1035, %v1042
      %v1045 = vshrl.u32 %v727, 16
      %v1047 = vrot.slane %v1045, 7
      %v1048 = vrot.slane %v1047, 4
      %v1050 = vshrl.u32 %v728, 16
      %v1052 = vrot.slane %v1050, 7
      %v1053 = vshll.u32 %v728, 16
      %v1055 = vor.u32 %v1052, %v1053
      %v1056 = vsel %vm735, %v1048, %v1055
      %v1057 = vrot.slane %v1052, 4
      %v1059 = vshrl.u32 %v729, 16
      %v1061 = vrot.slane %v1059, 7
      %v1062 = vshll.u32 %v729, 16
      %v1064 = vor.u32 %v1061, %v1062
      %v1065 = vsel %vm735, %v1057, %v1064
      %v1067 = vshrl.u32 %v730, 16
      %v1069 = vrot.slane %v1067, 7
      %v1070 = vrot.slane %v1069, 4
      %v1072 = vshrl.u32 %v731, 16
      %v1074 = vrot.slane %v1072, 7
      %v1075 = vshll.u32 %v731, 16
      %v1077 = vor.u32 %v1074, %v1075
      %v1078 = vsel %vm735, %v1070, %v1077
      %v1079 = vrot.slane %v1074, 4
      %v1081 = vshrl.u32 %v732, 16
      %v1083 = vrot.slane %v1081, 7
      %v1084 = vshll.u32 %v732, 16
      %v1086 = vor.u32 %v1083, %v1084
      %v1087 = vsel %vm735, %v1079, %v1086
      %v1088 = vld [vmem:[%s3] sm:$0xf]
      %v1089 = vld [vmem:[%s3 + $0x4] sm:$0xf]
      %v1090 = vld [vmem:[%s3 + $0x8] sm:$0xf]
      %v1091 = vld [vmem:[%s3 + $0xc] sm:$0xf]
      %v1092 = vld [vmem:[%s3 + $0x10] sm:$0xf]
      %v1093 = vld [vmem:[%s3 + $0x14] sm:$0xf]
      %v1094 = vld [vmem:[%s3 + $0x18] sm:$0xf]
      %v1095 = vld [vmem:[%s3 + $0x1c] sm:$0xf]
      %v1096 = vld [vmem:[%s3 + $0x20] sm:$0xf]
      %v1097 = vld [vmem:[%s3 + $0x24] sm:$0xf]
      %v1098 = vld [vmem:[%s3 + $0x28] sm:$0xf]
      %v1099 = vld [vmem:[%s3 + $0x2c] sm:$0xf]
      %v1100 = vld [vmem:[%s3 + $0x30] sm:$0xf]
      %v1101 = vld [vmem:[%s3 + $0x34] sm:$0xf]
      %v1102 = vld [vmem:[%s3 + $0x38] sm:$0xf]
      %v1103 = vld [vmem:[%s3 + $0x3c] sm:$0xf]
      %s1104 = scalar_lea.vmem %s3, 64
      %v1105 = vld [vmem:[%s1104] sm:$0xf]
      %v1106 = vld [vmem:[%s1104 + $0x4] sm:$0xf]
      %v1107 = vld [vmem:[%s1104 + $0x8] sm:$0xf]
      %v1108 = vld [vmem:[%s1104 + $0xc] sm:$0xf]
      %v1109 = vld [vmem:[%s1104 + $0x10] sm:$0xf]
      %v1110 = vld [vmem:[%s1104 + $0x14] sm:$0xf]
      %v1111 = vld [vmem:[%s1104 + $0x18] sm:$0xf]
      %v1112 = vld [vmem:[%s1104 + $0x1c] sm:$0xf]
      %v1113 = vld [vmem:[%s1104 + $0x20] sm:$0xf]
      %v1114 = vld [vmem:[%s1104 + $0x24] sm:$0xf]
      %v1115 = vld [vmem:[%s1104 + $0x28] sm:$0xf]
      %v1116 = vld [vmem:[%s1104 + $0x2c] sm:$0xf]
      %v1117 = vld [vmem:[%s1104 + $0x30] sm:$0xf]
      %v1118 = vld [vmem:[%s1104 + $0x34] sm:$0xf]
      %v1119 = vld [vmem:[%s1104 + $0x38] sm:$0xf]
      %v1120 = vld [vmem:[%s1104 + $0x3c] sm:$0xf]
      %v1153 = vunpack.c.l.b16 %v686
      %v1154 = vunpack.c.l.b16 %v687
      %v1155 = vunpack.c.l.b16 %v689
      %v1156 = vunpack.c.l.b16 %v690
      %v1157 = vunpack.c.l.b16 %v692
      %v1158 = vunpack.c.l.b16 %v693
      %v1159 = vunpack.c.l.b16 %v695
      %v1160 = vunpack.c.l.b16 %v696
      %v1161 = vunpack.c.l.b16 %v698
      %v1162 = vunpack.c.l.b16 %v699
      %v1163 = vunpack.c.l.b16 %v701
      %v1164 = vunpack.c.l.b16 %v702
      %v1165 = vunpack.c.l.b16 %v704
      %v1166 = vunpack.c.l.b16 %v705
      %v1167 = vunpack.c.l.b16 %v707
      %v1168 = vunpack.c.l.b16 %v708
      %v1169 = vunpack.c.l.b16 %v710
      %v1170 = vunpack.c.l.b16 %v711
      %v1171 = vunpack.c.l.b16 %v713
      %v1172 = vunpack.c.l.b16 %v714
      %v1173 = vunpack.c.l.b16 %v716
      %v1174 = vunpack.c.l.b16 %v717
      %v1175 = vunpack.c.l.b16 %v719
      %v1176 = vunpack.c.l.b16 %v720
      %v1177 = vunpack.c.l.b16 %v722
      %v1178 = vunpack.c.l.b16 %v723
      %v1179 = vunpack.c.l.b16 %v725
      %v1180 = vunpack.c.l.b16 %v726
      %v1181 = vunpack.c.l.b16 %v728
      %v1182 = vunpack.c.l.b16 %v729
      %v1183 = vunpack.c.l.b16 %v731
      %v1184 = vunpack.c.l.b16 %v732
      %v1185 = vpack.c.b16 %v1154, %v1153
      %v1186 = vpack.c.b16 %v1156, %v1155
      %v1187 = vpack.c.b16 %v1158, %v1157
      %v1188 = vpack.c.b16 %v1160, %v1159
      %v1189 = vpack.c.b16 %v1162, %v1161
      %v1190 = vpack.c.b16 %v1164, %v1163
      %v1191 = vpack.c.b16 %v1166, %v1165
      %v1192 = vpack.c.b16 %v1168, %v1167
      %v1193 = vpack.c.b16 %v1170, %v1169
      %v1194 = vpack.c.b16 %v1172, %v1171
      %v1195 = vpack.c.b16 %v1174, %v1173
      %v1196 = vpack.c.b16 %v1176, %v1175
      %v1197 = vpack.c.b16 %v1178, %v1177
      %v1198 = vpack.c.b16 %v1180, %v1179
      %v1199 = vpack.c.b16 %v1182, %v1181
      %v1200 = vpack.c.b16 %v1184, %v1183
      %v1233 = vunpack.c.l.b16 %v1105
      %v1234 = vunpack.c.l.b16 %v1106
      %v1235 = vunpack.c.l.b16 %v1107
      %v1236 = vunpack.c.l.b16 %v1108
      %v1237 = vunpack.c.l.b16 %v1109
      %v1238 = vunpack.c.l.b16 %v1110
      %v1239 = vunpack.c.l.b16 %v1111
      %v1240 = vunpack.c.l.b16 %v1112
      %v1241 = vunpack.c.l.b16 %v1113
      %v1242 = vunpack.c.l.b16 %v1114
      %v1243 = vunpack.c.l.b16 %v1115
      %v1244 = vunpack.c.l.b16 %v1116
      %v1245 = vunpack.c.l.b16 %v1117
      %v1246 = vunpack.c.l.b16 %v1118
      %v1247 = vunpack.c.l.b16 %v1119
      %v1248 = vunpack.c.l.b16 %v1120
      %v1249 = vpack.c.b16 %v1234, %v1233
      %v1250 = vpack.c.b16 %v1236, %v1235
      %v1251 = vpack.c.b16 %v1238, %v1237
      %v1252 = vpack.c.b16 %v1240, %v1239
      %v1253 = vpack.c.b16 %v1242, %v1241
      %v1254 = vpack.c.b16 %v1244, %v1243
      %v1255 = vpack.c.b16 %v1246, %v1245
      %v1256 = vpack.c.b16 %v1248, %v1247
      %1265 = vmatpush.bf16.msra.mxu0 %v1256
      %1266 = vmatpush.bf16.msra.mxu0 %v1255
      %1267 = vmatpush.bf16.msra.mxu0 %v1254
      %1268 = vmatpush.bf16.msra.mxu0 %v1253
      %1269 = vmatpush.bf16.msra.mxu0 %v1252
      %1270 = vmatpush.bf16.msra.mxu0 %v1251
      %1271 = vmatpush.bf16.msra.mxu0 %v1250
      %1272 = vmatpush.bf16.msra.mxu0 %v1249
      %1273 = vmatmul.bf16.gmra.mxu0 %v1185
      %v1274 = vpop.f32.mrf.mxu0
      %v1275 = vadd.f32 0.0, %v1274
      %v1276 = vpop.f32.mrf.mxu0
      %v1277 = vadd.f32 0.0, %v1276
      %1278 = vmatmul.bf16.gmra.mxu0 %v1186
      %v1279 = vpop.f32.mrf.mxu0
      %v1280 = vadd.f32 0.0, %v1279
      %v1281 = vpop.f32.mrf.mxu0
      %v1282 = vadd.f32 0.0, %v1281
      %1283 = vmatmul.bf16.gmra.mxu0 %v1187
      %v1284 = vpop.f32.mrf.mxu0
      %v1285 = vadd.f32 0.0, %v1284
      %v1286 = vpop.f32.mrf.mxu0
      %v1287 = vadd.f32 0.0, %v1286
      %1288 = vmatmul.bf16.gmra.mxu0 %v1188
      %v1289 = vpop.f32.mrf.mxu0
      %v1290 = vadd.f32 0.0, %v1289
      %v1291 = vpop.f32.mrf.mxu0
      %v1292 = vadd.f32 0.0, %v1291
      %1293 = vmatmul.bf16.gmra.mxu0 %v1189
      %v1294 = vpop.f32.mrf.mxu0
      %v1295 = vadd.f32 0.0, %v1294
      %v1296 = vpop.f32.mrf.mxu0
      %v1297 = vadd.f32 0.0, %v1296
      %1298 = vmatmul.bf16.gmra.mxu0 %v1190
      %v1299 = vpop.f32.mrf.mxu0
      %v1300 = vadd.f32 0.0, %v1299
      %v1301 = vpop.f32.mrf.mxu0
      %v1302 = vadd.f32 0.0, %v1301
      %1303 = vmatmul.bf16.gmra.mxu0 %v1191
      %v1304 = vpop.f32.mrf.mxu0
      %v1305 = vadd.f32 0.0, %v1304
      %v1306 = vpop.f32.mrf.mxu0
      %v1307 = vadd.f32 0.0, %v1306
      %1308 = vmatmul.bf16.gmra.mxu0 %v1192
      %v1309 = vpop.f32.mrf.mxu0
      %v1310 = vadd.f32 0.0, %v1309
      %v1311 = vpop.f32.mrf.mxu0
      %v1312 = vadd.f32 0.0, %v1311
      %1313 = vmatmul.bf16.gmra.mxu0 %v1193
      %v1314 = vpop.f32.mrf.mxu0
      %v1315 = vadd.f32 0.0, %v1314
      %v1316 = vpop.f32.mrf.mxu0
      %v1317 = vadd.f32 0.0, %v1316
      %1318 = vmatmul.bf16.gmra.mxu0 %v1194
      %v1319 = vpop.f32.mrf.mxu0
      %v1320 = vadd.f32 0.0, %v1319
      %v1321 = vpop.f32.mrf.mxu0
      %v1322 = vadd.f32 0.0, %v1321
      %1323 = vmatmul.bf16.gmra.mxu0 %v1195
      %v1324 = vpop.f32.mrf.mxu0
      %v1325 = vadd.f32 0.0, %v1324
      %v1326 = vpop.f32.mrf.mxu0
      %v1327 = vadd.f32 0.0, %v1326
      %1328 = vmatmul.bf16.gmra.mxu0 %v1196
      %v1329 = vpop.f32.mrf.mxu0
      %v1330 = vadd.f32 0.0, %v1329
      %v1331 = vpop.f32.mrf.mxu0
      %v1332 = vadd.f32 0.0, %v1331
      %1333 = vmatmul.bf16.gmra.mxu0 %v1197
      %v1334 = vpop.f32.mrf.mxu0
      %v1335 = vadd.f32 0.0, %v1334
      %v1336 = vpop.f32.mrf.mxu0
      %v1337 = vadd.f32 0.0, %v1336
      %1338 = vmatmul.bf16.gmra.mxu0 %v1198
      %v1339 = vpop.f32.mrf.mxu0
      %v1340 = vadd.f32 0.0, %v1339
      %v1341 = vpop.f32.mrf.mxu0
      %v1342 = vadd.f32 0.0, %v1341
      %1343 = vmatmul.bf16.gmra.mxu0 %v1199
      %v1344 = vpop.f32.mrf.mxu0
      %v1345 = vadd.f32 0.0, %v1344
      %v1346 = vpop.f32.mrf.mxu0
      %v1347 = vadd.f32 0.0, %v1346
      %1348 = vmatmul.bf16.gmra.mxu0 %v1200
      %v1349 = vpop.f32.mrf.mxu0
      %v1350 = vadd.f32 0.0, %v1349
      %v1351 = vpop.f32.mrf.mxu0
      %v1352 = vadd.f32 0.0, %v1351
      %1353 = vdwg.mxu0
      %v1354 = vunpack.c.l.b16 %v748
      %v1355 = vunpack.c.l.b16 %v757
      %v1356 = vunpack.c.l.b16 %v770
      %v1357 = vunpack.c.l.b16 %v779
      %v1358 = vunpack.c.l.b16 %v792
      %v1359 = vunpack.c.l.b16 %v801
      %v1360 = vunpack.c.l.b16 %v814
      %v1361 = vunpack.c.l.b16 %v823
      %v1362 = vunpack.c.l.b16 %v836
      %v1363 = vunpack.c.l.b16 %v845
      %v1364 = vunpack.c.l.b16 %v858
      %v1365 = vunpack.c.l.b16 %v867
      %v1366 = vunpack.c.l.b16 %v880
      %v1367 = vunpack.c.l.b16 %v889
      %v1368 = vunpack.c.l.b16 %v902
      %v1369 = vunpack.c.l.b16 %v911
      %v1370 = vunpack.c.l.b16 %v924
      %v1371 = vunpack.c.l.b16 %v933
      %v1372 = vunpack.c.l.b16 %v946
      %v1373 = vunpack.c.l.b16 %v955
      %v1374 = vunpack.c.l.b16 %v968
      %v1375 = vunpack.c.l.b16 %v977
      %v1376 = vunpack.c.l.b16 %v990
      %v1377 = vunpack.c.l.b16 %v999
      %v1378 = vunpack.c.l.b16 %v1012
      %v1379 = vunpack.c.l.b16 %v1021
      %v1380 = vunpack.c.l.b16 %v1034
      %v1381 = vunpack.c.l.b16 %v1043
      %v1382 = vunpack.c.l.b16 %v1056
      %v1383 = vunpack.c.l.b16 %v1065
      %v1384 = vunpack.c.l.b16 %v1078
      %v1385 = vunpack.c.l.b16 %v1087
      %v1386 = vpack.c.b16 %v1355, %v1354
      %v1387 = vpack.c.b16 %v1357, %v1356
      %v1388 = vpack.c.b16 %v1359, %v1358
      %v1389 = vpack.c.b16 %v1361, %v1360
      %v1390 = vpack.c.b16 %v1363, %v1362
      %v1391 = vpack.c.b16 %v1365, %v1364
      %v1392 = vpack.c.b16 %v1367, %v1366
      %v1393 = vpack.c.b16 %v1369, %v1368
      %v1394 = vpack.c.b16 %v1371, %v1370
      %v1395 = vpack.c.b16 %v1373, %v1372
      %v1396 = vpack.c.b16 %v1375, %v1374
      %v1397 = vpack.c.b16 %v1377, %v1376
      %v1398 = vpack.c.b16 %v1379, %v1378
      %v1399 = vpack.c.b16 %v1381, %v1380
      %v1400 = vpack.c.b16 %v1383, %v1382
      %v1401 = vpack.c.b16 %v1385, %v1384
      %v1434 = vunpack.c.l.b16 %v1088
      %v1435 = vunpack.c.l.b16 %v1089
      %v1436 = vunpack.c.l.b16 %v1090
      %v1437 = vunpack.c.l.b16 %v1091
      %v1438 = vunpack.c.l.b16 %v1092
      %v1439 = vunpack.c.l.b16 %v1093
      %v1440 = vunpack.c.l.b16 %v1094
      %v1441 = vunpack.c.l.b16 %v1095
      %v1442 = vunpack.c.l.b16 %v1096
      %v1443 = vunpack.c.l.b16 %v1097
      %v1444 = vunpack.c.l.b16 %v1098
      %v1445 = vunpack.c.l.b16 %v1099
      %v1446 = vunpack.c.l.b16 %v1100
      %v1447 = vunpack.c.l.b16 %v1101
      %v1448 = vunpack.c.l.b16 %v1102
      %v1449 = vunpack.c.l.b16 %v1103
      %v1450 = vpack.c.b16 %v1435, %v1434
      %v1451 = vpack.c.b16 %v1437, %v1436
      %v1452 = vpack.c.b16 %v1439, %v1438
      %v1453 = vpack.c.b16 %v1441, %v1440
      %v1454 = vpack.c.b16 %v1443, %v1442
      %v1455 = vpack.c.b16 %v1445, %v1444
      %v1456 = vpack.c.b16 %v1447, %v1446
      %v1457 = vpack.c.b16 %v1449, %v1448
      %1466 = vmatpush.bf16.msra.mxu0 %v1457
      %1467 = vmatpush.bf16.msra.mxu0 %v1456
      %1468 = vmatpush.bf16.msra.mxu0 %v1455
      %1469 = vmatpush.bf16.msra.mxu0 %v1454
      %1470 = vmatpush.bf16.msra.mxu0 %v1453
      %1471 = vmatpush.bf16.msra.mxu0 %v1452
      %1472 = vmatpush.bf16.msra.mxu0 %v1451
      %1473 = vmatpush.bf16.msra.mxu0 %v1450
      %1474 = vmatmul.bf16.gmra.mxu0 %v1386
      %v1475 = vpop.f32.mrf.mxu0
      %v1476 = vadd.f32 %v1275, %v1475
      %v1477 = vpop.f32.mrf.mxu0
      %v1478 = vadd.f32 %v1277, %v1477
      %1479 = vmatmul.bf16.gmra.mxu0 %v1387
      %v1480 = vpop.f32.mrf.mxu0
      %v1481 = vadd.f32 %v1280, %v1480
      %v1482 = vpop.f32.mrf.mxu0
      %v1483 = vadd.f32 %v1282, %v1482
      %1484 = vmatmul.bf16.gmra.mxu0 %v1388
      %v1485 = vpop.f32.mrf.mxu0
      %v1486 = vadd.f32 %v1285, %v1485
      %v1487 = vpop.f32.mrf.mxu0
      %v1488 = vadd.f32 %v1287, %v1487
      %1489 = vmatmul.bf16.gmra.mxu0 %v1389
      %v1490 = vpop.f32.mrf.mxu0
      %v1491 = vadd.f32 %v1290, %v1490
      %v1492 = vpop.f32.mrf.mxu0
      %v1493 = vadd.f32 %v1292, %v1492
      %1494 = vmatmul.bf16.gmra.mxu0 %v1390
      %v1495 = vpop.f32.mrf.mxu0
      %v1496 = vadd.f32 %v1295, %v1495
      %v1497 = vpop.f32.mrf.mxu0
      %v1498 = vadd.f32 %v1297, %v1497
      %1499 = vmatmul.bf16.gmra.mxu0 %v1391
      %v1500 = vpop.f32.mrf.mxu0
      %v1501 = vadd.f32 %v1300, %v1500
      %v1502 = vpop.f32.mrf.mxu0
      %v1503 = vadd.f32 %v1302, %v1502
      %1504 = vmatmul.bf16.gmra.mxu0 %v1392
      %v1505 = vpop.f32.mrf.mxu0
      %v1506 = vadd.f32 %v1305, %v1505
      %v1507 = vpop.f32.mrf.mxu0
      %v1508 = vadd.f32 %v1307, %v1507
      %1509 = vmatmul.bf16.gmra.mxu0 %v1393
      %v1510 = vpop.f32.mrf.mxu0
      %v1511 = vadd.f32 %v1310, %v1510
      %v1512 = vpop.f32.mrf.mxu0
      %v1513 = vadd.f32 %v1312, %v1512
      %1514 = vmatmul.bf16.gmra.mxu0 %v1394
      %v1515 = vpop.f32.mrf.mxu0
      %v1516 = vadd.f32 %v1315, %v1515
      %v1517 = vpop.f32.mrf.mxu0
      %v1518 = vadd.f32 %v1317, %v1517
      %1519 = vmatmul.bf16.gmra.mxu0 %v1395
      %v1520 = vpop.f32.mrf.mxu0
      %v1521 = vadd.f32 %v1320, %v1520
      %v1522 = vpop.f32.mrf.mxu0
      %v1523 = vadd.f32 %v1322, %v1522
      %1524 = vmatmul.bf16.gmra.mxu0 %v1396
      %v1525 = vpop.f32.mrf.mxu0
      %v1526 = vadd.f32 %v1325, %v1525
      %v1527 = vpop.f32.mrf.mxu0
      %v1528 = vadd.f32 %v1327, %v1527
      %1529 = vmatmul.bf16.gmra.mxu0 %v1397
      %v1530 = vpop.f32.mrf.mxu0
      %v1531 = vadd.f32 %v1330, %v1530
      %v1532 = vpop.f32.mrf.mxu0
      %v1533 = vadd.f32 %v1332, %v1532
      %1534 = vmatmul.bf16.gmra.mxu0 %v1398
      %v1535 = vpop.f32.mrf.mxu0
      %v1536 = vadd.f32 %v1335, %v1535
      %v1537 = vpop.f32.mrf.mxu0
      %v1538 = vadd.f32 %v1337, %v1537
      %1539 = vmatmul.bf16.gmra.mxu0 %v1399
      %v1540 = vpop.f32.mrf.mxu0
      %v1541 = vadd.f32 %v1340, %v1540
      %v1542 = vpop.f32.mrf.mxu0
      %v1543 = vadd.f32 %v1342, %v1542
      %1544 = vmatmul.bf16.gmra.mxu0 %v1400
      %v1545 = vpop.f32.mrf.mxu0
      %v1546 = vadd.f32 %v1345, %v1545
      %v1547 = vpop.f32.mrf.mxu0
      %v1548 = vadd.f32 %v1347, %v1547
      %1549 = vmatmul.bf16.gmra.mxu0 %v1401
      %v1550 = vpop.f32.mrf.mxu0
      %v1551 = vadd.f32 %v1350, %v1550
      %v1552 = vpop.f32.mrf.mxu0
      %v1553 = vadd.f32 %v1352, %v1552
      %1554 = vdwg.mxu0
      %v1555 = vld [vmem:[#allocation2 + $0x8] sm:$0xf]
      %v1556 = vld [vmem:[#allocation2 + $0xc] sm:$0xf]
      %v1557 = vld [vmem:[#allocation2 + $0x10] sm:$0x1]
      %v1558 = vld [vmem:[#allocation2 + $0x20] sm:$0xf]
      %v1559 = vld [vmem:[#allocation2 + $0x24] sm:$0xf]
      %v1560 = vld [vmem:[#allocation2 + $0x28] sm:$0x1]
      %v1561 = vld [vmem:[#allocation2 + $0x38] sm:$0xf]
      %v1562 = vld [vmem:[#allocation2 + $0x3c] sm:$0xf]
      %v1563 = vld [vmem:[#allocation2 + $0x40] sm:$0x1]
      %v1564 = vld [vmem:[#allocation2 + $0x50] sm:$0xf]
      %v1565 = vld [vmem:[#allocation2 + $0x54] sm:$0xf]
      %v1566 = vld [vmem:[#allocation2 + $0x58] sm:$0x1]
      %v1567 = vld [vmem:[#allocation2 + $0x68] sm:$0xf]
      %v1568 = vld [vmem:[#allocation2 + $0x6c] sm:$0xf]
      %v1569 = vld [vmem:[#allocation2 + $0x70] sm:$0x1]
      %v1570 = vld [vmem:[#allocation2 + $0x80] sm:$0xf]
      %v1571 = vld [vmem:[#allocation2 + $0x84] sm:$0xf]
      %v1572 = vld [vmem:[#allocation2 + $0x88] sm:$0x1]
      %v1573 = vld [vmem:[#allocation2 + $0x98] sm:$0xf]
      %v1574 = vld [vmem:[#allocation2 + $0x9c] sm:$0xf]
      %v1575 = vld [vmem:[#allocation2 + $0xa0] sm:$0x1]
      %v1576 = vld [vmem:[#allocation2 + $0xb0] sm:$0xf]
      %v1577 = vld [vmem:[#allocation2 + $0xb4] sm:$0xf]
      %v1578 = vld [vmem:[#allocation2 + $0xb8] sm:$0x1]
      %v1579 = vld [vmem:[#allocation2 + $0xc8] sm:$0xf]
      %v1580 = vld [vmem:[#allocation2 + $0xcc] sm:$0xf]
      %v1581 = vld [vmem:[#allocation2 + $0xd0] sm:$0x1]
      %v1582 = vld [vmem:[#allocation2 + $0xe0] sm:$0xf]
      %v1583 = vld [vmem:[#allocation2 + $0xe4] sm:$0xf]
      %v1584 = vld [vmem:[#allocation2 + $0xe8] sm:$0x1]
      %v1585 = vld [vmem:[#allocation2 + $0xf8] sm:$0xf]
      %v1586 = vld [vmem:[#allocation2 + $0xfc] sm:$0xf]
      %v1587 = vld [vmem:[#allocation2 + $0x100] sm:$0x1]
      %v1588 = vld [vmem:[#allocation2 + $0x110] sm:$0xf]
      %v1589 = vld [vmem:[#allocation2 + $0x114] sm:$0xf]
      %v1590 = vld [vmem:[#allocation2 + $0x118] sm:$0x1]
      %v1591 = vld [vmem:[#allocation2 + $0x128] sm:$0xf]
      %v1592 = vld [vmem:[#allocation2 + $0x12c] sm:$0xf]
      %v1593 = vld [vmem:[#allocation2 + $0x130] sm:$0x1]
      %v1594 = vld [vmem:[#allocation2 + $0x140] sm:$0xf]
      %v1595 = vld [vmem:[#allocation2 + $0x144] sm:$0xf]
      %v1596 = vld [vmem:[#allocation2 + $0x148] sm:$0x1]
      %v1597 = vld [vmem:[#allocation2 + $0x158] sm:$0xf]
      %v1598 = vld [vmem:[#allocation2 + $0x15c] sm:$0xf]
      %v1599 = vld [vmem:[#allocation2 + $0x160] sm:$0x1]
      %v1600 = vld [vmem:[#allocation2 + $0x170] sm:$0xf]
      %v1601 = vld [vmem:[#allocation2 + $0x174] sm:$0xf]
      %v1602 = vld [vmem:[#allocation2 + $0x178] sm:$0x1]
      %vm1603 = vsmask.f32 3328
      %vm1604 = vsmask.f32 7440
      %vm1605 = vmor %vm1603, %vm1604
      %v1607 = vshrl.u32 %v1555, 16
      %v1609 = vrot.slane %v1607, 4
      %v1610 = vshll.u32 %v1555, 16
      %v1612 = vrot.slane %v1610, 5
      %v1613 = vor.u32 %v1609, %v1612
      %v1614 = vrot.slane %v1613, 4
      %v1616 = vshll.u32 %v1556, 16
      %v1618 = vrot.slane %v1616, 5
      %v1619 = vsel %vm1605, %v1614, %v1618
      %v1620 = vshrl.u32 %v1556, 16
      %v1622 = vrot.slane %v1620, 4
      %v1623 = vor.u32 %v1622, %v1618
      %v1624 = vrot.slane %v1623, 4
      %v1626 = vshll.u32 %v1557, 16
      %v1628 = vrot.slane %v1626, 5
      %v1629 = vsel %vm1605, %v1624, %v1628
      %v1631 = vshrl.u32 %v1558, 16
      %v1633 = vrot.slane %v1631, 4
      %v1634 = vshll.u32 %v1558, 16
      %v1636 = vrot.slane %v1634, 5
      %v1637 = vor.u32 %v1633, %v1636
      %v1638 = vrot.slane %v1637, 4
      %v1640 = vshll.u32 %v1559, 16
      %v1642 = vrot.slane %v1640, 5
      %v1643 = vsel %vm1605, %v1638, %v1642
      %v1644 = vshrl.u32 %v1559, 16
      %v1646 = vrot.slane %v1644, 4
      %v1647 = vor.u32 %v1646, %v1642
      %v1648 = vrot.slane %v1647, 4
      %v1650 = vshll.u32 %v1560, 16
      %v1652 = vrot.slane %v1650, 5
      %v1653 = vsel %vm1605, %v1648, %v1652
      %v1655 = vshrl.u32 %v1561, 16
      %v1657 = vrot.slane %v1655, 4
      %v1658 = vshll.u32 %v1561, 16
      %v1660 = vrot.slane %v1658, 5
      %v1661 = vor.u32 %v1657, %v1660
      %v1662 = vrot.slane %v1661, 4
      %v1664 = vshll.u32 %v1562, 16
      %v1666 = vrot.slane %v1664, 5
      %v1667 = vsel %vm1605, %v1662, %v1666
      %v1668 = vshrl.u32 %v1562, 16
      %v1670 = vrot.slane %v1668, 4
      %v1671 = vor.u32 %v1670, %v1666
      %v1672 = vrot.slane %v1671, 4
      %v1674 = vshll.u32 %v1563, 16
      %v1676 = vrot.slane %v1674, 5
      %v1677 = vsel %vm1605, %v1672, %v1676
      %v1679 = vshrl.u32 %v1564, 16
      %v1681 = vrot.slane %v1679, 4
      %v1682 = vshll.u32 %v1564, 16
      %v1684 = vrot.slane %v1682, 5
      %v1685 = vor.u32 %v1681, %v1684
      %v1686 = vrot.slane %v1685, 4
      %v1688 = vshll.u32 %v1565, 16
      %v1690 = vrot.slane %v1688, 5
      %v1691 = vsel %vm1605, %v1686, %v1690
      %v1692 = vshrl.u32 %v1565, 16
      %v1694 = vrot.slane %v1692, 4
      %v1695 = vor.u32 %v1694, %v1690
      %v1696 = vrot.slane %v1695, 4
      %v1698 = vshll.u32 %v1566, 16
      %v1700 = vrot.slane %v1698, 5
      %v1701 = vsel %vm1605, %v1696, %v1700
      %v1703 = vshrl.u32 %v1567, 16
      %v1705 = vrot.slane %v1703, 4
      %v1706 = vshll.u32 %v1567, 16
      %v1708 = vrot.slane %v1706, 5
      %v1709 = vor.u32 %v1705, %v1708
      %v1710 = vrot.slane %v1709, 4
      %v1712 = vshll.u32 %v1568, 16
      %v1714 = vrot.slane %v1712, 5
      %v1715 = vsel %vm1605, %v1710, %v1714
      %v1716 = vshrl.u32 %v1568, 16
      %v1718 = vrot.slane %v1716, 4
      %v1719 = vor.u32 %v1718, %v1714
      %v1720 = vrot.slane %v1719, 4
      %v1722 = vshll.u32 %v1569, 16
      %v1724 = vrot.slane %v1722, 5
      %v1725 = vsel %vm1605, %v1720, %v1724
      %v1727 = vshrl.u32 %v1570, 16
      %v1729 = vrot.slane %v1727, 4
      %v1730 = vshll.u32 %v1570, 16
      %v1732 = vrot.slane %v1730, 5
      %v1733 = vor.u32 %v1729, %v1732
      %v1734 = vrot.slane %v1733, 4
      %v1736 = vshll.u32 %v1571, 16
      %v1738 = vrot.slane %v1736, 5
      %v1739 = vsel %vm1605, %v1734, %v1738
      %v1740 = vshrl.u32 %v1571, 16
      %v1742 = vrot.slane %v1740, 4
      %v1743 = vor.u32 %v1742, %v1738
      %v1744 = vrot.slane %v1743, 4
      %v1746 = vshll.u32 %v1572, 16
      %v1748 = vrot.slane %v1746, 5
      %v1749 = vsel %vm1605, %v1744, %v1748
      %v1751 = vshrl.u32 %v1573, 16
      %v1753 = vrot.slane %v1751, 4
      %v1754 = vshll.u32 %v1573, 16
      %v1756 = vrot.slane %v1754, 5
      %v1757 = vor.u32 %v1753, %v1756
      %v1758 = vrot.slane %v1757, 4
      %v1760 = vshll.u32 %v1574, 16
      %v1762 = vrot.slane %v1760, 5
      %v1763 = vsel %vm1605, %v1758, %v1762
      %v1764 = vshrl.u32 %v1574, 16
      %v1766 = vrot.slane %v1764, 4
      %v1767 = vor.u32 %v1766, %v1762
      %v1768 = vrot.slane %v1767, 4
      %v1770 = vshll.u32 %v1575, 16
      %v1772 = vrot.slane %v1770, 5
      %v1773 = vsel %vm1605, %v1768, %v1772
      %v1775 = vshrl.u32 %v1576, 16
      %v1777 = vrot.slane %v1775, 4
      %v1778 = vshll.u32 %v1576, 16
      %v1780 = vrot.slane %v1778, 5
      %v1781 = vor.u32 %v1777, %v1780
      %v1782 = vrot.slane %v1781, 4
      %v1784 = vshll.u32 %v1577, 16
      %v1786 = vrot.slane %v1784, 5
      %v1787 = vsel %vm1605, %v1782, %v1786
      %v1788 = vshrl.u32 %v1577, 16
      %v1790 = vrot.slane %v1788, 4
      %v1791 = vor.u32 %v1790, %v1786
      %v1792 = vrot.slane %v1791, 4
      %v1794 = vshll.u32 %v1578, 16
      %v1796 = vrot.slane %v1794, 5
      %v1797 = vsel %vm1605, %v1792, %v1796
      %v1799 = vshrl.u32 %v1579, 16
      %v1801 = vrot.slane %v1799, 4
      %v1802 = vshll.u32 %v1579, 16
      %v1804 = vrot.slane %v1802, 5
      %v1805 = vor.u32 %v1801, %v1804
      %v1806 = vrot.slane %v1805, 4
      %v1808 = vshll.u32 %v1580, 16
      %v1810 = vrot.slane %v1808, 5
      %v1811 = vsel %vm1605, %v1806, %v1810
      %v1812 = vshrl.u32 %v1580, 16
      %v1814 = vrot.slane %v1812, 4
      %v1815 = vor.u32 %v1814, %v1810
      %v1816 = vrot.slane %v1815, 4
      %v1818 = vshll.u32 %v1581, 16
      %v1820 = vrot.slane %v1818, 5
      %v1821 = vsel %vm1605, %v1816, %v1820
      %v1823 = vshrl.u32 %v1582, 16
      %v1825 = vrot.slane %v1823, 4
      %v1826 = vshll.u32 %v1582, 16
      %v1828 = vrot.slane %v1826, 5
      %v1829 = vor.u32 %v1825, %v1828
      %v1830 = vrot.slane %v1829, 4
      %v1832 = vshll.u32 %v1583, 16
      %v1834 = vrot.slane %v1832, 5
      %v1835 = vsel %vm1605, %v1830, %v1834
      %v1836 = vshrl.u32 %v1583, 16
      %v1838 = vrot.slane %v1836, 4
      %v1839 = vor.u32 %v1838, %v1834
      %v1840 = vrot.slane %v1839, 4
      %v1842 = vshll.u32 %v1584, 16
      %v1844 = vrot.slane %v1842, 5
      %v1845 = vsel %vm1605, %v1840, %v1844
      %v1847 = vshrl.u32 %v1585, 16
      %v1849 = vrot.slane %v1847, 4
      %v1850 = vshll.u32 %v1585, 16
      %v1852 = vrot.slane %v1850, 5
      %v1853 = vor.u32 %v1849, %v1852
      %v1854 = vrot.slane %v1853, 4
      %v1856 = vshll.u32 %v1586, 16
      %v1858 = vrot.slane %v1856, 5
      %v1859 = vsel %vm1605, %v1854, %v1858
      %v1860 = vshrl.u32 %v1586, 16
      %v1862 = vrot.slane %v1860, 4
      %v1863 = vor.u32 %v1862, %v1858
      %v1864 = vrot.slane %v1863, 4
      %v1866 = vshll.u32 %v1587, 16
      %v1868 = vrot.slane %v1866, 5
      %v1869 = vsel %vm1605, %v1864, %v1868
      %v1871 = vshrl.u32 %v1588, 16
      %v1873 = vrot.slane %v1871, 4
      %v1874 = vshll.u32 %v1588, 16
      %v1876 = vrot.slane %v1874, 5
      %v1877 = vor.u32 %v1873, %v1876
      %v1878 = vrot.slane %v1877, 4
      %v1880 = vshll.u32 %v1589, 16
      %v1882 = vrot.slane %v1880, 5
      %v1883 = vsel %vm1605, %v1878, %v1882
      %v1884 = vshrl.u32 %v1589, 16
      %v1886 = vrot.slane %v1884, 4
      %v1887 = vor.u32 %v1886, %v1882
      %v1888 = vrot.slane %v1887, 4
      %v1890 = vshll.u32 %v1590, 16
      %v1892 = vrot.slane %v1890, 5
      %v1893 = vsel %vm1605, %v1888, %v1892
      %v1895 = vshrl.u32 %v1591, 16
      %v1897 = vrot.slane %v1895, 4
      %v1898 = vshll.u32 %v1591, 16
      %v1900 = vrot.slane %v1898, 5
      %v1901 = vor.u32 %v1897, %v1900
      %v1902 = vrot.slane %v1901, 4
      %v1904 = vshll.u32 %v1592, 16
      %v1906 = vrot.slane %v1904, 5
      %v1907 = vsel %vm1605, %v1902, %v1906
      %v1908 = vshrl.u32 %v1592, 16
      %v1910 = vrot.slane %v1908, 4
      %v1911 = vor.u32 %v1910, %v1906
      %v1912 = vrot.slane %v1911, 4
      %v1914 = vshll.u32 %v1593, 16
      %v1916 = vrot.slane %v1914, 5
      %v1917 = vsel %vm1605, %v1912, %v1916
      %v1919 = vshrl.u32 %v1594, 16
      %v1921 = vrot.slane %v1919, 4
      %v1922 = vshll.u32 %v1594, 16
      %v1924 = vrot.slane %v1922, 5
      %v1925 = vor.u32 %v1921, %v1924
      %v1926 = vrot.slane %v1925, 4
      %v1928 = vshll.u32 %v1595, 16
      %v1930 = vrot.slane %v1928, 5
      %v1931 = vsel %vm1605, %v1926, %v1930
      %v1932 = vshrl.u32 %v1595, 16
      %v1934 = vrot.slane %v1932, 4
      %v1935 = vor.u32 %v1934, %v1930
      %v1936 = vrot.slane %v1935, 4
      %v1938 = vshll.u32 %v1596, 16
      %v1940 = vrot.slane %v1938, 5
      %v1941 = vsel %vm1605, %v1936, %v1940
      %v1943 = vshrl.u32 %v1597, 16
      %v1945 = vrot.slane %v1943, 4
      %v1946 = vshll.u32 %v1597, 16
      %v1948 = vrot.slane %v1946, 5
      %v1949 = vor.u32 %v1945, %v1948
      %v1950 = vrot.slane %v1949, 4
      %v1952 = vshll.u32 %v1598, 16
      %v1954 = vrot.slane %v1952, 5
      %v1955 = vsel %vm1605, %v1950, %v1954
      %v1956 = vshrl.u32 %v1598, 16
      %v1958 = vrot.slane %v1956, 4
      %v1959 = vor.u32 %v1958, %v1954
      %v1960 = vrot.slane %v1959, 4
      %v1962 = vshll.u32 %v1599, 16
      %v1964 = vrot.slane %v1962, 5
      %v1965 = vsel %vm1605, %v1960, %v1964
      %v1967 = vshrl.u32 %v1600, 16
      %v1969 = vrot.slane %v1967, 4
      %v1970 = vshll.u32 %v1600, 16
      %v1972 = vrot.slane %v1970, 5
      %v1973 = vor.u32 %v1969, %v1972
      %v1974 = vrot.slane %v1973, 4
      %v1976 = vshll.u32 %v1601, 16
      %v1978 = vrot.slane %v1976, 5
      %v1979 = vsel %vm1605, %v1974, %v1978
      %v1980 = vshrl.u32 %v1601, 16
      %v1982 = vrot.slane %v1980, 4
      %v1983 = vor.u32 %v1982, %v1978
      %v1984 = vrot.slane %v1983, 4
      %v1986 = vshll.u32 %v1602, 16
      %v1988 = vrot.slane %v1986, 5
      %v1989 = vsel %vm1605, %v1984, %v1988
      %s1990 = scalar_lea.vmem %s3, 128
      %v1991 = vld [vmem:[%s1990] sm:$0xf]
      %v1992 = vld [vmem:[%s1990 + $0x4] sm:$0xf]
      %v1993 = vld [vmem:[%s1990 + $0x8] sm:$0xf]
      %v1994 = vld [vmem:[%s1990 + $0xc] sm:$0xf]
      %v1995 = vld [vmem:[%s1990 + $0x10] sm:$0xf]
      %v1996 = vld [vmem:[%s1990 + $0x14] sm:$0xf]
      %v1997 = vld [vmem:[%s1990 + $0x18] sm:$0xf]
      %v1998 = vld [vmem:[%s1990 + $0x1c] sm:$0xf]
      %v1999 = vld [vmem:[%s1990 + $0x20] sm:$0xf]
      %v2000 = vld [vmem:[%s1990 + $0x24] sm:$0xf]
      %v2001 = vld [vmem:[%s1990 + $0x28] sm:$0xf]
      %v2002 = vld [vmem:[%s1990 + $0x2c] sm:$0xf]
      %v2003 = vld [vmem:[%s1990 + $0x30] sm:$0xf]
      %v2004 = vld [vmem:[%s1990 + $0x34] sm:$0xf]
      %v2005 = vld [vmem:[%s1990 + $0x38] sm:$0xf]
      %v2006 = vld [vmem:[%s1990 + $0x3c] sm:$0xf]
      %v2007 = vunpack.c.l.b16 %v1619
      %v2008 = vunpack.c.l.b16 %v1629
      %v2009 = vunpack.c.l.b16 %v1643
      %v2010 = vunpack.c.l.b16 %v1653
      %v2011 = vunpack.c.l.b16 %v1667
      %v2012 = vunpack.c.l.b16 %v1677
      %v2013 = vunpack.c.l.b16 %v1691
      %v2014 = vunpack.c.l.b16 %v1701
      %v2015 = vunpack.c.l.b16 %v1715
      %v2016 = vunpack.c.l.b16 %v1725
      %v2017 = vunpack.c.l.b16 %v1739
      %v2018 = vunpack.c.l.b16 %v1749
      %v2019 = vunpack.c.l.b16 %v1763
      %v2020 = vunpack.c.l.b16 %v1773
      %v2021 = vunpack.c.l.b16 %v1787
      %v2022 = vunpack.c.l.b16 %v1797
      %v2023 = vunpack.c.l.b16 %v1811
      %v2024 = vunpack.c.l.b16 %v1821
      %v2025 = vunpack.c.l.b16 %v1835
      %v2026 = vunpack.c.l.b16 %v1845
      %v2027 = vunpack.c.l.b16 %v1859
      %v2028 = vunpack.c.l.b16 %v1869
      %v2029 = vunpack.c.l.b16 %v1883
      %v2030 = vunpack.c.l.b16 %v1893
      %v2031 = vunpack.c.l.b16 %v1907
      %v2032 = vunpack.c.l.b16 %v1917
      %v2033 = vunpack.c.l.b16 %v1931
      %v2034 = vunpack.c.l.b16 %v1941
      %v2035 = vunpack.c.l.b16 %v1955
      %v2036 = vunpack.c.l.b16 %v1965
      %v2037 = vunpack.c.l.b16 %v1979
      %v2038 = vunpack.c.l.b16 %v1989
      %v2039 = vpack.c.b16 %v2008, %v2007
      %v2040 = vpack.c.b16 %v2010, %v2009
      %v2041 = vpack.c.b16 %v2012, %v2011
      %v2042 = vpack.c.b16 %v2014, %v2013
      %v2043 = vpack.c.b16 %v2016, %v2015
      %v2044 = vpack.c.b16 %v2018, %v2017
      %v2045 = vpack.c.b16 %v2020, %v2019
      %v2046 = vpack.c.b16 %v2022, %v2021
      %v2047 = vpack.c.b16 %v2024, %v2023
      %v2048 = vpack.c.b16 %v2026, %v2025
      %v2049 = vpack.c.b16 %v2028, %v2027
      %v2050 = vpack.c.b16 %v2030, %v2029
      %v2051 = vpack.c.b16 %v2032, %v2031
      %v2052 = vpack.c.b16 %v2034, %v2033
      %v2053 = vpack.c.b16 %v2036, %v2035
      %v2054 = vpack.c.b16 %v2038, %v2037
      %v2087 = vunpack.c.l.b16 %v1991
      %v2088 = vunpack.c.l.b16 %v1992
      %v2089 = vunpack.c.l.b16 %v1993
      %v2090 = vunpack.c.l.b16 %v1994
      %v2091 = vunpack.c.l.b16 %v1995
      %v2092 = vunpack.c.l.b16 %v1996
      %v2093 = vunpack.c.l.b16 %v1997
      %v2094 = vunpack.c.l.b16 %v1998
      %v2095 = vunpack.c.l.b16 %v1999
      %v2096 = vunpack.c.l.b16 %v2000
      %v2097 = vunpack.c.l.b16 %v2001
      %v2098 = vunpack.c.l.b16 %v2002
      %v2099 = vunpack.c.l.b16 %v2003
      %v2100 = vunpack.c.l.b16 %v2004
      %v2101 = vunpack.c.l.b16 %v2005
      %v2102 = vunpack.c.l.b16 %v2006
      %v2103 = vpack.c.b16 %v2088, %v2087
      %v2104 = vpack.c.b16 %v2090, %v2089
      %v2105 = vpack.c.b16 %v2092, %v2091
      %v2106 = vpack.c.b16 %v2094, %v2093
      %v2107 = vpack.c.b16 %v2096, %v2095
      %v2108 = vpack.c.b16 %v2098, %v2097
      %v2109 = vpack.c.b16 %v2100, %v2099
      %v2110 = vpack.c.b16 %v2102, %v2101
      %2119 = vmatpush.bf16.msra.mxu0 %v2110
      %2120 = vmatpush.bf16.msra.mxu0 %v2109
      %2121 = vmatpush.bf16.msra.mxu0 %v2108
      %2122 = vmatpush.bf16.msra.mxu0 %v2107
      %2123 = vmatpush.bf16.msra.mxu0 %v2106
      %2124 = vmatpush.bf16.msra.mxu0 %v2105
      %2125 = vmatpush.bf16.msra.mxu0 %v2104
      %2126 = vmatpush.bf16.msra.mxu0 %v2103
      %2127 = vmatmul.bf16.gmra.mxu0 %v2039
      %v2128 = vpop.f32.mrf.mxu0
      %v2129 = vadd.f32 0.0, %v2128
      %v2130 = vpop.f32.mrf.mxu0
      %v2131 = vadd.f32 0.0, %v2130
      %2132 = vmatmul.bf16.gmra.mxu0 %v2040
      %v2133 = vpop.f32.mrf.mxu0
      %v2134 = vadd.f32 0.0, %v2133
      %v2135 = vpop.f32.mrf.mxu0
      %v2136 = vadd.f32 0.0, %v2135
      %2137 = vmatmul.bf16.gmra.mxu0 %v2041
      %v2138 = vpop.f32.mrf.mxu0
      %v2139 = vadd.f32 0.0, %v2138
      %v2140 = vpop.f32.mrf.mxu0
      %v2141 = vadd.f32 0.0, %v2140
      %2142 = vmatmul.bf16.gmra.mxu0 %v2042
      %v2143 = vpop.f32.mrf.mxu0
      %v2144 = vadd.f32 0.0, %v2143
      %v2145 = vpop.f32.mrf.mxu0
      %v2146 = vadd.f32 0.0, %v2145
      %2147 = vmatmul.bf16.gmra.mxu0 %v2043
      %v2148 = vpop.f32.mrf.mxu0
      %v2149 = vadd.f32 0.0, %v2148
      %v2150 = vpop.f32.mrf.mxu0
      %v2151 = vadd.f32 0.0, %v2150
      %2152 = vmatmul.bf16.gmra.mxu0 %v2044
      %v2153 = vpop.f32.mrf.mxu0
      %v2154 = vadd.f32 0.0, %v2153
      %v2155 = vpop.f32.mrf.mxu0
      %v2156 = vadd.f32 0.0, %v2155
      %2157 = vmatmul.bf16.gmra.mxu0 %v2045
      %v2158 = vpop.f32.mrf.mxu0
      %v2159 = vadd.f32 0.0, %v2158
      %v2160 = vpop.f32.mrf.mxu0
      %v2161 = vadd.f32 0.0, %v2160
      %2162 = vmatmul.bf16.gmra.mxu0 %v2046
      %v2163 = vpop.f32.mrf.mxu0
      %v2164 = vadd.f32 0.0, %v2163
      %v2165 = vpop.f32.mrf.mxu0
      %v2166 = vadd.f32 0.0, %v2165
      %2167 = vmatmul.bf16.gmra.mxu0 %v2047
      %v2168 = vpop.f32.mrf.mxu0
      %v2169 = vadd.f32 0.0, %v2168
      %v2170 = vpop.f32.mrf.mxu0
      %v2171 = vadd.f32 0.0, %v2170
      %2172 = vmatmul.bf16.gmra.mxu0 %v2048
      %v2173 = vpop.f32.mrf.mxu0
      %v2174 = vadd.f32 0.0, %v2173
      %v2175 = vpop.f32.mrf.mxu0
      %v2176 = vadd.f32 0.0, %v2175
      %2177 = vmatmul.bf16.gmra.mxu0 %v2049
      %v2178 = vpop.f32.mrf.mxu0
      %v2179 = vadd.f32 0.0, %v2178
      %v2180 = vpop.f32.mrf.mxu0
      %v2181 = vadd.f32 0.0, %v2180
      %2182 = vmatmul.bf16.gmra.mxu0 %v2050
      %v2183 = vpop.f32.mrf.mxu0
      %v2184 = vadd.f32 0.0, %v2183
      %v2185 = vpop.f32.mrf.mxu0
      %v2186 = vadd.f32 0.0, %v2185
      %2187 = vmatmul.bf16.gmra.mxu0 %v2051
      %v2188 = vpop.f32.mrf.mxu0
      %v2189 = vadd.f32 0.0, %v2188
      %v2190 = vpop.f32.mrf.mxu0
      %v2191 = vadd.f32 0.0, %v2190
      %2192 = vmatmul.bf16.gmra.mxu0 %v2052
      %v2193 = vpop.f32.mrf.mxu0
      %v2194 = vadd.f32 0.0, %v2193
      %v2195 = vpop.f32.mrf.mxu0
      %v2196 = vadd.f32 0.0, %v2195
      %2197 = vmatmul.bf16.gmra.mxu0 %v2053
      %v2198 = vpop.f32.mrf.mxu0
      %v2199 = vadd.f32 0.0, %v2198
      %v2200 = vpop.f32.mrf.mxu0
      %v2201 = vadd.f32 0.0, %v2200
      %2202 = vmatmul.bf16.gmra.mxu0 %v2054
      %v2203 = vpop.f32.mrf.mxu0
      %v2204 = vadd.f32 0.0, %v2203
      %v2205 = vpop.f32.mrf.mxu0
      %v2206 = vadd.f32 0.0, %v2205
      %2207 = vdwg.mxu0
      %v2208 = vadd.f32 %v1476, %v2129
      %v2209 = vadd.f32 %v1478, %v2131
      %v2210 = vadd.f32 %v1481, %v2134
      %v2211 = vadd.f32 %v1483, %v2136
      %v2212 = vadd.f32 %v1486, %v2139
      %v2213 = vadd.f32 %v1488, %v2141
      %v2214 = vadd.f32 %v1491, %v2144
      %v2215 = vadd.f32 %v1493, %v2146
      %v2216 = vadd.f32 %v1496, %v2149
      %v2217 = vadd.f32 %v1498, %v2151
      %v2218 = vadd.f32 %v1501, %v2154
      %v2219 = vadd.f32 %v1503, %v2156
      %v2220 = vadd.f32 %v1506, %v2159
      %v2221 = vadd.f32 %v1508, %v2161
      %v2222 = vadd.f32 %v1511, %v2164
      %v2223 = vadd.f32 %v1513, %v2166
      %v2224 = vadd.f32 %v1516, %v2169
      %v2225 = vadd.f32 %v1518, %v2171
      %v2226 = vadd.f32 %v1521, %v2174
      %v2227 = vadd.f32 %v1523, %v2176
      %v2228 = vadd.f32 %v1526, %v2179
      %v2229 = vadd.f32 %v1528, %v2181
      %v2230 = vadd.f32 %v1531, %v2184
      %v2231 = vadd.f32 %v1533, %v2186
      %v2232 = vadd.f32 %v1536, %v2189
      %v2233 = vadd.f32 %v1538, %v2191
      %v2234 = vadd.f32 %v1541, %v2194
      %v2235 = vadd.f32 %v1543, %v2196
      %v2236 = vadd.f32 %v1546, %v2199
      %v2237 = vadd.f32 %v1548, %v2201
      %v2238 = vadd.f32 %v1551, %v2204
      %v2239 = vadd.f32 %v1553, %v2206
      %v2240 = vld [vmem:[%s239 + $0x4] sm:$0x8]
      %v2241 = vld [vmem:[%s239 + $0x8] sm:$0xf]
      %v2242 = vld [vmem:[%s239 + $0xc] sm:$0xf]
      %v2243 = vld [vmem:[%s239 + $0x1c] sm:$0x8]
      %v2244 = vld [vmem:[%s239 + $0x20] sm:$0xf]
      %v2245 = vld [vmem:[%s239 + $0x24] sm:$0xf]
      %v2246 = vld [vmem:[%s239 + $0x34] sm:$0x8]
      %v2247 = vld [vmem:[%s239 + $0x38] sm:$0xf]
      %v2248 = vld [vmem:[%s239 + $0x3c] sm:$0xf]
      %v2249 = vld [vmem:[%s239 + $0x4c] sm:$0x8]
      %v2250 = vld [vmem:[%s239 + $0x50] sm:$0xf]
      %v2251 = vld [vmem:[%s239 + $0x54] sm:$0xf]
      %v2252 = vld [vmem:[%s239 + $0x64] sm:$0x8]
      %v2253 = vld [vmem:[%s239 + $0x68] sm:$0xf]
      %v2254 = vld [vmem:[%s239 + $0x6c] sm:$0xf]
      %v2255 = vld [vmem:[%s239 + $0x7c] sm:$0x8]
      %v2256 = vld [vmem:[%s239 + $0x80] sm:$0xf]
      %v2257 = vld [vmem:[%s239 + $0x84] sm:$0xf]
      %v2258 = vld [vmem:[%s239 + $0x94] sm:$0x8]
      %v2259 = vld [vmem:[%s239 + $0x98] sm:$0xf]
      %v2260 = vld [vmem:[%s239 + $0x9c] sm:$0xf]
      %v2261 = vld [vmem:[%s239 + $0xac] sm:$0x8]
      %v2262 = vld [vmem:[%s239 + $0xb0] sm:$0xf]
      %v2263 = vld [vmem:[%s239 + $0xb4] sm:$0xf]
      %v2264 = vld [vmem:[%s239 + $0xc4] sm:$0x8]
      %v2265 = vld [vmem:[%s239 + $0xc8] sm:$0xf]
      %v2266 = vld [vmem:[%s239 + $0xcc] sm:$0xf]
      %v2267 = vld [vmem:[%s239 + $0xdc] sm:$0x8]
      %v2268 = vld [vmem:[%s239 + $0xe0] sm:$0xf]
      %v2269 = vld [vmem:[%s239 + $0xe4] sm:$0xf]
      %v2270 = vld [vmem:[%s239 + $0xf4] sm:$0x8]
      %v2271 = vld [vmem:[%s239 + $0xf8] sm:$0xf]
      %v2272 = vld [vmem:[%s239 + $0xfc] sm:$0xf]
      %v2273 = vld [vmem:[%s239 + $0x10c] sm:$0x8]
      %v2274 = vld [vmem:[%s239 + $0x110] sm:$0xf]
      %v2275 = vld [vmem:[%s239 + $0x114] sm:$0xf]
      %v2276 = vld [vmem:[%s239 + $0x124] sm:$0x8]
      %v2277 = vld [vmem:[%s239 + $0x128] sm:$0xf]
      %v2278 = vld [vmem:[%s239 + $0x12c] sm:$0xf]
      %v2279 = vld [vmem:[%s239 + $0x13c] sm:$0x8]
      %v2280 = vld [vmem:[%s239 + $0x140] sm:$0xf]
      %v2281 = vld [vmem:[%s239 + $0x144] sm:$0xf]
      %v2282 = vld [vmem:[%s239 + $0x154] sm:$0x8]
      %v2283 = vld [vmem:[%s239 + $0x158] sm:$0xf]
      %v2284 = vld [vmem:[%s239 + $0x15c] sm:$0xf]
      %v2285 = vld [vmem:[%s239 + $0x16c] sm:$0x8]
      %v2286 = vld [vmem:[%s239 + $0x170] sm:$0xf]
      %v2287 = vld [vmem:[%s239 + $0x174] sm:$0xf]
      %v2289 = vshrl.u32 %v2240, 16
      %v2291 = vrot.slane %v2289, 7
      %v2292 = vrot.slane %v2291, 4
      %v2294 = vshrl.u32 %v2241, 16
      %v2296 = vrot.slane %v2294, 7
      %v2297 = vshll.u32 %v2241, 16
      %v2299 = vor.u32 %v2296, %v2297
      %v2300 = vsel %vm735, %v2292, %v2299
      %v2301 = vrot.slane %v2296, 4
      %v2303 = vshrl.u32 %v2242, 16
      %v2305 = vrot.slane %v2303, 7
      %v2306 = vshll.u32 %v2242, 16
      %v2308 = vor.u32 %v2305, %v2306
      %v2309 = vsel %vm735, %v2301, %v2308
      %v2311 = vshrl.u32 %v2243, 16
      %v2313 = vrot.slane %v2311, 7
      %v2314 = vrot.slane %v2313, 4
      %v2316 = vshrl.u32 %v2244, 16
      %v2318 = vrot.slane %v2316, 7
      %v2319 = vshll.u32 %v2244, 16
      %v2321 = vor.u32 %v2318, %v2319
      %v2322 = vsel %vm735, %v2314, %v2321
      %v2323 = vrot.slane %v2318, 4
      %v2325 = vshrl.u32 %v2245, 16
      %v2327 = vrot.slane %v2325, 7
      %v2328 = vshll.u32 %v2245, 16
      %v2330 = vor.u32 %v2327, %v2328
      %v2331 = vsel %vm735, %v2323, %v2330
      %v2333 = vshrl.u32 %v2246, 16
      %v2335 = vrot.slane %v2333, 7
      %v2336 = vrot.slane %v2335, 4
      %v2338 = vshrl.u32 %v2247, 16
      %v2340 = vrot.slane %v2338, 7
      %v2341 = vshll.u32 %v2247, 16
      %v2343 = vor.u32 %v2340, %v2341
      %v2344 = vsel %vm735, %v2336, %v2343
      %v2345 = vrot.slane %v2340, 4
      %v2347 = vshrl.u32 %v2248, 16
      %v2349 = vrot.slane %v2347, 7
      %v2350 = vshll.u32 %v2248, 16
      %v2352 = vor.u32 %v2349, %v2350
      %v2353 = vsel %vm735, %v2345, %v2352
      %v2355 = vshrl.u32 %v2249, 16
      %v2357 = vrot.slane %v2355, 7
      %v2358 = vrot.slane %v2357, 4
      %v2360 = vshrl.u32 %v2250, 16
      %v2362 = vrot.slane %v2360, 7
      %v2363 = vshll.u32 %v2250, 16
      %v2365 = vor.u32 %v2362, %v2363
      %v2366 = vsel %vm735, %v2358, %v2365
      %v2367 = vrot.slane %v2362, 4
      %v2369 = vshrl.u32 %v2251, 16
      %v2371 = vrot.slane %v2369, 7
      %v2372 = vshll.u32 %v2251, 16
      %v2374 = vor.u32 %v2371, %v2372
      %v2375 = vsel %vm735, %v2367, %v2374
      %v2377 = vshrl.u32 %v2252, 16
      %v2379 = vrot.slane %v2377, 7
      %v2380 = vrot.slane %v2379, 4
      %v2382 = vshrl.u32 %v2253, 16
      %v2384 = vrot.slane %v2382, 7
      %v2385 = vshll.u32 %v2253, 16
      %v2387 = vor.u32 %v2384, %v2385
      %v2388 = vsel %vm735, %v2380, %v2387
      %v2389 = vrot.slane %v2384, 4
      %v2391 = vshrl.u32 %v2254, 16
      %v2393 = vrot.slane %v2391, 7
      %v2394 = vshll.u32 %v2254, 16
      %v2396 = vor.u32 %v2393, %v2394
      %v2397 = vsel %vm735, %v2389, %v2396
      %v2399 = vshrl.u32 %v2255, 16
      %v2401 = vrot.slane %v2399, 7
      %v2402 = vrot.slane %v2401, 4
      %v2404 = vshrl.u32 %v2256, 16
      %v2406 = vrot.slane %v2404, 7
      %v2407 = vshll.u32 %v2256, 16
      %v2409 = vor.u32 %v2406, %v2407
      %v2410 = vsel %vm735, %v2402, %v2409
      %v2411 = vrot.slane %v2406, 4
      %v2413 = vshrl.u32 %v2257, 16
      %v2415 = vrot.slane %v2413, 7
      %v2416 = vshll.u32 %v2257, 16
      %v2418 = vor.u32 %v2415, %v2416
      %v2419 = vsel %vm735, %v2411, %v2418
      %v2421 = vshrl.u32 %v2258, 16
      %v2423 = vrot.slane %v2421, 7
      %v2424 = vrot.slane %v2423, 4
      %v2426 = vshrl.u32 %v2259, 16
      %v2428 = vrot.slane %v2426, 7
      %v2429 = vshll.u32 %v2259, 16
      %v2431 = vor.u32 %v2428, %v2429
      %v2432 = vsel %vm735, %v2424, %v2431
      %v2433 = vrot.slane %v2428, 4
      %v2435 = vshrl.u32 %v2260, 16
      %v2437 = vrot.slane %v2435, 7
      %v2438 = vshll.u32 %v2260, 16
      %v2440 = vor.u32 %v2437, %v2438
      %v2441 = vsel %vm735, %v2433, %v2440
      %v2443 = vshrl.u32 %v2261, 16
      %v2445 = vrot.slane %v2443, 7
      %v2446 = vrot.slane %v2445, 4
      %v2448 = vshrl.u32 %v2262, 16
      %v2450 = vrot.slane %v2448, 7
      %v2451 = vshll.u32 %v2262, 16
      %v2453 = vor.u32 %v2450, %v2451
      %v2454 = vsel %vm735, %v2446, %v2453
      %v2455 = vrot.slane %v2450, 4
      %v2457 = vshrl.u32 %v2263, 16
      %v2459 = vrot.slane %v2457, 7
      %v2460 = vshll.u32 %v2263, 16
      %v2462 = vor.u32 %v2459, %v2460
      %v2463 = vsel %vm735, %v2455, %v2462
      %v2465 = vshrl.u32 %v2264, 16
      %v2467 = vrot.slane %v2465, 7
      %v2468 = vrot.slane %v2467, 4
      %v2470 = vshrl.u32 %v2265, 16
      %v2472 = vrot.slane %v2470, 7
      %v2473 = vshll.u32 %v2265, 16
      %v2475 = vor.u32 %v2472, %v2473
      %v2476 = vsel %vm735, %v2468, %v2475
      %v2477 = vrot.slane %v2472, 4
      %v2479 = vshrl.u32 %v2266, 16
      %v2481 = vrot.slane %v2479, 7
      %v2482 = vshll.u32 %v2266, 16
      %v2484 = vor.u32 %v2481, %v2482
      %v2485 = vsel %vm735, %v2477, %v2484
      %v2487 = vshrl.u32 %v2267, 16
      %v2489 = vrot.slane %v2487, 7
      %v2490 = vrot.slane %v2489, 4
      %v2492 = vshrl.u32 %v2268, 16
      %v2494 = vrot.slane %v2492, 7
      %v2495 = vshll.u32 %v2268, 16
      %v2497 = vor.u32 %v2494, %v2495
      %v2498 = vsel %vm735, %v2490, %v2497
      %v2499 = vrot.slane %v2494, 4
      %v2501 = vshrl.u32 %v2269, 16
      %v2503 = vrot.slane %v2501, 7
      %v2504 = vshll.u32 %v2269, 16
      %v2506 = vor.u32 %v2503, %v2504
      %v2507 = vsel %vm735, %v2499, %v2506
      %v2509 = vshrl.u32 %v2270, 16
      %v2511 = vrot.slane %v2509, 7
      %v2512 = vrot.slane %v2511, 4
      %v2514 = vshrl.u32 %v2271, 16
      %v2516 = vrot.slane %v2514, 7
      %v2517 = vshll.u32 %v2271, 16
      %v2519 = vor.u32 %v2516, %v2517
      %v2520 = vsel %vm735, %v2512, %v2519
      %v2521 = vrot.slane %v2516, 4
      %v2523 = vshrl.u32 %v2272, 16
      %v2525 = vrot.slane %v2523, 7
      %v2526 = vshll.u32 %v2272, 16
      %v2528 = vor.u32 %v2525, %v2526
      %v2529 = vsel %vm735, %v2521, %v2528
      %v2531 = vshrl.u32 %v2273, 16
      %v2533 = vrot.slane %v2531, 7
      %v2534 = vrot.slane %v2533, 4
      %v2536 = vshrl.u32 %v2274, 16
      %v2538 = vrot.slane %v2536, 7
      %v2539 = vshll.u32 %v2274, 16
      %v2541 = vor.u32 %v2538, %v2539
      %v2542 = vsel %vm735, %v2534, %v2541
      %v2543 = vrot.slane %v2538, 4
      %v2545 = vshrl.u32 %v2275, 16
      %v2547 = vrot.slane %v2545, 7
      %v2548 = vshll.u32 %v2275, 16
      %v2550 = vor.u32 %v2547, %v2548
      %v2551 = vsel %vm735, %v2543, %v2550
      %v2553 = vshrl.u32 %v2276, 16
      %v2555 = vrot.slane %v2553, 7
      %v2556 = vrot.slane %v2555, 4
      %v2558 = vshrl.u32 %v2277, 16
      %v2560 = vrot.slane %v2558, 7
      %v2561 = vshll.u32 %v2277, 16
      %v2563 = vor.u32 %v2560, %v2561
      %v2564 = vsel %vm735, %v2556, %v2563
      %v2565 = vrot.slane %v2560, 4
      %v2567 = vshrl.u32 %v2278, 16
      %v2569 = vrot.slane %v2567, 7
      %v2570 = vshll.u32 %v2278, 16
      %v2572 = vor.u32 %v2569, %v2570
      %v2573 = vsel %vm735, %v2565, %v2572
      %v2575 = vshrl.u32 %v2279, 16
      %v2577 = vrot.slane %v2575, 7
      %v2578 = vrot.slane %v2577, 4
      %v2580 = vshrl.u32 %v2280, 16
      %v2582 = vrot.slane %v2580, 7
      %v2583 = vshll.u32 %v2280, 16
      %v2585 = vor.u32 %v2582, %v2583
      %v2586 = vsel %vm735, %v2578, %v2585
      %v2587 = vrot.slane %v2582, 4
      %v2589 = vshrl.u32 %v2281, 16
      %v2591 = vrot.slane %v2589, 7
      %v2592 = vshll.u32 %v2281, 16
      %v2594 = vor.u32 %v2591, %v2592
      %v2595 = vsel %vm735, %v2587, %v2594
      %v2597 = vshrl.u32 %v2282, 16
      %v2599 = vrot.slane %v2597, 7
      %v2600 = vrot.slane %v2599, 4
      %v2602 = vshrl.u32 %v2283, 16
      %v2604 = vrot.slane %v2602, 7
      %v2605 = vshll.u32 %v2283, 16
      %v2607 = vor.u32 %v2604, %v2605
      %v2608 = vsel %vm735, %v2600, %v2607
      %v2609 = vrot.slane %v2604, 4
      %v2611 = vshrl.u32 %v2284, 16
      %v2613 = vrot.slane %v2611, 7
      %v2614 = vshll.u32 %v2284, 16
      %v2616 = vor.u32 %v2613, %v2614
      %v2617 = vsel %vm735, %v2609, %v2616
      %v2619 = vshrl.u32 %v2285, 16
      %v2621 = vrot.slane %v2619, 7
      %v2622 = vrot.slane %v2621, 4
      %v2624 = vshrl.u32 %v2286, 16
      %v2626 = vrot.slane %v2624, 7
      %v2627 = vshll.u32 %v2286, 16
      %v2629 = vor.u32 %v2626, %v2627
      %v2630 = vsel %vm735, %v2622, %v2629
      %v2631 = vrot.slane %v2626, 4
      %v2633 = vshrl.u32 %v2287, 16
      %v2635 = vrot.slane %v2633, 7
      %v2636 = vshll.u32 %v2287, 16
      %v2638 = vor.u32 %v2635, %v2636
      %v2639 = vsel %vm735, %v2631, %v2638
      %s2640 = scalar_lea.vmem %s3, 192
      %v2641 = vld [vmem:[%s2640] sm:$0xf]
      %v2642 = vld [vmem:[%s2640 + $0x4] sm:$0xf]
      %v2643 = vld [vmem:[%s2640 + $0x8] sm:$0xf]
      %v2644 = vld [vmem:[%s2640 + $0xc] sm:$0xf]
      %v2645 = vld [vmem:[%s2640 + $0x10] sm:$0xf]
      %v2646 = vld [vmem:[%s2640 + $0x14] sm:$0xf]
      %v2647 = vld [vmem:[%s2640 + $0x18] sm:$0xf]
      %v2648 = vld [vmem:[%s2640 + $0x1c] sm:$0xf]
      %v2649 = vld [vmem:[%s2640 + $0x20] sm:$0xf]
      %v2650 = vld [vmem:[%s2640 + $0x24] sm:$0xf]
      %v2651 = vld [vmem:[%s2640 + $0x28] sm:$0xf]
      %v2652 = vld [vmem:[%s2640 + $0x2c] sm:$0xf]
      %v2653 = vld [vmem:[%s2640 + $0x30] sm:$0xf]
      %v2654 = vld [vmem:[%s2640 + $0x34] sm:$0xf]
      %v2655 = vld [vmem:[%s2640 + $0x38] sm:$0xf]
      %v2656 = vld [vmem:[%s2640 + $0x3c] sm:$0xf]
      %v2657 = vunpack.c.l.b16 %v2300
      %v2658 = vunpack.c.l.b16 %v2309
      %v2659 = vunpack.c.l.b16 %v2322
      %v2660 = vunpack.c.l.b16 %v2331
      %v2661 = vunpack.c.l.b16 %v2344
      %v2662 = vunpack.c.l.b16 %v2353
      %v2663 = vunpack.c.l.b16 %v2366
      %v2664 = vunpack.c.l.b16 %v2375
      %v2665 = vunpack.c.l.b16 %v2388
      %v2666 = vunpack.c.l.b16 %v2397
      %v2667 = vunpack.c.l.b16 %v2410
      %v2668 = vunpack.c.l.b16 %v2419
      %v2669 = vunpack.c.l.b16 %v2432
      %v2670 = vunpack.c.l.b16 %v2441
      %v2671 = vunpack.c.l.b16 %v2454
      %v2672 = vunpack.c.l.b16 %v2463
      %v2673 = vunpack.c.l.b16 %v2476
      %v2674 = vunpack.c.l.b16 %v2485
      %v2675 = vunpack.c.l.b16 %v2498
      %v2676 = vunpack.c.l.b16 %v2507
      %v2677 = vunpack.c.l.b16 %v2520
      %v2678 = vunpack.c.l.b16 %v2529
      %v2679 = vunpack.c.l.b16 %v2542
      %v2680 = vunpack.c.l.b16 %v2551
      %v2681 = vunpack.c.l.b16 %v2564
      %v2682 = vunpack.c.l.b16 %v2573
      %v2683 = vunpack.c.l.b16 %v2586
      %v2684 = vunpack.c.l.b16 %v2595
      %v2685 = vunpack.c.l.b16 %v2608
      %v2686 = vunpack.c.l.b16 %v2617
      %v2687 = vunpack.c.l.b16 %v2630
      %v2688 = vunpack.c.l.b16 %v2639
      %v2689 = vpack.c.b16 %v2658, %v2657
      %v2690 = vpack.c.b16 %v2660, %v2659
      %v2691 = vpack.c.b16 %v2662, %v2661
      %v2692 = vpack.c.b16 %v2664, %v2663
      %v2693 = vpack.c.b16 %v2666, %v2665
      %v2694 = vpack.c.b16 %v2668, %v2667
      %v2695 = vpack.c.b16 %v2670, %v2669
      %v2696 = vpack.c.b16 %v2672, %v2671
      %v2697 = vpack.c.b16 %v2674, %v2673
      %v2698 = vpack.c.b16 %v2676, %v2675
      %v2699 = vpack.c.b16 %v2678, %v2677
      %v2700 = vpack.c.b16 %v2680, %v2679
      %v2701 = vpack.c.b16 %v2682, %v2681
      %v2702 = vpack.c.b16 %v2684, %v2683
      %v2703 = vpack.c.b16 %v2686, %v2685
      %v2704 = vpack.c.b16 %v2688, %v2687
      %v2737 = vunpack.c.l.b16 %v2641
      %v2738 = vunpack.c.l.b16 %v2642
      %v2739 = vunpack.c.l.b16 %v2643
      %v2740 = vunpack.c.l.b16 %v2644
      %v2741 = vunpack.c.l.b16 %v2645
      %v2742 = vunpack.c.l.b16 %v2646
      %v2743 = vunpack.c.l.b16 %v2647
      %v2744 = vunpack.c.l.b16 %v2648
      %v2745 = vunpack.c.l.b16 %v2649
      %v2746 = vunpack.c.l.b16 %v2650
      %v2747 = vunpack.c.l.b16 %v2651
      %v2748 = vunpack.c.l.b16 %v2652
      %v2749 = vunpack.c.l.b16 %v2653
      %v2750 = vunpack.c.l.b16 %v2654
      %v2751 = vunpack.c.l.b16 %v2655
      %v2752 = vunpack.c.l.b16 %v2656
      %v2753 = vpack.c.b16 %v2738, %v2737
      %v2754 = vpack.c.b16 %v2740, %v2739
      %v2755 = vpack.c.b16 %v2742, %v2741
      %v2756 = vpack.c.b16 %v2744, %v2743
      %v2757 = vpack.c.b16 %v2746, %v2745
      %v2758 = vpack.c.b16 %v2748, %v2747
      %v2759 = vpack.c.b16 %v2750, %v2749
      %v2760 = vpack.c.b16 %v2752, %v2751
      %2769 = vmatpush.bf16.msra.mxu0 %v2760
      %2770 = vmatpush.bf16.msra.mxu0 %v2759
      %2771 = vmatpush.bf16.msra.mxu0 %v2758
      %2772 = vmatpush.bf16.msra.mxu0 %v2757
      %2773 = vmatpush.bf16.msra.mxu0 %v2756
      %2774 = vmatpush.bf16.msra.mxu0 %v2755
      %2775 = vmatpush.bf16.msra.mxu0 %v2754
      %2776 = vmatpush.bf16.msra.mxu0 %v2753
      %2777 = vmatmul.bf16.gmra.mxu0 %v2689
      %v2778 = vpop.f32.mrf.mxu0
      %v2779 = vadd.f32 0.0, %v2778
      %v2780 = vpop.f32.mrf.mxu0
      %v2781 = vadd.f32 0.0, %v2780
      %2782 = vmatmul.bf16.gmra.mxu0 %v2690
      %v2783 = vpop.f32.mrf.mxu0
      %v2784 = vadd.f32 0.0, %v2783
      %v2785 = vpop.f32.mrf.mxu0
      %v2786 = vadd.f32 0.0, %v2785
      %2787 = vmatmul.bf16.gmra.mxu0 %v2691
      %v2788 = vpop.f32.mrf.mxu0
      %v2789 = vadd.f32 0.0, %v2788
      %v2790 = vpop.f32.mrf.mxu0
      %v2791 = vadd.f32 0.0, %v2790
      %2792 = vmatmul.bf16.gmra.mxu0 %v2692
      %v2793 = vpop.f32.mrf.mxu0
      %v2794 = vadd.f32 0.0, %v2793
      %v2795 = vpop.f32.mrf.mxu0
      %v2796 = vadd.f32 0.0, %v2795
      %2797 = vmatmul.bf16.gmra.mxu0 %v2693
      %v2798 = vpop.f32.mrf.mxu0
      %v2799 = vadd.f32 0.0, %v2798
      %v2800 = vpop.f32.mrf.mxu0
      %v2801 = vadd.f32 0.0, %v2800
      %2802 = vmatmul.bf16.gmra.mxu0 %v2694
      %v2803 = vpop.f32.mrf.mxu0
      %v2804 = vadd.f32 0.0, %v2803
      %v2805 = vpop.f32.mrf.mxu0
      %v2806 = vadd.f32 0.0, %v2805
      %2807 = vmatmul.bf16.gmra.mxu0 %v2695
      %v2808 = vpop.f32.mrf.mxu0
      %v2809 = vadd.f32 0.0, %v2808
      %v2810 = vpop.f32.mrf.mxu0
      %v2811 = vadd.f32 0.0, %v2810
      %2812 = vmatmul.bf16.gmra.mxu0 %v2696
      %v2813 = vpop.f32.mrf.mxu0
      %v2814 = vadd.f32 0.0, %v2813
      %v2815 = vpop.f32.mrf.mxu0
      %v2816 = vadd.f32 0.0, %v2815
      %2817 = vmatmul.bf16.gmra.mxu0 %v2697
      %v2818 = vpop.f32.mrf.mxu0
      %v2819 = vadd.f32 0.0, %v2818
      %v2820 = vpop.f32.mrf.mxu0
      %v2821 = vadd.f32 0.0, %v2820
      %2822 = vmatmul.bf16.gmra.mxu0 %v2698
      %v2823 = vpop.f32.mrf.mxu0
      %v2824 = vadd.f32 0.0, %v2823
      %v2825 = vpop.f32.mrf.mxu0
      %v2826 = vadd.f32 0.0, %v2825
      %2827 = vmatmul.bf16.gmra.mxu0 %v2699
      %v2828 = vpop.f32.mrf.mxu0
      %v2829 = vadd.f32 0.0, %v2828
      %v2830 = vpop.f32.mrf.mxu0
      %v2831 = vadd.f32 0.0, %v2830
      %2832 = vmatmul.bf16.gmra.mxu0 %v2700
      %v2833 = vpop.f32.mrf.mxu0
      %v2834 = vadd.f32 0.0, %v2833
      %v2835 = vpop.f32.mrf.mxu0
      %v2836 = vadd.f32 0.0, %v2835
      %2837 = vmatmul.bf16.gmra.mxu0 %v2701
      %v2838 = vpop.f32.mrf.mxu0
      %v2839 = vadd.f32 0.0, %v2838
      %v2840 = vpop.f32.mrf.mxu0
      %v2841 = vadd.f32 0.0, %v2840
      %2842 = vmatmul.bf16.gmra.mxu0 %v2702
      %v2843 = vpop.f32.mrf.mxu0
      %v2844 = vadd.f32 0.0, %v2843
      %v2845 = vpop.f32.mrf.mxu0
      %v2846 = vadd.f32 0.0, %v2845
      %2847 = vmatmul.bf16.gmra.mxu0 %v2703
      %v2848 = vpop.f32.mrf.mxu0
      %v2849 = vadd.f32 0.0, %v2848
      %v2850 = vpop.f32.mrf.mxu0
      %v2851 = vadd.f32 0.0, %v2850
      %2852 = vmatmul.bf16.gmra.mxu0 %v2704
      %v2853 = vpop.f32.mrf.mxu0
      %v2854 = vadd.f32 0.0, %v2853
      %v2855 = vpop.f32.mrf.mxu0
      %v2856 = vadd.f32 0.0, %v2855
      %2857 = vdwg.mxu0
      %v2858 = vadd.f32 %v2208, %v2779
      %v2859 = vadd.f32 %v2209, %v2781
      %v2860 = vadd.f32 %v2210, %v2784
      %v2861 = vadd.f32 %v2211, %v2786
      %v2862 = vadd.f32 %v2212, %v2789
      %v2863 = vadd.f32 %v2213, %v2791
      %v2864 = vadd.f32 %v2214, %v2794
      %v2865 = vadd.f32 %v2215, %v2796
      %v2866 = vadd.f32 %v2216, %v2799
      %v2867 = vadd.f32 %v2217, %v2801
      %v2868 = vadd.f32 %v2218, %v2804
      %v2869 = vadd.f32 %v2219, %v2806
      %v2870 = vadd.f32 %v2220, %v2809
      %v2871 = vadd.f32 %v2221, %v2811
      %v2872 = vadd.f32 %v2222, %v2814
      %v2873 = vadd.f32 %v2223, %v2816
      %v2874 = vadd.f32 %v2224, %v2819
      %v2875 = vadd.f32 %v2225, %v2821
      %v2876 = vadd.f32 %v2226, %v2824
      %v2877 = vadd.f32 %v2227, %v2826
      %v2878 = vadd.f32 %v2228, %v2829
      %v2879 = vadd.f32 %v2229, %v2831
      %v2880 = vadd.f32 %v2230, %v2834
      %v2881 = vadd.f32 %v2231, %v2836
      %v2882 = vadd.f32 %v2232, %v2839
      %v2883 = vadd.f32 %v2233, %v2841
      %v2884 = vadd.f32 %v2234, %v2844
      %v2885 = vadd.f32 %v2235, %v2846
      %v2886 = vadd.f32 %v2236, %v2849
      %v2887 = vadd.f32 %v2237, %v2851
      %v2888 = vadd.f32 %v2238, %v2854
      %v2889 = vadd.f32 %v2239, %v2856
      %s2890 = scalar_lea.vmem %s3, 256
      %v2891 = vld [vmem:[%s2890] sm:$0xf]
      %v2892 = vld [vmem:[%s2890 + $0x4] sm:$0xf]
      %v2893 = vld [vmem:[%s2890 + $0x8] sm:$0xf]
      %v2894 = vld [vmem:[%s2890 + $0xc] sm:$0xf]
      %v2895 = vld [vmem:[%s2890 + $0x10] sm:$0xf]
      %v2896 = vld [vmem:[%s2890 + $0x14] sm:$0xf]
      %v2897 = vld [vmem:[%s2890 + $0x18] sm:$0xf]
      %v2898 = vld [vmem:[%s2890 + $0x1c] sm:$0xf]
      %v2899 = vld [vmem:[%s2890 + $0x20] sm:$0xf]
      %v2900 = vld [vmem:[%s2890 + $0x24] sm:$0xf]
      %v2901 = vld [vmem:[%s2890 + $0x28] sm:$0xf]
      %v2902 = vld [vmem:[%s2890 + $0x2c] sm:$0xf]
      %v2903 = vld [vmem:[%s2890 + $0x30] sm:$0xf]
      %v2904 = vld [vmem:[%s2890 + $0x34] sm:$0xf]
      %v2905 = vld [vmem:[%s2890 + $0x38] sm:$0xf]
      %v2906 = vld [vmem:[%s2890 + $0x3c] sm:$0xf]
      %v2939 = vunpack.c.l.b16 %v2241
      %v2940 = vunpack.c.l.b16 %v2242
      %v2941 = vunpack.c.l.b16 %v2244
      %v2942 = vunpack.c.l.b16 %v2245
      %v2943 = vunpack.c.l.b16 %v2247
      %v2944 = vunpack.c.l.b16 %v2248
      %v2945 = vunpack.c.l.b16 %v2250
      %v2946 = vunpack.c.l.b16 %v2251
      %v2947 = vunpack.c.l.b16 %v2253
      %v2948 = vunpack.c.l.b16 %v2254
      %v2949 = vunpack.c.l.b16 %v2256
      %v2950 = vunpack.c.l.b16 %v2257
      %v2951 = vunpack.c.l.b16 %v2259
      %v2952 = vunpack.c.l.b16 %v2260
      %v2953 = vunpack.c.l.b16 %v2262
      %v2954 = vunpack.c.l.b16 %v2263
      %v2955 = vunpack.c.l.b16 %v2265
      %v2956 = vunpack.c.l.b16 %v2266
      %v2957 = vunpack.c.l.b16 %v2268
      %v2958 = vunpack.c.l.b16 %v2269
      %v2959 = vunpack.c.l.b16 %v2271
      %v2960 = vunpack.c.l.b16 %v2272
      %v2961 = vunpack.c.l.b16 %v2274
      %v2962 = vunpack.c.l.b16 %v2275
      %v2963 = vunpack.c.l.b16 %v2277
      %v2964 = vunpack.c.l.b16 %v2278
      %v2965 = vunpack.c.l.b16 %v2280
      %v2966 = vunpack.c.l.b16 %v2281
      %v2967 = vunpack.c.l.b16 %v2283
      %v2968 = vunpack.c.l.b16 %v2284
      %v2969 = vunpack.c.l.b16 %v2286
      %v2970 = vunpack.c.l.b16 %v2287
      %v2971 = vpack.c.b16 %v2940, %v2939
      %v2972 = vpack.c.b16 %v2942, %v2941
      %v2973 = vpack.c.b16 %v2944, %v2943
      %v2974 = vpack.c.b16 %v2946, %v2945
      %v2975 = vpack.c.b16 %v2948, %v2947
      %v2976 = vpack.c.b16 %v2950, %v2949
      %v2977 = vpack.c.b16 %v2952, %v2951
      %v2978 = vpack.c.b16 %v2954, %v2953
      %v2979 = vpack.c.b16 %v2956, %v2955
      %v2980 = vpack.c.b16 %v2958, %v2957
      %v2981 = vpack.c.b16 %v2960, %v2959
      %v2982 = vpack.c.b16 %v2962, %v2961
      %v2983 = vpack.c.b16 %v2964, %v2963
      %v2984 = vpack.c.b16 %v2966, %v2965
      %v2985 = vpack.c.b16 %v2968, %v2967
      %v2986 = vpack.c.b16 %v2970, %v2969
      %v3019 = vunpack.c.l.b16 %v2891
      %v3020 = vunpack.c.l.b16 %v2892
      %v3021 = vunpack.c.l.b16 %v2893
      %v3022 = vunpack.c.l.b16 %v2894
      %v3023 = vunpack.c.l.b16 %v2895
      %v3024 = vunpack.c.l.b16 %v2896
      %v3025 = vunpack.c.l.b16 %v2897
      %v3026 = vunpack.c.l.b16 %v2898
      %v3027 = vunpack.c.l.b16 %v2899
      %v3028 = vunpack.c.l.b16 %v2900
      %v3029 = vunpack.c.l.b16 %v2901
      %v3030 = vunpack.c.l.b16 %v2902
      %v3031 = vunpack.c.l.b16 %v2903
      %v3032 = vunpack.c.l.b16 %v2904
      %v3033 = vunpack.c.l.b16 %v2905
      %v3034 = vunpack.c.l.b16 %v2906
      %v3035 = vpack.c.b16 %v3020, %v3019
      %v3036 = vpack.c.b16 %v3022, %v3021
      %v3037 = vpack.c.b16 %v3024, %v3023
      %v3038 = vpack.c.b16 %v3026, %v3025
      %v3039 = vpack.c.b16 %v3028, %v3027
      %v3040 = vpack.c.b16 %v3030, %v3029
      %v3041 = vpack.c.b16 %v3032, %v3031
      %v3042 = vpack.c.b16 %v3034, %v3033
      %3051 = vmatpush.bf16.msra.mxu0 %v3042
      %3052 = vmatpush.bf16.msra.mxu0 %v3041
      %3053 = vmatpush.bf16.msra.mxu0 %v3040
      %3054 = vmatpush.bf16.msra.mxu0 %v3039
      %3055 = vmatpush.bf16.msra.mxu0 %v3038
      %3056 = vmatpush.bf16.msra.mxu0 %v3037
      %3057 = vmatpush.bf16.msra.mxu0 %v3036
      %3058 = vmatpush.bf16.msra.mxu0 %v3035
      %3059 = vmatmul.bf16.gmra.mxu0 %v2971
      %v3060 = vpop.f32.mrf.mxu0
      %v3061 = vadd.f32 0.0, %v3060
      %v3062 = vpop.f32.mrf.mxu0
      %v3063 = vadd.f32 0.0, %v3062
      %3064 = vmatmul.bf16.gmra.mxu0 %v2972
      %v3065 = vpop.f32.mrf.mxu0
      %v3066 = vadd.f32 0.0, %v3065
      %v3067 = vpop.f32.mrf.mxu0
      %v3068 = vadd.f32 0.0, %v3067
      %3069 = vmatmul.bf16.gmra.mxu0 %v2973
      %v3070 = vpop.f32.mrf.mxu0
      %v3071 = vadd.f32 0.0, %v3070
      %v3072 = vpop.f32.mrf.mxu0
      %v3073 = vadd.f32 0.0, %v3072
      %3074 = vmatmul.bf16.gmra.mxu0 %v2974
      %v3075 = vpop.f32.mrf.mxu0
      %v3076 = vadd.f32 0.0, %v3075
      %v3077 = vpop.f32.mrf.mxu0
      %v3078 = vadd.f32 0.0, %v3077
      %3079 = vmatmul.bf16.gmra.mxu0 %v2975
      %v3080 = vpop.f32.mrf.mxu0
      %v3081 = vadd.f32 0.0, %v3080
      %v3082 = vpop.f32.mrf.mxu0
      %v3083 = vadd.f32 0.0, %v3082
      %3084 = vmatmul.bf16.gmra.mxu0 %v2976
      %v3085 = vpop.f32.mrf.mxu0
      %v3086 = vadd.f32 0.0, %v3085
      %v3087 = vpop.f32.mrf.mxu0
      %v3088 = vadd.f32 0.0, %v3087
      %3089 = vmatmul.bf16.gmra.mxu0 %v2977
      %v3090 = vpop.f32.mrf.mxu0
      %v3091 = vadd.f32 0.0, %v3090
      %v3092 = vpop.f32.mrf.mxu0
      %v3093 = vadd.f32 0.0, %v3092
      %3094 = vmatmul.bf16.gmra.mxu0 %v2978
      %v3095 = vpop.f32.mrf.mxu0
      %v3096 = vadd.f32 0.0, %v3095
      %v3097 = vpop.f32.mrf.mxu0
      %v3098 = vadd.f32 0.0, %v3097
      %3099 = vmatmul.bf16.gmra.mxu0 %v2979
      %v3100 = vpop.f32.mrf.mxu0
      %v3101 = vadd.f32 0.0, %v3100
      %v3102 = vpop.f32.mrf.mxu0
      %v3103 = vadd.f32 0.0, %v3102
      %3104 = vmatmul.bf16.gmra.mxu0 %v2980
      %v3105 = vpop.f32.mrf.mxu0
      %v3106 = vadd.f32 0.0, %v3105
      %v3107 = vpop.f32.mrf.mxu0
      %v3108 = vadd.f32 0.0, %v3107
      %3109 = vmatmul.bf16.gmra.mxu0 %v2981
      %v3110 = vpop.f32.mrf.mxu0
      %v3111 = vadd.f32 0.0, %v3110
      %v3112 = vpop.f32.mrf.mxu0
      %v3113 = vadd.f32 0.0, %v3112
      %3114 = vmatmul.bf16.gmra.mxu0 %v2982
      %v3115 = vpop.f32.mrf.mxu0
      %v3116 = vadd.f32 0.0, %v3115
      %v3117 = vpop.f32.mrf.mxu0
      %v3118 = vadd.f32 0.0, %v3117
      %3119 = vmatmul.bf16.gmra.mxu0 %v2983
      %v3120 = vpop.f32.mrf.mxu0
      %v3121 = vadd.f32 0.0, %v3120
      %v3122 = vpop.f32.mrf.mxu0
      %v3123 = vadd.f32 0.0, %v3122
      %3124 = vmatmul.bf16.gmra.mxu0 %v2984
      %v3125 = vpop.f32.mrf.mxu0
      %v3126 = vadd.f32 0.0, %v3125
      %v3127 = vpop.f32.mrf.mxu0
      %v3128 = vadd.f32 0.0, %v3127
      %3129 = vmatmul.bf16.gmra.mxu0 %v2985
      %v3130 = vpop.f32.mrf.mxu0
      %v3131 = vadd.f32 0.0, %v3130
      %v3132 = vpop.f32.mrf.mxu0
      %v3133 = vadd.f32 0.0, %v3132
      %3134 = vmatmul.bf16.gmra.mxu0 %v2986
      %v3135 = vpop.f32.mrf.mxu0
      %v3136 = vadd.f32 0.0, %v3135
      %v3137 = vpop.f32.mrf.mxu0
      %v3138 = vadd.f32 0.0, %v3137
      %3139 = vdwg.mxu0
      %v3140 = vadd.f32 %v2858, %v3061
      %v3141 = vadd.f32 %v2859, %v3063
      %v3142 = vadd.f32 %v2860, %v3066
      %v3143 = vadd.f32 %v2861, %v3068
      %v3144 = vadd.f32 %v2862, %v3071
      %v3145 = vadd.f32 %v2863, %v3073
      %v3146 = vadd.f32 %v2864, %v3076
      %v3147 = vadd.f32 %v2865, %v3078
      %v3148 = vadd.f32 %v2866, %v3081
      %v3149 = vadd.f32 %v2867, %v3083
      %v3150 = vadd.f32 %v2868, %v3086
      %v3151 = vadd.f32 %v2869, %v3088
      %v3152 = vadd.f32 %v2870, %v3091
      %v3153 = vadd.f32 %v2871, %v3093
      %v3154 = vadd.f32 %v2872, %v3096
      %v3155 = vadd.f32 %v2873, %v3098
      %v3156 = vadd.f32 %v2874, %v3101
      %v3157 = vadd.f32 %v2875, %v3103
      %v3158 = vadd.f32 %v2876, %v3106
      %v3159 = vadd.f32 %v2877, %v3108
      %v3160 = vadd.f32 %v2878, %v3111
      %v3161 = vadd.f32 %v2879, %v3113
      %v3162 = vadd.f32 %v2880, %v3116
      %v3163 = vadd.f32 %v2881, %v3118
      %v3164 = vadd.f32 %v2882, %v3121
      %v3165 = vadd.f32 %v2883, %v3123
      %v3166 = vadd.f32 %v2884, %v3126
      %v3167 = vadd.f32 %v2885, %v3128
      %v3168 = vadd.f32 %v2886, %v3131
      %v3169 = vadd.f32 %v2887, %v3133
      %v3170 = vadd.f32 %v2888, %v3136
      %v3171 = vadd.f32 %v2889, %v3138
      %v3172 = vld [vmem:[%s239 + $0x8] sm:$0xf]
      %v3173 = vld [vmem:[%s239 + $0xc] sm:$0xf]
      %v3174 = vld [vmem:[%s239 + $0x10] sm:$0x1]
      %v3175 = vld [vmem:[%s239 + $0x20] sm:$0xf]
      %v3176 = vld [vmem:[%s239 + $0x24] sm:$0xf]
      %v3177 = vld [vmem:[%s239 + $0x28] sm:$0x1]
      %v3178 = vld [vmem:[%s239 + $0x38] sm:$0xf]
      %v3179 = vld [vmem:[%s239 + $0x3c] sm:$0xf]
      %v3180 = vld [vmem:[%s239 + $0x40] sm:$0x1]
      %v3181 = vld [vmem:[%s239 + $0x50] sm:$0xf]
      %v3182 = vld [vmem:[%s239 + $0x54] sm:$0xf]
      %v3183 = vld [vmem:[%s239 + $0x58] sm:$0x1]
      %v3184 = vld [vmem:[%s239 + $0x68] sm:$0xf]
      %v3185 = vld [vmem:[%s239 + $0x6c] sm:$0xf]
      %v3186 = vld [vmem:[%s239 + $0x70] sm:$0x1]
      %v3187 = vld [vmem:[%s239 + $0x80] sm:$0xf]
      %v3188 = vld [vmem:[%s239 + $0x84] sm:$0xf]
      %v3189 = vld [vmem:[%s239 + $0x88] sm:$0x1]
      %v3190 = vld [vmem:[%s239 + $0x98] sm:$0xf]
      %v3191 = vld [vmem:[%s239 + $0x9c] sm:$0xf]
      %v3192 = vld [vmem:[%s239 + $0xa0] sm:$0x1]
      %v3193 = vld [vmem:[%s239 + $0xb0] sm:$0xf]
      %v3194 = vld [vmem:[%s239 + $0xb4] sm:$0xf]
      %v3195 = vld [vmem:[%s239 + $0xb8] sm:$0x1]
      %v3196 = vld [vmem:[%s239 + $0xc8] sm:$0xf]
      %v3197 = vld [vmem:[%s239 + $0xcc] sm:$0xf]
      %v3198 = vld [vmem:[%s239 + $0xd0] sm:$0x1]
      %v3199 = vld [vmem:[%s239 + $0xe0] sm:$0xf]
      %v3200 = vld [vmem:[%s239 + $0xe4] sm:$0xf]
      %v3201 = vld [vmem:[%s239 + $0xe8] sm:$0x1]
      %v3202 = vld [vmem:[%s239 + $0xf8] sm:$0xf]
      %v3203 = vld [vmem:[%s239 + $0xfc] sm:$0xf]
      %v3204 = vld [vmem:[%s239 + $0x100] sm:$0x1]
      %v3205 = vld [vmem:[%s239 + $0x110] sm:$0xf]
      %v3206 = vld [vmem:[%s239 + $0x114] sm:$0xf]
      %v3207 = vld [vmem:[%s239 + $0x118] sm:$0x1]
      %v3208 = vld [vmem:[%s239 + $0x128] sm:$0xf]
      %v3209 = vld [vmem:[%s239 + $0x12c] sm:$0xf]
      %v3210 = vld [vmem:[%s239 + $0x130] sm:$0x1]
      %v3211 = vld [vmem:[%s239 + $0x140] sm:$0xf]
      %v3212 = vld [vmem:[%s239 + $0x144] sm:$0xf]
      %v3213 = vld [vmem:[%s239 + $0x148] sm:$0x1]
      %v3214 = vld [vmem:[%s239 + $0x158] sm:$0xf]
      %v3215 = vld [vmem:[%s239 + $0x15c] sm:$0xf]
      %v3216 = vld [vmem:[%s239 + $0x160] sm:$0x1]
      %v3217 = vld [vmem:[%s239 + $0x170] sm:$0xf]
      %v3218 = vld [vmem:[%s239 + $0x174] sm:$0xf]
      %v3219 = vld [vmem:[%s239 + $0x178] sm:$0x1]
      %v3221 = vshrl.u32 %v3172, 16
      %v3223 = vrot.slane %v3221, 4
      %v3224 = vshll.u32 %v3172, 16
      %v3226 = vrot.slane %v3224, 5
      %v3227 = vor.u32 %v3223, %v3226
      %v3228 = vrot.slane %v3227, 4
      %v3230 = vshll.u32 %v3173, 16
      %v3232 = vrot.slane %v3230, 5
      %v3233 = vsel %vm1605, %v3228, %v3232
      %v3234 = vshrl.u32 %v3173, 16
      %v3236 = vrot.slane %v3234, 4
      %v3237 = vor.u32 %v3236, %v3232
      %v3238 = vrot.slane %v3237, 4
      %v3240 = vshll.u32 %v3174, 16
      %v3242 = vrot.slane %v3240, 5
      %v3243 = vsel %vm1605, %v3238, %v3242
      %v3245 = vshrl.u32 %v3175, 16
      %v3247 = vrot.slane %v3245, 4
      %v3248 = vshll.u32 %v3175, 16
      %v3250 = vrot.slane %v3248, 5
      %v3251 = vor.u32 %v3247, %v3250
      %v3252 = vrot.slane %v3251, 4
      %v3254 = vshll.u32 %v3176, 16
      %v3256 = vrot.slane %v3254, 5
      %v3257 = vsel %vm1605, %v3252, %v3256
      %v3258 = vshrl.u32 %v3176, 16
      %v3260 = vrot.slane %v3258, 4
      %v3261 = vor.u32 %v3260, %v3256
      %v3262 = vrot.slane %v3261, 4
      %v3264 = vshll.u32 %v3177, 16
      %v3266 = vrot.slane %v3264, 5
      %v3267 = vsel %vm1605, %v3262, %v3266
      %v3269 = vshrl.u32 %v3178, 16
      %v3271 = vrot.slane %v3269, 4
      %v3272 = vshll.u32 %v3178, 16
      %v3274 = vrot.slane %v3272, 5
      %v3275 = vor.u32 %v3271, %v3274
      %v3276 = vrot.slane %v3275, 4
      %v3278 = vshll.u32 %v3179, 16
      %v3280 = vrot.slane %v3278, 5
      %v3281 = vsel %vm1605, %v3276, %v3280
      %v3282 = vshrl.u32 %v3179, 16
      %v3284 = vrot.slane %v3282, 4
      %v3285 = vor.u32 %v3284, %v3280
      %v3286 = vrot.slane %v3285, 4
      %v3288 = vshll.u32 %v3180, 16
      %v3290 = vrot.slane %v3288, 5
      %v3291 = vsel %vm1605, %v3286, %v3290
      %v3293 = vshrl.u32 %v3181, 16
      %v3295 = vrot.slane %v3293, 4
      %v3296 = vshll.u32 %v3181, 16
      %v3298 = vrot.slane %v3296, 5
      %v3299 = vor.u32 %v3295, %v3298
      %v3300 = vrot.slane %v3299, 4
      %v3302 = vshll.u32 %v3182, 16
      %v3304 = vrot.slane %v3302, 5
      %v3305 = vsel %vm1605, %v3300, %v3304
      %v3306 = vshrl.u32 %v3182, 16
      %v3308 = vrot.slane %v3306, 4
      %v3309 = vor.u32 %v3308, %v3304
      %v3310 = vrot.slane %v3309, 4
      %v3312 = vshll.u32 %v3183, 16
      %v3314 = vrot.slane %v3312, 5
      %v3315 = vsel %vm1605, %v3310, %v3314
      %v3317 = vshrl.u32 %v3184, 16
      %v3319 = vrot.slane %v3317, 4
      %v3320 = vshll.u32 %v3184, 16
      %v3322 = vrot.slane %v3320, 5
      %v3323 = vor.u32 %v3319, %v3322
      %v3324 = vrot.slane %v3323, 4
      %v3326 = vshll.u32 %v3185, 16
      %v3328 = vrot.slane %v3326, 5
      %v3329 = vsel %vm1605, %v3324, %v3328
      %v3330 = vshrl.u32 %v3185, 16
      %v3332 = vrot.slane %v3330, 4
      %v3333 = vor.u32 %v3332, %v3328
      %v3334 = vrot.slane %v3333, 4
      %v3336 = vshll.u32 %v3186, 16
      %v3338 = vrot.slane %v3336, 5
      %v3339 = vsel %vm1605, %v3334, %v3338
      %v3341 = vshrl.u32 %v3187, 16
      %v3343 = vrot.slane %v3341, 4
      %v3344 = vshll.u32 %v3187, 16
      %v3346 = vrot.slane %v3344, 5
      %v3347 = vor.u32 %v3343, %v3346
      %v3348 = vrot.slane %v3347, 4
      %v3350 = vshll.u32 %v3188, 16
      %v3352 = vrot.slane %v3350, 5
      %v3353 = vsel %vm1605, %v3348, %v3352
      %v3354 = vshrl.u32 %v3188, 16
      %v3356 = vrot.slane %v3354, 4
      %v3357 = vor.u32 %v3356, %v3352
      %v3358 = vrot.slane %v3357, 4
      %v3360 = vshll.u32 %v3189, 16
      %v3362 = vrot.slane %v3360, 5
      %v3363 = vsel %vm1605, %v3358, %v3362
      %v3365 = vshrl.u32 %v3190, 16
      %v3367 = vrot.slane %v3365, 4
      %v3368 = vshll.u32 %v3190, 16
      %v3370 = vrot.slane %v3368, 5
      %v3371 = vor.u32 %v3367, %v3370
      %v3372 = vrot.slane %v3371, 4
      %v3374 = vshll.u32 %v3191, 16
      %v3376 = vrot.slane %v3374, 5
      %v3377 = vsel %vm1605, %v3372, %v3376
      %v3378 = vshrl.u32 %v3191, 16
      %v3380 = vrot.slane %v3378, 4
      %v3381 = vor.u32 %v3380, %v3376
      %v3382 = vrot.slane %v3381, 4
      %v3384 = vshll.u32 %v3192, 16
      %v3386 = vrot.slane %v3384, 5
      %v3387 = vsel %vm1605, %v3382, %v3386
      %v3389 = vshrl.u32 %v3193, 16
      %v3391 = vrot.slane %v3389, 4
      %v3392 = vshll.u32 %v3193, 16
      %v3394 = vrot.slane %v3392, 5
      %v3395 = vor.u32 %v3391, %v3394
      %v3396 = vrot.slane %v3395, 4
      %v3398 = vshll.u32 %v3194, 16
      %v3400 = vrot.slane %v3398, 5
      %v3401 = vsel %vm1605, %v3396, %v3400
      %v3402 = vshrl.u32 %v3194, 16
      %v3404 = vrot.slane %v3402, 4
      %v3405 = vor.u32 %v3404, %v3400
      %v3406 = vrot.slane %v3405, 4
      %v3408 = vshll.u32 %v3195, 16
      %v3410 = vrot.slane %v3408, 5
      %v3411 = vsel %vm1605, %v3406, %v3410
      %v3413 = vshrl.u32 %v3196, 16
      %v3415 = vrot.slane %v3413, 4
      %v3416 = vshll.u32 %v3196, 16
      %v3418 = vrot.slane %v3416, 5
      %v3419 = vor.u32 %v3415, %v3418
      %v3420 = vrot.slane %v3419, 4
      %v3422 = vshll.u32 %v3197, 16
      %v3424 = vrot.slane %v3422, 5
      %v3425 = vsel %vm1605, %v3420, %v3424
      %v3426 = vshrl.u32 %v3197, 16
      %v3428 = vrot.slane %v3426, 4
      %v3429 = vor.u32 %v3428, %v3424
      %v3430 = vrot.slane %v3429, 4
      %v3432 = vshll.u32 %v3198, 16
      %v3434 = vrot.slane %v3432, 5
      %v3435 = vsel %vm1605, %v3430, %v3434
      %v3437 = vshrl.u32 %v3199, 16
      %v3439 = vrot.slane %v3437, 4
      %v3440 = vshll.u32 %v3199, 16
      %v3442 = vrot.slane %v3440, 5
      %v3443 = vor.u32 %v3439, %v3442
      %v3444 = vrot.slane %v3443, 4
      %v3446 = vshll.u32 %v3200, 16
      %v3448 = vrot.slane %v3446, 5
      %v3449 = vsel %vm1605, %v3444, %v3448
      %v3450 = vshrl.u32 %v3200, 16
      %v3452 = vrot.slane %v3450, 4
      %v3453 = vor.u32 %v3452, %v3448
      %v3454 = vrot.slane %v3453, 4
      %v3456 = vshll.u32 %v3201, 16
      %v3458 = vrot.slane %v3456, 5
      %v3459 = vsel %vm1605, %v3454, %v3458
      %v3461 = vshrl.u32 %v3202, 16
      %v3463 = vrot.slane %v3461, 4
      %v3464 = vshll.u32 %v3202, 16
      %v3466 = vrot.slane %v3464, 5
      %v3467 = vor.u32 %v3463, %v3466
      %v3468 = vrot.slane %v3467, 4
      %v3470 = vshll.u32 %v3203, 16
      %v3472 = vrot.slane %v3470, 5
      %v3473 = vsel %vm1605, %v3468, %v3472
      %v3474 = vshrl.u32 %v3203, 16
      %v3476 = vrot.slane %v3474, 4
      %v3477 = vor.u32 %v3476, %v3472
      %v3478 = vrot.slane %v3477, 4
      %v3480 = vshll.u32 %v3204, 16
      %v3482 = vrot.slane %v3480, 5
      %v3483 = vsel %vm1605, %v3478, %v3482
      %v3485 = vshrl.u32 %v3205, 16
      %v3487 = vrot.slane %v3485, 4
      %v3488 = vshll.u32 %v3205, 16
      %v3490 = vrot.slane %v3488, 5
      %v3491 = vor.u32 %v3487, %v3490
      %v3492 = vrot.slane %v3491, 4
      %v3494 = vshll.u32 %v3206, 16
      %v3496 = vrot.slane %v3494, 5
      %v3497 = vsel %vm1605, %v3492, %v3496
      %v3498 = vshrl.u32 %v3206, 16
      %v3500 = vrot.slane %v3498, 4
      %v3501 = vor.u32 %v3500, %v3496
      %v3502 = vrot.slane %v3501, 4
      %v3504 = vshll.u32 %v3207, 16
      %v3506 = vrot.slane %v3504, 5
      %v3507 = vsel %vm1605, %v3502, %v3506
      %v3509 = vshrl.u32 %v3208, 16
      %v3511 = vrot.slane %v3509, 4
      %v3512 = vshll.u32 %v3208, 16
      %v3514 = vrot.slane %v3512, 5
      %v3515 = vor.u32 %v3511, %v3514
      %v3516 = vrot.slane %v3515, 4
      %v3518 = vshll.u32 %v3209, 16
      %v3520 = vrot.slane %v3518, 5
      %v3521 = vsel %vm1605, %v3516, %v3520
      %v3522 = vshrl.u32 %v3209, 16
      %v3524 = vrot.slane %v3522, 4
      %v3525 = vor.u32 %v3524, %v3520
      %v3526 = vrot.slane %v3525, 4
      %v3528 = vshll.u32 %v3210, 16
      %v3530 = vrot.slane %v3528, 5
      %v3531 = vsel %vm1605, %v3526, %v3530
      %v3533 = vshrl.u32 %v3211, 16
      %v3535 = vrot.slane %v3533, 4
      %v3536 = vshll.u32 %v3211, 16
      %v3538 = vrot.slane %v3536, 5
      %v3539 = vor.u32 %v3535, %v3538
      %v3540 = vrot.slane %v3539, 4
      %v3542 = vshll.u32 %v3212, 16
      %v3544 = vrot.slane %v3542, 5
      %v3545 = vsel %vm1605, %v3540, %v3544
      %v3546 = vshrl.u32 %v3212, 16
      %v3548 = vrot.slane %v3546, 4
      %v3549 = vor.u32 %v3548, %v3544
      %v3550 = vrot.slane %v3549, 4
      %v3552 = vshll.u32 %v3213, 16
      %v3554 = vrot.slane %v3552, 5
      %v3555 = vsel %vm1605, %v3550, %v3554
      %v3557 = vshrl.u32 %v3214, 16
      %v3559 = vrot.slane %v3557, 4
      %v3560 = vshll.u32 %v3214, 16
      %v3562 = vrot.slane %v3560, 5
      %v3563 = vor.u32 %v3559, %v3562
      %v3564 = vrot.slane %v3563, 4
      %v3566 = vshll.u32 %v3215, 16
      %v3568 = vrot.slane %v3566, 5
      %v3569 = vsel %vm1605, %v3564, %v3568
      %v3570 = vshrl.u32 %v3215, 16
      %v3572 = vrot.slane %v3570, 4
      %v3573 = vor.u32 %v3572, %v3568
      %v3574 = vrot.slane %v3573, 4
      %v3576 = vshll.u32 %v3216, 16
      %v3578 = vrot.slane %v3576, 5
      %v3579 = vsel %vm1605, %v3574, %v3578
      %v3581 = vshrl.u32 %v3217, 16
      %v3583 = vrot.slane %v3581, 4
      %v3584 = vshll.u32 %v3217, 16
      %v3586 = vrot.slane %v3584, 5
      %v3587 = vor.u32 %v3583, %v3586
      %v3588 = vrot.slane %v3587, 4
      %v3590 = vshll.u32 %v3218, 16
      %v3592 = vrot.slane %v3590, 5
      %v3593 = vsel %vm1605, %v3588, %v3592
      %v3594 = vshrl.u32 %v3218, 16
      %v3596 = vrot.slane %v3594, 4
      %v3597 = vor.u32 %v3596, %v3592
      %v3598 = vrot.slane %v3597, 4
      %v3600 = vshll.u32 %v3219, 16
      %v3602 = vrot.slane %v3600, 5
      %v3603 = vsel %vm1605, %v3598, %v3602
      %s3604 = scalar_lea.vmem %s3, 320
      %v3605 = vld [vmem:[%s3604] sm:$0xf]
      %v3606 = vld [vmem:[%s3604 + $0x4] sm:$0xf]
      %v3607 = vld [vmem:[%s3604 + $0x8] sm:$0xf]
      %v3608 = vld [vmem:[%s3604 + $0xc] sm:$0xf]
      %v3609 = vld [vmem:[%s3604 + $0x10] sm:$0xf]
      %v3610 = vld [vmem:[%s3604 + $0x14] sm:$0xf]
      %v3611 = vld [vmem:[%s3604 + $0x18] sm:$0xf]
      %v3612 = vld [vmem:[%s3604 + $0x1c] sm:$0xf]
      %v3613 = vld [vmem:[%s3604 + $0x20] sm:$0xf]
      %v3614 = vld [vmem:[%s3604 + $0x24] sm:$0xf]
      %v3615 = vld [vmem:[%s3604 + $0x28] sm:$0xf]
      %v3616 = vld [vmem:[%s3604 + $0x2c] sm:$0xf]
      %v3617 = vld [vmem:[%s3604 + $0x30] sm:$0xf]
      %v3618 = vld [vmem:[%s3604 + $0x34] sm:$0xf]
      %v3619 = vld [vmem:[%s3604 + $0x38] sm:$0xf]
      %v3620 = vld [vmem:[%s3604 + $0x3c] sm:$0xf]
      %v3621 = vunpack.c.l.b16 %v3233
      %v3622 = vunpack.c.l.b16 %v3243
      %v3623 = vunpack.c.l.b16 %v3257
      %v3624 = vunpack.c.l.b16 %v3267
      %v3625 = vunpack.c.l.b16 %v3281
      %v3626 = vunpack.c.l.b16 %v3291
      %v3627 = vunpack.c.l.b16 %v3305
      %v3628 = vunpack.c.l.b16 %v3315
      %v3629 = vunpack.c.l.b16 %v3329
      %v3630 = vunpack.c.l.b16 %v3339
      %v3631 = vunpack.c.l.b16 %v3353
      %v3632 = vunpack.c.l.b16 %v3363
      %v3633 = vunpack.c.l.b16 %v3377
      %v3634 = vunpack.c.l.b16 %v3387
      %v3635 = vunpack.c.l.b16 %v3401
      %v3636 = vunpack.c.l.b16 %v3411
      %v3637 = vunpack.c.l.b16 %v3425
      %v3638 = vunpack.c.l.b16 %v3435
      %v3639 = vunpack.c.l.b16 %v3449
      %v3640 = vunpack.c.l.b16 %v3459
      %v3641 = vunpack.c.l.b16 %v3473
      %v3642 = vunpack.c.l.b16 %v3483
      %v3643 = vunpack.c.l.b16 %v3497
      %v3644 = vunpack.c.l.b16 %v3507
      %v3645 = vunpack.c.l.b16 %v3521
      %v3646 = vunpack.c.l.b16 %v3531
      %v3647 = vunpack.c.l.b16 %v3545
      %v3648 = vunpack.c.l.b16 %v3555
      %v3649 = vunpack.c.l.b16 %v3569
      %v3650 = vunpack.c.l.b16 %v3579
      %v3651 = vunpack.c.l.b16 %v3593
      %v3652 = vunpack.c.l.b16 %v3603
      %v3653 = vpack.c.b16 %v3622, %v3621
      %v3654 = vpack.c.b16 %v3624, %v3623
      %v3655 = vpack.c.b16 %v3626, %v3625
      %v3656 = vpack.c.b16 %v3628, %v3627
      %v3657 = vpack.c.b16 %v3630, %v3629
      %v3658 = vpack.c.b16 %v3632, %v3631
      %v3659 = vpack.c.b16 %v3634, %v3633
      %v3660 = vpack.c.b16 %v3636, %v3635
      %v3661 = vpack.c.b16 %v3638, %v3637
      %v3662 = vpack.c.b16 %v3640, %v3639
      %v3663 = vpack.c.b16 %v3642, %v3641
      %v3664 = vpack.c.b16 %v3644, %v3643
      %v3665 = vpack.c.b16 %v3646, %v3645
      %v3666 = vpack.c.b16 %v3648, %v3647
      %v3667 = vpack.c.b16 %v3650, %v3649
      %v3668 = vpack.c.b16 %v3652, %v3651
      %v3701 = vunpack.c.l.b16 %v3605
      %v3702 = vunpack.c.l.b16 %v3606
      %v3703 = vunpack.c.l.b16 %v3607
      %v3704 = vunpack.c.l.b16 %v3608
      %v3705 = vunpack.c.l.b16 %v3609
      %v3706 = vunpack.c.l.b16 %v3610
      %v3707 = vunpack.c.l.b16 %v3611
      %v3708 = vunpack.c.l.b16 %v3612
      %v3709 = vunpack.c.l.b16 %v3613
      %v3710 = vunpack.c.l.b16 %v3614
      %v3711 = vunpack.c.l.b16 %v3615
      %v3712 = vunpack.c.l.b16 %v3616
      %v3713 = vunpack.c.l.b16 %v3617
      %v3714 = vunpack.c.l.b16 %v3618
      %v3715 = vunpack.c.l.b16 %v3619
      %v3716 = vunpack.c.l.b16 %v3620
      %v3717 = vpack.c.b16 %v3702, %v3701
      %v3718 = vpack.c.b16 %v3704, %v3703
      %v3719 = vpack.c.b16 %v3706, %v3705
      %v3720 = vpack.c.b16 %v3708, %v3707
      %v3721 = vpack.c.b16 %v3710, %v3709
      %v3722 = vpack.c.b16 %v3712, %v3711
      %v3723 = vpack.c.b16 %v3714, %v3713
      %v3724 = vpack.c.b16 %v3716, %v3715
      %3733 = vmatpush.bf16.msra.mxu0 %v3724
      %3734 = vmatpush.bf16.msra.mxu0 %v3723
      %3735 = vmatpush.bf16.msra.mxu0 %v3722
      %3736 = vmatpush.bf16.msra.mxu0 %v3721
      %3737 = vmatpush.bf16.msra.mxu0 %v3720
      %3738 = vmatpush.bf16.msra.mxu0 %v3719
      %3739 = vmatpush.bf16.msra.mxu0 %v3718
      %3740 = vmatpush.bf16.msra.mxu0 %v3717
      %3741 = vmatmul.bf16.gmra.mxu0 %v3653
      %v3742 = vpop.f32.mrf.mxu0
      %v3743 = vadd.f32 0.0, %v3742
      %v3744 = vpop.f32.mrf.mxu0
      %v3745 = vadd.f32 0.0, %v3744
      %3746 = vmatmul.bf16.gmra.mxu0 %v3654
      %v3747 = vpop.f32.mrf.mxu0
      %v3748 = vadd.f32 0.0, %v3747
      %v3749 = vpop.f32.mrf.mxu0
      %v3750 = vadd.f32 0.0, %v3749
      %3751 = vmatmul.bf16.gmra.mxu0 %v3655
      %v3752 = vpop.f32.mrf.mxu0
      %v3753 = vadd.f32 0.0, %v3752
      %v3754 = vpop.f32.mrf.mxu0
      %v3755 = vadd.f32 0.0, %v3754
      %3756 = vmatmul.bf16.gmra.mxu0 %v3656
      %v3757 = vpop.f32.mrf.mxu0
      %v3758 = vadd.f32 0.0, %v3757
      %v3759 = vpop.f32.mrf.mxu0
      %v3760 = vadd.f32 0.0, %v3759
      %3761 = vmatmul.bf16.gmra.mxu0 %v3657
      %v3762 = vpop.f32.mrf.mxu0
      %v3763 = vadd.f32 0.0, %v3762
      %v3764 = vpop.f32.mrf.mxu0
      %v3765 = vadd.f32 0.0, %v3764
      %3766 = vmatmul.bf16.gmra.mxu0 %v3658
      %v3767 = vpop.f32.mrf.mxu0
      %v3768 = vadd.f32 0.0, %v3767
      %v3769 = vpop.f32.mrf.mxu0
      %v3770 = vadd.f32 0.0, %v3769
      %3771 = vmatmul.bf16.gmra.mxu0 %v3659
      %v3772 = vpop.f32.mrf.mxu0
      %v3773 = vadd.f32 0.0, %v3772
      %v3774 = vpop.f32.mrf.mxu0
      %v3775 = vadd.f32 0.0, %v3774
      %3776 = vmatmul.bf16.gmra.mxu0 %v3660
      %v3777 = vpop.f32.mrf.mxu0
      %v3778 = vadd.f32 0.0, %v3777
      %v3779 = vpop.f32.mrf.mxu0
      %v3780 = vadd.f32 0.0, %v3779
      %3781 = vmatmul.bf16.gmra.mxu0 %v3661
      %v3782 = vpop.f32.mrf.mxu0
      %v3783 = vadd.f32 0.0, %v3782
      %v3784 = vpop.f32.mrf.mxu0
      %v3785 = vadd.f32 0.0, %v3784
      %3786 = vmatmul.bf16.gmra.mxu0 %v3662
      %v3787 = vpop.f32.mrf.mxu0
      %v3788 = vadd.f32 0.0, %v3787
      %v3789 = vpop.f32.mrf.mxu0
      %v3790 = vadd.f32 0.0, %v3789
      %3791 = vmatmul.bf16.gmra.mxu0 %v3663
      %v3792 = vpop.f32.mrf.mxu0
      %v3793 = vadd.f32 0.0, %v3792
      %v3794 = vpop.f32.mrf.mxu0
      %v3795 = vadd.f32 0.0, %v3794
      %3796 = vmatmul.bf16.gmra.mxu0 %v3664
      %v3797 = vpop.f32.mrf.mxu0
      %v3798 = vadd.f32 0.0, %v3797
      %v3799 = vpop.f32.mrf.mxu0
      %v3800 = vadd.f32 0.0, %v3799
      %3801 = vmatmul.bf16.gmra.mxu0 %v3665
      %v3802 = vpop.f32.mrf.mxu0
      %v3803 = vadd.f32 0.0, %v3802
      %v3804 = vpop.f32.mrf.mxu0
      %v3805 = vadd.f32 0.0, %v3804
      %3806 = vmatmul.bf16.gmra.mxu0 %v3666
      %v3807 = vpop.f32.mrf.mxu0
      %v3808 = vadd.f32 0.0, %v3807
      %v3809 = vpop.f32.mrf.mxu0
      %v3810 = vadd.f32 0.0, %v3809
      %3811 = vmatmul.bf16.gmra.mxu0 %v3667
      %v3812 = vpop.f32.mrf.mxu0
      %v3813 = vadd.f32 0.0, %v3812
      %v3814 = vpop.f32.mrf.mxu0
      %v3815 = vadd.f32 0.0, %v3814
      %3816 = vmatmul.bf16.gmra.mxu0 %v3668
      %v3817 = vpop.f32.mrf.mxu0
      %v3818 = vadd.f32 0.0, %v3817
      %v3819 = vpop.f32.mrf.mxu0
      %v3820 = vadd.f32 0.0, %v3819
      %3821 = vdwg.mxu0
      %v3822 = vadd.f32 %v3140, %v3743
      %v3823 = vadd.f32 %v3141, %v3745
      %v3824 = vadd.f32 %v3142, %v3748
      %v3825 = vadd.f32 %v3143, %v3750
      %v3826 = vadd.f32 %v3144, %v3753
      %v3827 = vadd.f32 %v3145, %v3755
      %v3828 = vadd.f32 %v3146, %v3758
      %v3829 = vadd.f32 %v3147, %v3760
      %v3830 = vadd.f32 %v3148, %v3763
      %v3831 = vadd.f32 %v3149, %v3765
      %v3832 = vadd.f32 %v3150, %v3768
      %v3833 = vadd.f32 %v3151, %v3770
      %v3834 = vadd.f32 %v3152, %v3773
      %v3835 = vadd.f32 %v3153, %v3775
      %v3836 = vadd.f32 %v3154, %v3778
      %v3837 = vadd.f32 %v3155, %v3780
      %v3838 = vadd.f32 %v3156, %v3783
      %v3839 = vadd.f32 %v3157, %v3785
      %v3840 = vadd.f32 %v3158, %v3788
      %v3841 = vadd.f32 %v3159, %v3790
      %v3842 = vadd.f32 %v3160, %v3793
      %v3843 = vadd.f32 %v3161, %v3795
      %v3844 = vadd.f32 %v3162, %v3798
      %v3845 = vadd.f32 %v3163, %v3800
      %v3846 = vadd.f32 %v3164, %v3803
      %v3847 = vadd.f32 %v3165, %v3805
      %v3848 = vadd.f32 %v3166, %v3808
      %v3849 = vadd.f32 %v3167, %v3810
      %v3850 = vadd.f32 %v3168, %v3813
      %v3851 = vadd.f32 %v3169, %v3815
      %v3852 = vadd.f32 %v3170, %v3818
      %v3853 = vadd.f32 %v3171, %v3820
      %s3854 = scalar_lea.vmem [#allocation2], 48
      %v3855 = vld [vmem:[%s3854 + $0x4] sm:$0x8]
      %v3856 = vld [vmem:[%s3854 + $0x8] sm:$0xf]
      %v3857 = vld [vmem:[%s3854 + $0xc] sm:$0xf]
      %v3858 = vld [vmem:[%s3854 + $0x1c] sm:$0x8]
      %v3859 = vld [vmem:[%s3854 + $0x20] sm:$0xf]
      %v3860 = vld [vmem:[%s3854 + $0x24] sm:$0xf]
      %v3861 = vld [vmem:[%s3854 + $0x34] sm:$0x8]
      %v3862 = vld [vmem:[%s3854 + $0x38] sm:$0xf]
      %v3863 = vld [vmem:[%s3854 + $0x3c] sm:$0xf]
      %v3864 = vld [vmem:[%s3854 + $0x4c] sm:$0x8]
      %v3865 = vld [vmem:[%s3854 + $0x50] sm:$0xf]
      %v3866 = vld [vmem:[%s3854 + $0x54] sm:$0xf]
      %v3867 = vld [vmem:[%s3854 + $0x64] sm:$0x8]
      %v3868 = vld [vmem:[%s3854 + $0x68] sm:$0xf]
      %v3869 = vld [vmem:[%s3854 + $0x6c] sm:$0xf]
      %v3870 = vld [vmem:[%s3854 + $0x7c] sm:$0x8]
      %v3871 = vld [vmem:[%s3854 + $0x80] sm:$0xf]
      %v3872 = vld [vmem:[%s3854 + $0x84] sm:$0xf]
      %v3873 = vld [vmem:[%s3854 + $0x94] sm:$0x8]
      %v3874 = vld [vmem:[%s3854 + $0x98] sm:$0xf]
      %v3875 = vld [vmem:[%s3854 + $0x9c] sm:$0xf]
      %v3876 = vld [vmem:[%s3854 + $0xac] sm:$0x8]
      %v3877 = vld [vmem:[%s3854 + $0xb0] sm:$0xf]
      %v3878 = vld [vmem:[%s3854 + $0xb4] sm:$0xf]
      %v3879 = vld [vmem:[%s3854 + $0xc4] sm:$0x8]
      %v3880 = vld [vmem:[%s3854 + $0xc8] sm:$0xf]
      %v3881 = vld [vmem:[%s3854 + $0xcc] sm:$0xf]
      %v3882 = vld [vmem:[%s3854 + $0xdc] sm:$0x8]
      %v3883 = vld [vmem:[%s3854 + $0xe0] sm:$0xf]
      %v3884 = vld [vmem:[%s3854 + $0xe4] sm:$0xf]
      %v3885 = vld [vmem:[%s3854 + $0xf4] sm:$0x8]
      %v3886 = vld [vmem:[%s3854 + $0xf8] sm:$0xf]
      %v3887 = vld [vmem:[%s3854 + $0xfc] sm:$0xf]
      %v3888 = vld [vmem:[%s3854 + $0x10c] sm:$0x8]
      %v3889 = vld [vmem:[%s3854 + $0x110] sm:$0xf]
      %v3890 = vld [vmem:[%s3854 + $0x114] sm:$0xf]
      %v3891 = vld [vmem:[%s3854 + $0x124] sm:$0x8]
      %v3892 = vld [vmem:[%s3854 + $0x128] sm:$0xf]
      %v3893 = vld [vmem:[%s3854 + $0x12c] sm:$0xf]
      %v3894 = vld [vmem:[%s3854 + $0x13c] sm:$0x8]
      %v3895 = vld [vmem:[%s3854 + $0x140] sm:$0xf]
      %v3896 = vld [vmem:[%s3854 + $0x144] sm:$0xf]
      %v3897 = vld [vmem:[%s3854 + $0x154] sm:$0x8]
      %v3898 = vld [vmem:[%s3854 + $0x158] sm:$0xf]
      %v3899 = vld [vmem:[%s3854 + $0x15c] sm:$0xf]
      %v3900 = vld [vmem:[%s3854 + $0x16c] sm:$0x8]
      %v3901 = vld [vmem:[%s3854 + $0x170] sm:$0xf]
      %v3902 = vld [vmem:[%s3854 + $0x174] sm:$0xf]
      %v3904 = vshrl.u32 %v3855, 16
      %v3906 = vrot.slane %v3904, 7
      %v3907 = vrot.slane %v3906, 4
      %v3909 = vshrl.u32 %v3856, 16
      %v3911 = vrot.slane %v3909, 7
      %v3912 = vshll.u32 %v3856, 16
      %v3914 = vor.u32 %v3911, %v3912
      %v3915 = vsel %vm735, %v3907, %v3914
      %v3916 = vrot.slane %v3911, 4
      %v3918 = vshrl.u32 %v3857, 16
      %v3920 = vrot.slane %v3918, 7
      %v3921 = vshll.u32 %v3857, 16
      %v3923 = vor.u32 %v3920, %v3921
      %v3924 = vsel %vm735, %v3916, %v3923
      %v3926 = vshrl.u32 %v3858, 16
      %v3928 = vrot.slane %v3926, 7
      %v3929 = vrot.slane %v3928, 4
      %v3931 = vshrl.u32 %v3859, 16
      %v3933 = vrot.slane %v3931, 7
      %v3934 = vshll.u32 %v3859, 16
      %v3936 = vor.u32 %v3933, %v3934
      %v3937 = vsel %vm735, %v3929, %v3936
      %v3938 = vrot.slane %v3933, 4
      %v3940 = vshrl.u32 %v3860, 16
      %v3942 = vrot.slane %v3940, 7
      %v3943 = vshll.u32 %v3860, 16
      %v3945 = vor.u32 %v3942, %v3943
      %v3946 = vsel %vm735, %v3938, %v3945
      %v3948 = vshrl.u32 %v3861, 16
      %v3950 = vrot.slane %v3948, 7
      %v3951 = vrot.slane %v3950, 4
      %v3953 = vshrl.u32 %v3862, 16
      %v3955 = vrot.slane %v3953, 7
      %v3956 = vshll.u32 %v3862, 16
      %v3958 = vor.u32 %v3955, %v3956
      %v3959 = vsel %vm735, %v3951, %v3958
      %v3960 = vrot.slane %v3955, 4
      %v3962 = vshrl.u32 %v3863, 16
      %v3964 = vrot.slane %v3962, 7
      %v3965 = vshll.u32 %v3863, 16
      %v3967 = vor.u32 %v3964, %v3965
      %v3968 = vsel %vm735, %v3960, %v3967
      %v3970 = vshrl.u32 %v3864, 16
      %v3972 = vrot.slane %v3970, 7
      %v3973 = vrot.slane %v3972, 4
      %v3975 = vshrl.u32 %v3865, 16
      %v3977 = vrot.slane %v3975, 7
      %v3978 = vshll.u32 %v3865, 16
      %v3980 = vor.u32 %v3977, %v3978
      %v3981 = vsel %vm735, %v3973, %v3980
      %v3982 = vrot.slane %v3977, 4
      %v3984 = vshrl.u32 %v3866, 16
      %v3986 = vrot.slane %v3984, 7
      %v3987 = vshll.u32 %v3866, 16
      %v3989 = vor.u32 %v3986, %v3987
      %v3990 = vsel %vm735, %v3982, %v3989
      %v3992 = vshrl.u32 %v3867, 16
      %v3994 = vrot.slane %v3992, 7
      %v3995 = vrot.slane %v3994, 4
      %v3997 = vshrl.u32 %v3868, 16
      %v3999 = vrot.slane %v3997, 7
      %v4000 = vshll.u32 %v3868, 16
      %v4002 = vor.u32 %v3999, %v4000
      %v4003 = vsel %vm735, %v3995, %v4002
      %v4004 = vrot.slane %v3999, 4
      %v4006 = vshrl.u32 %v3869, 16
      %v4008 = vrot.slane %v4006, 7
      %v4009 = vshll.u32 %v3869, 16
      %v4011 = vor.u32 %v4008, %v4009
      %v4012 = vsel %vm735, %v4004, %v4011
      %v4014 = vshrl.u32 %v3870, 16
      %v4016 = vrot.slane %v4014, 7
      %v4017 = vrot.slane %v4016, 4
      %v4019 = vshrl.u32 %v3871, 16
      %v4021 = vrot.slane %v4019, 7
      %v4022 = vshll.u32 %v3871, 16
      %v4024 = vor.u32 %v4021, %v4022
      %v4025 = vsel %vm735, %v4017, %v4024
      %v4026 = vrot.slane %v4021, 4
      %v4028 = vshrl.u32 %v3872, 16
      %v4030 = vrot.slane %v4028, 7
      %v4031 = vshll.u32 %v3872, 16
      %v4033 = vor.u32 %v4030, %v4031
      %v4034 = vsel %vm735, %v4026, %v4033
      %v4036 = vshrl.u32 %v3873, 16
      %v4038 = vrot.slane %v4036, 7
      %v4039 = vrot.slane %v4038, 4
      %v4041 = vshrl.u32 %v3874, 16
      %v4043 = vrot.slane %v4041, 7
      %v4044 = vshll.u32 %v3874, 16
      %v4046 = vor.u32 %v4043, %v4044
      %v4047 = vsel %vm735, %v4039, %v4046
      %v4048 = vrot.slane %v4043, 4
      %v4050 = vshrl.u32 %v3875, 16
      %v4052 = vrot.slane %v4050, 7
      %v4053 = vshll.u32 %v3875, 16
      %v4055 = vor.u32 %v4052, %v4053
      %v4056 = vsel %vm735, %v4048, %v4055
      %v4058 = vshrl.u32 %v3876, 16
      %v4060 = vrot.slane %v4058, 7
      %v4061 = vrot.slane %v4060, 4
      %v4063 = vshrl.u32 %v3877, 16
      %v4065 = vrot.slane %v4063, 7
      %v4066 = vshll.u32 %v3877, 16
      %v4068 = vor.u32 %v4065, %v4066
      %v4069 = vsel %vm735, %v4061, %v4068
      %v4070 = vrot.slane %v4065, 4
      %v4072 = vshrl.u32 %v3878, 16
      %v4074 = vrot.slane %v4072, 7
      %v4075 = vshll.u32 %v3878, 16
      %v4077 = vor.u32 %v4074, %v4075
      %v4078 = vsel %vm735, %v4070, %v4077
      %v4080 = vshrl.u32 %v3879, 16
      %v4082 = vrot.slane %v4080, 7
      %v4083 = vrot.slane %v4082, 4
      %v4085 = vshrl.u32 %v3880, 16
      %v4087 = vrot.slane %v4085, 7
      %v4088 = vshll.u32 %v3880, 16
      %v4090 = vor.u32 %v4087, %v4088
      %v4091 = vsel %vm735, %v4083, %v4090
      %v4092 = vrot.slane %v4087, 4
      %v4094 = vshrl.u32 %v3881, 16
      %v4096 = vrot.slane %v4094, 7
      %v4097 = vshll.u32 %v3881, 16
      %v4099 = vor.u32 %v4096, %v4097
      %v4100 = vsel %vm735, %v4092, %v4099
      %v4102 = vshrl.u32 %v3882, 16
      %v4104 = vrot.slane %v4102, 7
      %v4105 = vrot.slane %v4104, 4
      %v4107 = vshrl.u32 %v3883, 16
      %v4109 = vrot.slane %v4107, 7
      %v4110 = vshll.u32 %v3883, 16
      %v4112 = vor.u32 %v4109, %v4110
      %v4113 = vsel %vm735, %v4105, %v4112
      %v4114 = vrot.slane %v4109, 4
      %v4116 = vshrl.u32 %v3884, 16
      %v4118 = vrot.slane %v4116, 7
      %v4119 = vshll.u32 %v3884, 16
      %v4121 = vor.u32 %v4118, %v4119
      %v4122 = vsel %vm735, %v4114, %v4121
      %v4124 = vshrl.u32 %v3885, 16
      %v4126 = vrot.slane %v4124, 7
      %v4127 = vrot.slane %v4126, 4
      %v4129 = vshrl.u32 %v3886, 16
      %v4131 = vrot.slane %v4129, 7
      %v4132 = vshll.u32 %v3886, 16
      %v4134 = vor.u32 %v4131, %v4132
      %v4135 = vsel %vm735, %v4127, %v4134
      %v4136 = vrot.slane %v4131, 4
      %v4138 = vshrl.u32 %v3887, 16
      %v4140 = vrot.slane %v4138, 7
      %v4141 = vshll.u32 %v3887, 16
      %v4143 = vor.u32 %v4140, %v4141
      %v4144 = vsel %vm735, %v4136, %v4143
      %v4146 = vshrl.u32 %v3888, 16
      %v4148 = vrot.slane %v4146, 7
      %v4149 = vrot.slane %v4148, 4
      %v4151 = vshrl.u32 %v3889, 16
      %v4153 = vrot.slane %v4151, 7
      %v4154 = vshll.u32 %v3889, 16
      %v4156 = vor.u32 %v4153, %v4154
      %v4157 = vsel %vm735, %v4149, %v4156
      %v4158 = vrot.slane %v4153, 4
      %v4160 = vshrl.u32 %v3890, 16
      %v4162 = vrot.slane %v4160, 7
      %v4163 = vshll.u32 %v3890, 16
      %v4165 = vor.u32 %v4162, %v4163
      %v4166 = vsel %vm735, %v4158, %v4165
      %v4168 = vshrl.u32 %v3891, 16
      %v4170 = vrot.slane %v4168, 7
      %v4171 = vrot.slane %v4170, 4
      %v4173 = vshrl.u32 %v3892, 16
      %v4175 = vrot.slane %v4173, 7
      %v4176 = vshll.u32 %v3892, 16
      %v4178 = vor.u32 %v4175, %v4176
      %v4179 = vsel %vm735, %v4171, %v4178
      %v4180 = vrot.slane %v4175, 4
      %v4182 = vshrl.u32 %v3893, 16
      %v4184 = vrot.slane %v4182, 7
      %v4185 = vshll.u32 %v3893, 16
      %v4187 = vor.u32 %v4184, %v4185
      %v4188 = vsel %vm735, %v4180, %v4187
      %v4190 = vshrl.u32 %v3894, 16
      %v4192 = vrot.slane %v4190, 7
      %v4193 = vrot.slane %v4192, 4
      %v4195 = vshrl.u32 %v3895, 16
      %v4197 = vrot.slane %v4195, 7
      %v4198 = vshll.u32 %v3895, 16
      %v4200 = vor.u32 %v4197, %v4198
      %v4201 = vsel %vm735, %v4193, %v4200
      %v4202 = vrot.slane %v4197, 4
      %v4204 = vshrl.u32 %v3896, 16
      %v4206 = vrot.slane %v4204, 7
      %v4207 = vshll.u32 %v3896, 16
      %v4209 = vor.u32 %v4206, %v4207
      %v4210 = vsel %vm735, %v4202, %v4209
      %v4212 = vshrl.u32 %v3897, 16
      %v4214 = vrot.slane %v4212, 7
      %v4215 = vrot.slane %v4214, 4
      %v4217 = vshrl.u32 %v3898, 16
      %v4219 = vrot.slane %v4217, 7
      %v4220 = vshll.u32 %v3898, 16
      %v4222 = vor.u32 %v4219, %v4220
      %v4223 = vsel %vm735, %v4215, %v4222
      %v4224 = vrot.slane %v4219, 4
      %v4226 = vshrl.u32 %v3899, 16
      %v4228 = vrot.slane %v4226, 7
      %v4229 = vshll.u32 %v3899, 16
      %v4231 = vor.u32 %v4228, %v4229
      %v4232 = vsel %vm735, %v4224, %v4231
      %v4234 = vshrl.u32 %v3900, 16
      %v4236 = vrot.slane %v4234, 7
      %v4237 = vrot.slane %v4236, 4
      %v4239 = vshrl.u32 %v3901, 16
      %v4241 = vrot.slane %v4239, 7
      %v4242 = vshll.u32 %v3901, 16
      %v4244 = vor.u32 %v4241, %v4242
      %v4245 = vsel %vm735, %v4237, %v4244
      %v4246 = vrot.slane %v4241, 4
      %v4248 = vshrl.u32 %v3902, 16
      %v4250 = vrot.slane %v4248, 7
      %v4251 = vshll.u32 %v3902, 16
      %v4253 = vor.u32 %v4250, %v4251
      %v4254 = vsel %vm735, %v4246, %v4253
      %s4255 = scalar_lea.vmem %s3, 384
      %v4256 = vld [vmem:[%s4255] sm:$0xf]
      %v4257 = vld [vmem:[%s4255 + $0x4] sm:$0xf]
      %v4258 = vld [vmem:[%s4255 + $0x8] sm:$0xf]
      %v4259 = vld [vmem:[%s4255 + $0xc] sm:$0xf]
      %v4260 = vld [vmem:[%s4255 + $0x10] sm:$0xf]
      %v4261 = vld [vmem:[%s4255 + $0x14] sm:$0xf]
      %v4262 = vld [vmem:[%s4255 + $0x18] sm:$0xf]
      %v4263 = vld [vmem:[%s4255 + $0x1c] sm:$0xf]
      %v4264 = vld [vmem:[%s4255 + $0x20] sm:$0xf]
      %v4265 = vld [vmem:[%s4255 + $0x24] sm:$0xf]
      %v4266 = vld [vmem:[%s4255 + $0x28] sm:$0xf]
      %v4267 = vld [vmem:[%s4255 + $0x2c] sm:$0xf]
      %v4268 = vld [vmem:[%s4255 + $0x30] sm:$0xf]
      %v4269 = vld [vmem:[%s4255 + $0x34] sm:$0xf]
      %v4270 = vld [vmem:[%s4255 + $0x38] sm:$0xf]
      %v4271 = vld [vmem:[%s4255 + $0x3c] sm:$0xf]
      %v4272 = vunpack.c.l.b16 %v3915
      %v4273 = vunpack.c.l.b16 %v3924
      %v4274 = vunpack.c.l.b16 %v3937
      %v4275 = vunpack.c.l.b16 %v3946
      %v4276 = vunpack.c.l.b16 %v3959
      %v4277 = vunpack.c.l.b16 %v3968
      %v4278 = vunpack.c.l.b16 %v3981
      %v4279 = vunpack.c.l.b16 %v3990
      %v4280 = vunpack.c.l.b16 %v4003
      %v4281 = vunpack.c.l.b16 %v4012
      %v4282 = vunpack.c.l.b16 %v4025
      %v4283 = vunpack.c.l.b16 %v4034
      %v4284 = vunpack.c.l.b16 %v4047
      %v4285 = vunpack.c.l.b16 %v4056
      %v4286 = vunpack.c.l.b16 %v4069
      %v4287 = vunpack.c.l.b16 %v4078
      %v4288 = vunpack.c.l.b16 %v4091
      %v4289 = vunpack.c.l.b16 %v4100
      %v4290 = vunpack.c.l.b16 %v4113
      %v4291 = vunpack.c.l.b16 %v4122
      %v4292 = vunpack.c.l.b16 %v4135
      %v4293 = vunpack.c.l.b16 %v4144
      %v4294 = vunpack.c.l.b16 %v4157
      %v4295 = vunpack.c.l.b16 %v4166
      %v4296 = vunpack.c.l.b16 %v4179
      %v4297 = vunpack.c.l.b16 %v4188
      %v4298 = vunpack.c.l.b16 %v4201
      %v4299 = vunpack.c.l.b16 %v4210
      %v4300 = vunpack.c.l.b16 %v4223
      %v4301 = vunpack.c.l.b16 %v4232
      %v4302 = vunpack.c.l.b16 %v4245
      %v4303 = vunpack.c.l.b16 %v4254
      %v4304 = vpack.c.b16 %v4273, %v4272
      %v4305 = vpack.c.b16 %v4275, %v4274
      %v4306 = vpack.c.b16 %v4277, %v4276
      %v4307 = vpack.c.b16 %v4279, %v4278
      %v4308 = vpack.c.b16 %v4281, %v4280
      %v4309 = vpack.c.b16 %v4283, %v4282
      %v4310 = vpack.c.b16 %v4285, %v4284
      %v4311 = vpack.c.b16 %v4287, %v4286
      %v4312 = vpack.c.b16 %v4289, %v4288
      %v4313 = vpack.c.b16 %v4291, %v4290
      %v4314 = vpack.c.b16 %v4293, %v4292
      %v4315 = vpack.c.b16 %v4295, %v4294
      %v4316 = vpack.c.b16 %v4297, %v4296
      %v4317 = vpack.c.b16 %v4299, %v4298
      %v4318 = vpack.c.b16 %v4301, %v4300
      %v4319 = vpack.c.b16 %v4303, %v4302
      %v4352 = vunpack.c.l.b16 %v4256
      %v4353 = vunpack.c.l.b16 %v4257
      %v4354 = vunpack.c.l.b16 %v4258
      %v4355 = vunpack.c.l.b16 %v4259
      %v4356 = vunpack.c.l.b16 %v4260
      %v4357 = vunpack.c.l.b16 %v4261
      %v4358 = vunpack.c.l.b16 %v4262
      %v4359 = vunpack.c.l.b16 %v4263
      %v4360 = vunpack.c.l.b16 %v4264
      %v4361 = vunpack.c.l.b16 %v4265
      %v4362 = vunpack.c.l.b16 %v4266
      %v4363 = vunpack.c.l.b16 %v4267
      %v4364 = vunpack.c.l.b16 %v4268
      %v4365 = vunpack.c.l.b16 %v4269
      %v4366 = vunpack.c.l.b16 %v4270
      %v4367 = vunpack.c.l.b16 %v4271
      %v4368 = vpack.c.b16 %v4353, %v4352
      %v4369 = vpack.c.b16 %v4355, %v4354
      %v4370 = vpack.c.b16 %v4357, %v4356
      %v4371 = vpack.c.b16 %v4359, %v4358
      %v4372 = vpack.c.b16 %v4361, %v4360
      %v4373 = vpack.c.b16 %v4363, %v4362
      %v4374 = vpack.c.b16 %v4365, %v4364
      %v4375 = vpack.c.b16 %v4367, %v4366
      %4384 = vmatpush.bf16.msra.mxu0 %v4375
      %4385 = vmatpush.bf16.msra.mxu0 %v4374
      %4386 = vmatpush.bf16.msra.mxu0 %v4373
      %4387 = vmatpush.bf16.msra.mxu0 %v4372
      %4388 = vmatpush.bf16.msra.mxu0 %v4371
      %4389 = vmatpush.bf16.msra.mxu0 %v4370
      %4390 = vmatpush.bf16.msra.mxu0 %v4369
      %4391 = vmatpush.bf16.msra.mxu0 %v4368
      %4392 = vmatmul.bf16.gmra.mxu0 %v4304
      %v4393 = vpop.f32.mrf.mxu0
      %v4394 = vadd.f32 0.0, %v4393
      %v4395 = vpop.f32.mrf.mxu0
      %v4396 = vadd.f32 0.0, %v4395
      %4397 = vmatmul.bf16.gmra.mxu0 %v4305
      %v4398 = vpop.f32.mrf.mxu0
      %v4399 = vadd.f32 0.0, %v4398
      %v4400 = vpop.f32.mrf.mxu0
      %v4401 = vadd.f32 0.0, %v4400
      %4402 = vmatmul.bf16.gmra.mxu0 %v4306
      %v4403 = vpop.f32.mrf.mxu0
      %v4404 = vadd.f32 0.0, %v4403
      %v4405 = vpop.f32.mrf.mxu0
      %v4406 = vadd.f32 0.0, %v4405
      %4407 = vmatmul.bf16.gmra.mxu0 %v4307
      %v4408 = vpop.f32.mrf.mxu0
      %v4409 = vadd.f32 0.0, %v4408
      %v4410 = vpop.f32.mrf.mxu0
      %v4411 = vadd.f32 0.0, %v4410
      %4412 = vmatmul.bf16.gmra.mxu0 %v4308
      %v4413 = vpop.f32.mrf.mxu0
      %v4414 = vadd.f32 0.0, %v4413
      %v4415 = vpop.f32.mrf.mxu0
      %v4416 = vadd.f32 0.0, %v4415
      %4417 = vmatmul.bf16.gmra.mxu0 %v4309
      %v4418 = vpop.f32.mrf.mxu0
      %v4419 = vadd.f32 0.0, %v4418
      %v4420 = vpop.f32.mrf.mxu0
      %v4421 = vadd.f32 0.0, %v4420
      %4422 = vmatmul.bf16.gmra.mxu0 %v4310
      %v4423 = vpop.f32.mrf.mxu0
      %v4424 = vadd.f32 0.0, %v4423
      %v4425 = vpop.f32.mrf.mxu0
      %v4426 = vadd.f32 0.0, %v4425
      %4427 = vmatmul.bf16.gmra.mxu0 %v4311
      %v4428 = vpop.f32.mrf.mxu0
      %v4429 = vadd.f32 0.0, %v4428
      %v4430 = vpop.f32.mrf.mxu0
      %v4431 = vadd.f32 0.0, %v4430
      %4432 = vmatmul.bf16.gmra.mxu0 %v4312
      %v4433 = vpop.f32.mrf.mxu0
      %v4434 = vadd.f32 0.0, %v4433
      %v4435 = vpop.f32.mrf.mxu0
      %v4436 = vadd.f32 0.0, %v4435
      %4437 = vmatmul.bf16.gmra.mxu0 %v4313
      %v4438 = vpop.f32.mrf.mxu0
      %v4439 = vadd.f32 0.0, %v4438
      %v4440 = vpop.f32.mrf.mxu0
      %v4441 = vadd.f32 0.0, %v4440
      %4442 = vmatmul.bf16.gmra.mxu0 %v4314
      %v4443 = vpop.f32.mrf.mxu0
      %v4444 = vadd.f32 0.0, %v4443
      %v4445 = vpop.f32.mrf.mxu0
      %v4446 = vadd.f32 0.0, %v4445
      %4447 = vmatmul.bf16.gmra.mxu0 %v4315
      %v4448 = vpop.f32.mrf.mxu0
      %v4449 = vadd.f32 0.0, %v4448
      %v4450 = vpop.f32.mrf.mxu0
      %v4451 = vadd.f32 0.0, %v4450
      %4452 = vmatmul.bf16.gmra.mxu0 %v4316
      %v4453 = vpop.f32.mrf.mxu0
      %v4454 = vadd.f32 0.0, %v4453
      %v4455 = vpop.f32.mrf.mxu0
      %v4456 = vadd.f32 0.0, %v4455
      %4457 = vmatmul.bf16.gmra.mxu0 %v4317
      %v4458 = vpop.f32.mrf.mxu0
      %v4459 = vadd.f32 0.0, %v4458
      %v4460 = vpop.f32.mrf.mxu0
      %v4461 = vadd.f32 0.0, %v4460
      %4462 = vmatmul.bf16.gmra.mxu0 %v4318
      %v4463 = vpop.f32.mrf.mxu0
      %v4464 = vadd.f32 0.0, %v4463
      %v4465 = vpop.f32.mrf.mxu0
      %v4466 = vadd.f32 0.0, %v4465
      %4467 = vmatmul.bf16.gmra.mxu0 %v4319
      %v4468 = vpop.f32.mrf.mxu0
      %v4469 = vadd.f32 0.0, %v4468
      %v4470 = vpop.f32.mrf.mxu0
      %v4471 = vadd.f32 0.0, %v4470
      %4472 = vdwg.mxu0
      %v4473 = vadd.f32 %v3822, %v4394
      %v4474 = vadd.f32 %v3823, %v4396
      %v4475 = vadd.f32 %v3824, %v4399
      %v4476 = vadd.f32 %v3825, %v4401
      %v4477 = vadd.f32 %v3826, %v4404
      %v4478 = vadd.f32 %v3827, %v4406
      %v4479 = vadd.f32 %v3828, %v4409
      %v4480 = vadd.f32 %v3829, %v4411
      %v4481 = vadd.f32 %v3830, %v4414
      %v4482 = vadd.f32 %v3831, %v4416
      %v4483 = vadd.f32 %v3832, %v4419
      %v4484 = vadd.f32 %v3833, %v4421
      %v4485 = vadd.f32 %v3834, %v4424
      %v4486 = vadd.f32 %v3835, %v4426
      %v4487 = vadd.f32 %v3836, %v4429
      %v4488 = vadd.f32 %v3837, %v4431
      %v4489 = vadd.f32 %v3838, %v4434
      %v4490 = vadd.f32 %v3839, %v4436
      %v4491 = vadd.f32 %v3840, %v4439
      %v4492 = vadd.f32 %v3841, %v4441
      %v4493 = vadd.f32 %v3842, %v4444
      %v4494 = vadd.f32 %v3843, %v4446
      %v4495 = vadd.f32 %v3844, %v4449
      %v4496 = vadd.f32 %v3845, %v4451
      %v4497 = vadd.f32 %v3846, %v4454
      %v4498 = vadd.f32 %v3847, %v4456
      %v4499 = vadd.f32 %v3848, %v4459
      %v4500 = vadd.f32 %v3849, %v4461
      %v4501 = vadd.f32 %v3850, %v4464
      %v4502 = vadd.f32 %v3851, %v4466
      %v4503 = vadd.f32 %v3852, %v4469
      %v4504 = vadd.f32 %v3853, %v4471
      %s4505 = scalar_lea.vmem %s3, 448
      %v4506 = vld [vmem:[%s4505] sm:$0xf]
      %v4507 = vld [vmem:[%s4505 + $0x4] sm:$0xf]
      %v4508 = vld [vmem:[%s4505 + $0x8] sm:$0xf]
      %v4509 = vld [vmem:[%s4505 + $0xc] sm:$0xf]
      %v4510 = vld [vmem:[%s4505 + $0x10] sm:$0xf]
      %v4511 = vld [vmem:[%s4505 + $0x14] sm:$0xf]
      %v4512 = vld [vmem:[%s4505 + $0x18] sm:$0xf]
      %v4513 = vld [vmem:[%s4505 + $0x1c] sm:$0xf]
      %v4514 = vld [vmem:[%s4505 + $0x20] sm:$0xf]
      %v4515 = vld [vmem:[%s4505 + $0x24] sm:$0xf]
      %v4516 = vld [vmem:[%s4505 + $0x28] sm:$0xf]
      %v4517 = vld [vmem:[%s4505 + $0x2c] sm:$0xf]
      %v4518 = vld [vmem:[%s4505 + $0x30] sm:$0xf]
      %v4519 = vld [vmem:[%s4505 + $0x34] sm:$0xf]
      %v4520 = vld [vmem:[%s4505 + $0x38] sm:$0xf]
      %v4521 = vld [vmem:[%s4505 + $0x3c] sm:$0xf]
      %v4554 = vunpack.c.l.b16 %v3856
      %v4555 = vunpack.c.l.b16 %v3857
      %v4556 = vunpack.c.l.b16 %v3859
      %v4557 = vunpack.c.l.b16 %v3860
      %v4558 = vunpack.c.l.b16 %v3862
      %v4559 = vunpack.c.l.b16 %v3863
      %v4560 = vunpack.c.l.b16 %v3865
      %v4561 = vunpack.c.l.b16 %v3866
      %v4562 = vunpack.c.l.b16 %v3868
      %v4563 = vunpack.c.l.b16 %v3869
      %v4564 = vunpack.c.l.b16 %v3871
      %v4565 = vunpack.c.l.b16 %v3872
      %v4566 = vunpack.c.l.b16 %v3874
      %v4567 = vunpack.c.l.b16 %v3875
      %v4568 = vunpack.c.l.b16 %v3877
      %v4569 = vunpack.c.l.b16 %v3878
      %v4570 = vunpack.c.l.b16 %v3880
      %v4571 = vunpack.c.l.b16 %v3881
      %v4572 = vunpack.c.l.b16 %v3883
      %v4573 = vunpack.c.l.b16 %v3884
      %v4574 = vunpack.c.l.b16 %v3886
      %v4575 = vunpack.c.l.b16 %v3887
      %v4576 = vunpack.c.l.b16 %v3889
      %v4577 = vunpack.c.l.b16 %v3890
      %v4578 = vunpack.c.l.b16 %v3892
      %v4579 = vunpack.c.l.b16 %v3893
      %v4580 = vunpack.c.l.b16 %v3895
      %v4581 = vunpack.c.l.b16 %v3896
      %v4582 = vunpack.c.l.b16 %v3898
      %v4583 = vunpack.c.l.b16 %v3899
      %v4584 = vunpack.c.l.b16 %v3901
      %v4585 = vunpack.c.l.b16 %v3902
      %v4586 = vpack.c.b16 %v4555, %v4554
      %v4587 = vpack.c.b16 %v4557, %v4556
      %v4588 = vpack.c.b16 %v4559, %v4558
      %v4589 = vpack.c.b16 %v4561, %v4560
      %v4590 = vpack.c.b16 %v4563, %v4562
      %v4591 = vpack.c.b16 %v4565, %v4564
      %v4592 = vpack.c.b16 %v4567, %v4566
      %v4593 = vpack.c.b16 %v4569, %v4568
      %v4594 = vpack.c.b16 %v4571, %v4570
      %v4595 = vpack.c.b16 %v4573, %v4572
      %v4596 = vpack.c.b16 %v4575, %v4574
      %v4597 = vpack.c.b16 %v4577, %v4576
      %v4598 = vpack.c.b16 %v4579, %v4578
      %v4599 = vpack.c.b16 %v4581, %v4580
      %v4600 = vpack.c.b16 %v4583, %v4582
      %v4601 = vpack.c.b16 %v4585, %v4584
      %v4634 = vunpack.c.l.b16 %v4506
      %v4635 = vunpack.c.l.b16 %v4507
      %v4636 = vunpack.c.l.b16 %v4508
      %v4637 = vunpack.c.l.b16 %v4509
      %v4638 = vunpack.c.l.b16 %v4510
      %v4639 = vunpack.c.l.b16 %v4511
      %v4640 = vunpack.c.l.b16 %v4512
      %v4641 = vunpack.c.l.b16 %v4513
      %v4642 = vunpack.c.l.b16 %v4514
      %v4643 = vunpack.c.l.b16 %v4515
      %v4644 = vunpack.c.l.b16 %v4516
      %v4645 = vunpack.c.l.b16 %v4517
      %v4646 = vunpack.c.l.b16 %v4518
      %v4647 = vunpack.c.l.b16 %v4519
      %v4648 = vunpack.c.l.b16 %v4520
      %v4649 = vunpack.c.l.b16 %v4521
      %v4650 = vpack.c.b16 %v4635, %v4634
      %v4651 = vpack.c.b16 %v4637, %v4636
      %v4652 = vpack.c.b16 %v4639, %v4638
      %v4653 = vpack.c.b16 %v4641, %v4640
      %v4654 = vpack.c.b16 %v4643, %v4642
      %v4655 = vpack.c.b16 %v4645, %v4644
      %v4656 = vpack.c.b16 %v4647, %v4646
      %v4657 = vpack.c.b16 %v4649, %v4648
      %4666 = vmatpush.bf16.msra.mxu0 %v4657
      %4667 = vmatpush.bf16.msra.mxu0 %v4656
      %4668 = vmatpush.bf16.msra.mxu0 %v4655
      %4669 = vmatpush.bf16.msra.mxu0 %v4654
      %4670 = vmatpush.bf16.msra.mxu0 %v4653
      %4671 = vmatpush.bf16.msra.mxu0 %v4652
      %4672 = vmatpush.bf16.msra.mxu0 %v4651
      %4673 = vmatpush.bf16.msra.mxu0 %v4650
      %4674 = vmatmul.bf16.gmra.mxu0 %v4586
      %v4675 = vpop.f32.mrf.mxu0
      %v4676 = vadd.f32 0.0, %v4675
      %v4677 = vpop.f32.mrf.mxu0
      %v4678 = vadd.f32 0.0, %v4677
      %4679 = vmatmul.bf16.gmra.mxu0 %v4587
      %v4680 = vpop.f32.mrf.mxu0
      %v4681 = vadd.f32 0.0, %v4680
      %v4682 = vpop.f32.mrf.mxu0
      %v4683 = vadd.f32 0.0, %v4682
      %4684 = vmatmul.bf16.gmra.mxu0 %v4588
      %v4685 = vpop.f32.mrf.mxu0
      %v4686 = vadd.f32 0.0, %v4685
      %v4687 = vpop.f32.mrf.mxu0
      %v4688 = vadd.f32 0.0, %v4687
      %4689 = vmatmul.bf16.gmra.mxu0 %v4589
      %v4690 = vpop.f32.mrf.mxu0
      %v4691 = vadd.f32 0.0, %v4690
      %v4692 = vpop.f32.mrf.mxu0
      %v4693 = vadd.f32 0.0, %v4692
      %4694 = vmatmul.bf16.gmra.mxu0 %v4590
      %v4695 = vpop.f32.mrf.mxu0
      %v4696 = vadd.f32 0.0, %v4695
      %v4697 = vpop.f32.mrf.mxu0
      %v4698 = vadd.f32 0.0, %v4697
      %4699 = vmatmul.bf16.gmra.mxu0 %v4591
      %v4700 = vpop.f32.mrf.mxu0
      %v4701 = vadd.f32 0.0, %v4700
      %v4702 = vpop.f32.mrf.mxu0
      %v4703 = vadd.f32 0.0, %v4702
      %4704 = vmatmul.bf16.gmra.mxu0 %v4592
      %v4705 = vpop.f32.mrf.mxu0
      %v4706 = vadd.f32 0.0, %v4705
      %v4707 = vpop.f32.mrf.mxu0
      %v4708 = vadd.f32 0.0, %v4707
      %4709 = vmatmul.bf16.gmra.mxu0 %v4593
      %v4710 = vpop.f32.mrf.mxu0
      %v4711 = vadd.f32 0.0, %v4710
      %v4712 = vpop.f32.mrf.mxu0
      %v4713 = vadd.f32 0.0, %v4712
      %4714 = vmatmul.bf16.gmra.mxu0 %v4594
      %v4715 = vpop.f32.mrf.mxu0
      %v4716 = vadd.f32 0.0, %v4715
      %v4717 = vpop.f32.mrf.mxu0
      %v4718 = vadd.f32 0.0, %v4717
      %4719 = vmatmul.bf16.gmra.mxu0 %v4595
      %v4720 = vpop.f32.mrf.mxu0
      %v4721 = vadd.f32 0.0, %v4720
      %v4722 = vpop.f32.mrf.mxu0
      %v4723 = vadd.f32 0.0, %v4722
      %4724 = vmatmul.bf16.gmra.mxu0 %v4596
      %v4725 = vpop.f32.mrf.mxu0
      %v4726 = vadd.f32 0.0, %v4725
      %v4727 = vpop.f32.mrf.mxu0
      %v4728 = vadd.f32 0.0, %v4727
      %4729 = vmatmul.bf16.gmra.mxu0 %v4597
      %v4730 = vpop.f32.mrf.mxu0
      %v4731 = vadd.f32 0.0, %v4730
      %v4732 = vpop.f32.mrf.mxu0
      %v4733 = vadd.f32 0.0, %v4732
      %4734 = vmatmul.bf16.gmra.mxu0 %v4598
      %v4735 = vpop.f32.mrf.mxu0
      %v4736 = vadd.f32 0.0, %v4735
      %v4737 = vpop.f32.mrf.mxu0
      %v4738 = vadd.f32 0.0, %v4737
      %4739 = vmatmul.bf16.gmra.mxu0 %v4599
      %v4740 = vpop.f32.mrf.mxu0
      %v4741 = vadd.f32 0.0, %v4740
      %v4742 = vpop.f32.mrf.mxu0
      %v4743 = vadd.f32 0.0, %v4742
      %4744 = vmatmul.bf16.gmra.mxu0 %v4600
      %v4745 = vpop.f32.mrf.mxu0
      %v4746 = vadd.f32 0.0, %v4745
      %v4747 = vpop.f32.mrf.mxu0
      %v4748 = vadd.f32 0.0, %v4747
      %4749 = vmatmul.bf16.gmra.mxu0 %v4601
      %v4750 = vpop.f32.mrf.mxu0
      %v4751 = vadd.f32 0.0, %v4750
      %v4752 = vpop.f32.mrf.mxu0
      %v4753 = vadd.f32 0.0, %v4752
      %4754 = vdwg.mxu0
      %v4755 = vadd.f32 %v4473, %v4676
      %v4756 = vadd.f32 %v4474, %v4678
      %v4757 = vadd.f32 %v4475, %v4681
      %v4758 = vadd.f32 %v4476, %v4683
      %v4759 = vadd.f32 %v4477, %v4686
      %v4760 = vadd.f32 %v4478, %v4688
      %v4761 = vadd.f32 %v4479, %v4691
      %v4762 = vadd.f32 %v4480, %v4693
      %v4763 = vadd.f32 %v4481, %v4696
      %v4764 = vadd.f32 %v4482, %v4698
      %v4765 = vadd.f32 %v4483, %v4701
      %v4766 = vadd.f32 %v4484, %v4703
      %v4767 = vadd.f32 %v4485, %v4706
      %v4768 = vadd.f32 %v4486, %v4708
      %v4769 = vadd.f32 %v4487, %v4711
      %v4770 = vadd.f32 %v4488, %v4713
      %v4771 = vadd.f32 %v4489, %v4716
      %v4772 = vadd.f32 %v4490, %v4718
      %v4773 = vadd.f32 %v4491, %v4721
      %v4774 = vadd.f32 %v4492, %v4723
      %v4775 = vadd.f32 %v4493, %v4726
      %v4776 = vadd.f32 %v4494, %v4728
      %v4777 = vadd.f32 %v4495, %v4731
      %v4778 = vadd.f32 %v4496, %v4733
      %v4779 = vadd.f32 %v4497, %v4736
      %v4780 = vadd.f32 %v4498, %v4738
      %v4781 = vadd.f32 %v4499, %v4741
      %v4782 = vadd.f32 %v4500, %v4743
      %v4783 = vadd.f32 %v4501, %v4746
      %v4784 = vadd.f32 %v4502, %v4748
      %v4785 = vadd.f32 %v4503, %v4751
      %v4786 = vadd.f32 %v4504, %v4753
      %v4787 = vld [vmem:[%s3854 + $0x8] sm:$0xf]
      %v4788 = vld [vmem:[%s3854 + $0xc] sm:$0xf]
      %v4789 = vld [vmem:[%s3854 + $0x10] sm:$0x1]
      %v4790 = vld [vmem:[%s3854 + $0x20] sm:$0xf]
      %v4791 = vld [vmem:[%s3854 + $0x24] sm:$0xf]
      %v4792 = vld [vmem:[%s3854 + $0x28] sm:$0x1]
      %v4793 = vld [vmem:[%s3854 + $0x38] sm:$0xf]
      %v4794 = vld [vmem:[%s3854 + $0x3c] sm:$0xf]
      %v4795 = vld [vmem:[%s3854 + $0x40] sm:$0x1]
      %v4796 = vld [vmem:[%s3854 + $0x50] sm:$0xf]
      %v4797 = vld [vmem:[%s3854 + $0x54] sm:$0xf]
      %v4798 = vld [vmem:[%s3854 + $0x58] sm:$0x1]
      %v4799 = vld [vmem:[%s3854 + $0x68] sm:$0xf]
      %v4800 = vld [vmem:[%s3854 + $0x6c] sm:$0xf]
      %v4801 = vld [vmem:[%s3854 + $0x70] sm:$0x1]
      %v4802 = vld [vmem:[%s3854 + $0x80] sm:$0xf]
      %v4803 = vld [vmem:[%s3854 + $0x84] sm:$0xf]
      %v4804 = vld [vmem:[%s3854 + $0x88] sm:$0x1]
      %v4805 = vld [vmem:[%s3854 + $0x98] sm:$0xf]
      %v4806 = vld [vmem:[%s3854 + $0x9c] sm:$0xf]
      %v4807 = vld [vmem:[%s3854 + $0xa0] sm:$0x1]
      %v4808 = vld [vmem:[%s3854 + $0xb0] sm:$0xf]
      %v4809 = vld [vmem:[%s3854 + $0xb4] sm:$0xf]
      %v4810 = vld [vmem:[%s3854 + $0xb8] sm:$0x1]
      %v4811 = vld [vmem:[%s3854 + $0xc8] sm:$0xf]
      %v4812 = vld [vmem:[%s3854 + $0xcc] sm:$0xf]
      %v4813 = vld [vmem:[%s3854 + $0xd0] sm:$0x1]
      %v4814 = vld [vmem:[%s3854 + $0xe0] sm:$0xf]
      %v4815 = vld [vmem:[%s3854 + $0xe4] sm:$0xf]
      %v4816 = vld [vmem:[%s3854 + $0xe8] sm:$0x1]
      %v4817 = vld [vmem:[%s3854 + $0xf8] sm:$0xf]
      %v4818 = vld [vmem:[%s3854 + $0xfc] sm:$0xf]
      %v4819 = vld [vmem:[%s3854 + $0x100] sm:$0x1]
      %v4820 = vld [vmem:[%s3854 + $0x110] sm:$0xf]
      %v4821 = vld [vmem:[%s3854 + $0x114] sm:$0xf]
      %v4822 = vld [vmem:[%s3854 + $0x118] sm:$0x1]
      %v4823 = vld [vmem:[%s3854 + $0x128] sm:$0xf]
      %v4824 = vld [vmem:[%s3854 + $0x12c] sm:$0xf]
      %v4825 = vld [vmem:[%s3854 + $0x130] sm:$0x1]
      %v4826 = vld [vmem:[%s3854 + $0x140] sm:$0xf]
      %v4827 = vld [vmem:[%s3854 + $0x144] sm:$0xf]
      %v4828 = vld [vmem:[%s3854 + $0x148] sm:$0x1]
      %v4829 = vld [vmem:[%s3854 + $0x158] sm:$0xf]
      %v4830 = vld [vmem:[%s3854 + $0x15c] sm:$0xf]
      %v4831 = vld [vmem:[%s3854 + $0x160] sm:$0x1]
      %v4832 = vld [vmem:[%s3854 + $0x170] sm:$0xf]
      %v4833 = vld [vmem:[%s3854 + $0x174] sm:$0xf]
      %v4834 = vld [vmem:[%s3854 + $0x178] sm:$0x1]
      %v4836 = vshrl.u32 %v4787, 16
      %v4838 = vrot.slane %v4836, 4
      %v4839 = vshll.u32 %v4787, 16
      %v4841 = vrot.slane %v4839, 5
      %v4842 = vor.u32 %v4838, %v4841
      %v4843 = vrot.slane %v4842, 4
      %v4845 = vshll.u32 %v4788, 16
      %v4847 = vrot.slane %v4845, 5
      %v4848 = vsel %vm1605, %v4843, %v4847
      %v4849 = vshrl.u32 %v4788, 16
      %v4851 = vrot.slane %v4849, 4
      %v4852 = vor.u32 %v4851, %v4847
      %v4853 = vrot.slane %v4852, 4
      %v4855 = vshll.u32 %v4789, 16
      %v4857 = vrot.slane %v4855, 5
      %v4858 = vsel %vm1605, %v4853, %v4857
      %v4860 = vshrl.u32 %v4790, 16
      %v4862 = vrot.slane %v4860, 4
      %v4863 = vshll.u32 %v4790, 16
      %v4865 = vrot.slane %v4863, 5
      %v4866 = vor.u32 %v4862, %v4865
      %v4867 = vrot.slane %v4866, 4
      %v4869 = vshll.u32 %v4791, 16
      %v4871 = vrot.slane %v4869, 5
      %v4872 = vsel %vm1605, %v4867, %v4871
      %v4873 = vshrl.u32 %v4791, 16
      %v4875 = vrot.slane %v4873, 4
      %v4876 = vor.u32 %v4875, %v4871
      %v4877 = vrot.slane %v4876, 4
      %v4879 = vshll.u32 %v4792, 16
      %v4881 = vrot.slane %v4879, 5
      %v4882 = vsel %vm1605, %v4877, %v4881
      %v4884 = vshrl.u32 %v4793, 16
      %v4886 = vrot.slane %v4884, 4
      %v4887 = vshll.u32 %v4793, 16
      %v4889 = vrot.slane %v4887, 5
      %v4890 = vor.u32 %v4886, %v4889
      %v4891 = vrot.slane %v4890, 4
      %v4893 = vshll.u32 %v4794, 16
      %v4895 = vrot.slane %v4893, 5
      %v4896 = vsel %vm1605, %v4891, %v4895
      %v4897 = vshrl.u32 %v4794, 16
      %v4899 = vrot.slane %v4897, 4
      %v4900 = vor.u32 %v4899, %v4895
      %v4901 = vrot.slane %v4900, 4
      %v4903 = vshll.u32 %v4795, 16
      %v4905 = vrot.slane %v4903, 5
      %v4906 = vsel %vm1605, %v4901, %v4905
      %v4908 = vshrl.u32 %v4796, 16
      %v4910 = vrot.slane %v4908, 4
      %v4911 = vshll.u32 %v4796, 16
      %v4913 = vrot.slane %v4911, 5
      %v4914 = vor.u32 %v4910, %v4913
      %v4915 = vrot.slane %v4914, 4
      %v4917 = vshll.u32 %v4797, 16
      %v4919 = vrot.slane %v4917, 5
      %v4920 = vsel %vm1605, %v4915, %v4919
      %v4921 = vshrl.u32 %v4797, 16
      %v4923 = vrot.slane %v4921, 4
      %v4924 = vor.u32 %v4923, %v4919
      %v4925 = vrot.slane %v4924, 4
      %v4927 = vshll.u32 %v4798, 16
      %v4929 = vrot.slane %v4927, 5
      %v4930 = vsel %vm1605, %v4925, %v4929
      %v4932 = vshrl.u32 %v4799, 16
      %v4934 = vrot.slane %v4932, 4
      %v4935 = vshll.u32 %v4799, 16
      %v4937 = vrot.slane %v4935, 5
      %v4938 = vor.u32 %v4934, %v4937
      %v4939 = vrot.slane %v4938, 4
      %v4941 = vshll.u32 %v4800, 16
      %v4943 = vrot.slane %v4941, 5
      %v4944 = vsel %vm1605, %v4939, %v4943
      %v4945 = vshrl.u32 %v4800, 16
      %v4947 = vrot.slane %v4945, 4
      %v4948 = vor.u32 %v4947, %v4943
      %v4949 = vrot.slane %v4948, 4
      %v4951 = vshll.u32 %v4801, 16
      %v4953 = vrot.slane %v4951, 5
      %v4954 = vsel %vm1605, %v4949, %v4953
      %v4956 = vshrl.u32 %v4802, 16
      %v4958 = vrot.slane %v4956, 4
      %v4959 = vshll.u32 %v4802, 16
      %v4961 = vrot.slane %v4959, 5
      %v4962 = vor.u32 %v4958, %v4961
      %v4963 = vrot.slane %v4962, 4
      %v4965 = vshll.u32 %v4803, 16
      %v4967 = vrot.slane %v4965, 5
      %v4968 = vsel %vm1605, %v4963, %v4967
      %v4969 = vshrl.u32 %v4803, 16
      %v4971 = vrot.slane %v4969, 4
      %v4972 = vor.u32 %v4971, %v4967
      %v4973 = vrot.slane %v4972, 4
      %v4975 = vshll.u32 %v4804, 16
      %v4977 = vrot.slane %v4975, 5
      %v4978 = vsel %vm1605, %v4973, %v4977
      %v4980 = vshrl.u32 %v4805, 16
      %v4982 = vrot.slane %v4980, 4
      %v4983 = vshll.u32 %v4805, 16
      %v4985 = vrot.slane %v4983, 5
      %v4986 = vor.u32 %v4982, %v4985
      %v4987 = vrot.slane %v4986, 4
      %v4989 = vshll.u32 %v4806, 16
      %v4991 = vrot.slane %v4989, 5
      %v4992 = vsel %vm1605, %v4987, %v4991
      %v4993 = vshrl.u32 %v4806, 16
      %v4995 = vrot.slane %v4993, 4
      %v4996 = vor.u32 %v4995, %v4991
      %v4997 = vrot.slane %v4996, 4
      %v4999 = vshll.u32 %v4807, 16
      %v5001 = vrot.slane %v4999, 5
      %v5002 = vsel %vm1605, %v4997, %v5001
      %v5004 = vshrl.u32 %v4808, 16
      %v5006 = vrot.slane %v5004, 4
      %v5007 = vshll.u32 %v4808, 16
      %v5009 = vrot.slane %v5007, 5
      %v5010 = vor.u32 %v5006, %v5009
      %v5011 = vrot.slane %v5010, 4
      %v5013 = vshll.u32 %v4809, 16
      %v5015 = vrot.slane %v5013, 5
      %v5016 = vsel %vm1605, %v5011, %v5015
      %v5017 = vshrl.u32 %v4809, 16
      %v5019 = vrot.slane %v5017, 4
      %v5020 = vor.u32 %v5019, %v5015
      %v5021 = vrot.slane %v5020, 4
      %v5023 = vshll.u32 %v4810, 16
      %v5025 = vrot.slane %v5023, 5
      %v5026 = vsel %vm1605, %v5021, %v5025
      %v5028 = vshrl.u32 %v4811, 16
      %v5030 = vrot.slane %v5028, 4
      %v5031 = vshll.u32 %v4811, 16
      %v5033 = vrot.slane %v5031, 5
      %v5034 = vor.u32 %v5030, %v5033
      %v5035 = vrot.slane %v5034, 4
      %v5037 = vshll.u32 %v4812, 16
      %v5039 = vrot.slane %v5037, 5
      %v5040 = vsel %vm1605, %v5035, %v5039
      %v5041 = vshrl.u32 %v4812, 16
      %v5043 = vrot.slane %v5041, 4
      %v5044 = vor.u32 %v5043, %v5039
      %v5045 = vrot.slane %v5044, 4
      %v5047 = vshll.u32 %v4813, 16
      %v5049 = vrot.slane %v5047, 5
      %v5050 = vsel %vm1605, %v5045, %v5049
      %v5052 = vshrl.u32 %v4814, 16
      %v5054 = vrot.slane %v5052, 4
      %v5055 = vshll.u32 %v4814, 16
      %v5057 = vrot.slane %v5055, 5
      %v5058 = vor.u32 %v5054, %v5057
      %v5059 = vrot.slane %v5058, 4
      %v5061 = vshll.u32 %v4815, 16
      %v5063 = vrot.slane %v5061, 5
      %v5064 = vsel %vm1605, %v5059, %v5063
      %v5065 = vshrl.u32 %v4815, 16
      %v5067 = vrot.slane %v5065, 4
      %v5068 = vor.u32 %v5067, %v5063
      %v5069 = vrot.slane %v5068, 4
      %v5071 = vshll.u32 %v4816, 16
      %v5073 = vrot.slane %v5071, 5
      %v5074 = vsel %vm1605, %v5069, %v5073
      %v5076 = vshrl.u32 %v4817, 16
      %v5078 = vrot.slane %v5076, 4
      %v5079 = vshll.u32 %v4817, 16
      %v5081 = vrot.slane %v5079, 5
      %v5082 = vor.u32 %v5078, %v5081
      %v5083 = vrot.slane %v5082, 4
      %v5085 = vshll.u32 %v4818, 16
      %v5087 = vrot.slane %v5085, 5
      %v5088 = vsel %vm1605, %v5083, %v5087
      %v5089 = vshrl.u32 %v4818, 16
      %v5091 = vrot.slane %v5089, 4
      %v5092 = vor.u32 %v5091, %v5087
      %v5093 = vrot.slane %v5092, 4
      %v5095 = vshll.u32 %v4819, 16
      %v5097 = vrot.slane %v5095, 5
      %v5098 = vsel %vm1605, %v5093, %v5097
      %v5100 = vshrl.u32 %v4820, 16
      %v5102 = vrot.slane %v5100, 4
      %v5103 = vshll.u32 %v4820, 16
      %v5105 = vrot.slane %v5103, 5
      %v5106 = vor.u32 %v5102, %v5105
      %v5107 = vrot.slane %v5106, 4
      %v5109 = vshll.u32 %v4821, 16
      %v5111 = vrot.slane %v5109, 5
      %v5112 = vsel %vm1605, %v5107, %v5111
      %v5113 = vshrl.u32 %v4821, 16
      %v5115 = vrot.slane %v5113, 4
      %v5116 = vor.u32 %v5115, %v5111
      %v5117 = vrot.slane %v5116, 4
      %v5119 = vshll.u32 %v4822, 16
      %v5121 = vrot.slane %v5119, 5
      %v5122 = vsel %vm1605, %v5117, %v5121
      %v5124 = vshrl.u32 %v4823, 16
      %v5126 = vrot.slane %v5124, 4
      %v5127 = vshll.u32 %v4823, 16
      %v5129 = vrot.slane %v5127, 5
      %v5130 = vor.u32 %v5126, %v5129
      %v5131 = vrot.slane %v5130, 4
      %v5133 = vshll.u32 %v4824, 16
      %v5135 = vrot.slane %v5133, 5
      %v5136 = vsel %vm1605, %v5131, %v5135
      %v5137 = vshrl.u32 %v4824, 16
      %v5139 = vrot.slane %v5137, 4
      %v5140 = vor.u32 %v5139, %v5135
      %v5141 = vrot.slane %v5140, 4
      %v5143 = vshll.u32 %v4825, 16
      %v5145 = vrot.slane %v5143, 5
      %v5146 = vsel %vm1605, %v5141, %v5145
      %v5148 = vshrl.u32 %v4826, 16
      %v5150 = vrot.slane %v5148, 4
      %v5151 = vshll.u32 %v4826, 16
      %v5153 = vrot.slane %v5151, 5
      %v5154 = vor.u32 %v5150, %v5153
      %v5155 = vrot.slane %v5154, 4
      %v5157 = vshll.u32 %v4827, 16
      %v5159 = vrot.slane %v5157, 5
      %v5160 = vsel %vm1605, %v5155, %v5159
      %v5161 = vshrl.u32 %v4827, 16
      %v5163 = vrot.slane %v5161, 4
      %v5164 = vor.u32 %v5163, %v5159
      %v5165 = vrot.slane %v5164, 4
      %v5167 = vshll.u32 %v4828, 16
      %v5169 = vrot.slane %v5167, 5
      %v5170 = vsel %vm1605, %v5165, %v5169
      %v5172 = vshrl.u32 %v4829, 16
      %v5174 = vrot.slane %v5172, 4
      %v5175 = vshll.u32 %v4829, 16
      %v5177 = vrot.slane %v5175, 5
      %v5178 = vor.u32 %v5174, %v5177
      %v5179 = vrot.slane %v5178, 4
      %v5181 = vshll.u32 %v4830, 16
      %v5183 = vrot.slane %v5181, 5
      %v5184 = vsel %vm1605, %v5179, %v5183
      %v5185 = vshrl.u32 %v4830, 16
      %v5187 = vrot.slane %v5185, 4
      %v5188 = vor.u32 %v5187, %v5183
      %v5189 = vrot.slane %v5188, 4
      %v5191 = vshll.u32 %v4831, 16
      %v5193 = vrot.slane %v5191, 5
      %v5194 = vsel %vm1605, %v5189, %v5193
      %v5196 = vshrl.u32 %v4832, 16
      %v5198 = vrot.slane %v5196, 4
      %v5199 = vshll.u32 %v4832, 16
      %v5201 = vrot.slane %v5199, 5
      %v5202 = vor.u32 %v5198, %v5201
      %v5203 = vrot.slane %v5202, 4
      %v5205 = vshll.u32 %v4833, 16
      %v5207 = vrot.slane %v5205, 5
      %v5208 = vsel %vm1605, %v5203, %v5207
      %v5209 = vshrl.u32 %v4833, 16
      %v5211 = vrot.slane %v5209, 4
      %v5212 = vor.u32 %v5211, %v5207
      %v5213 = vrot.slane %v5212, 4
      %v5215 = vshll.u32 %v4834, 16
      %v5217 = vrot.slane %v5215, 5
      %v5218 = vsel %vm1605, %v5213, %v5217
      %s5219 = scalar_lea.vmem %s3, 512
      %v5220 = vld [vmem:[%s5219] sm:$0xf]
      %v5221 = vld [vmem:[%s5219 + $0x4] sm:$0xf]
      %v5222 = vld [vmem:[%s5219 + $0x8] sm:$0xf]
      %v5223 = vld [vmem:[%s5219 + $0xc] sm:$0xf]
      %v5224 = vld [vmem:[%s5219 + $0x10] sm:$0xf]
      %v5225 = vld [vmem:[%s5219 + $0x14] sm:$0xf]
      %v5226 = vld [vmem:[%s5219 + $0x18] sm:$0xf]
      %v5227 = vld [vmem:[%s5219 + $0x1c] sm:$0xf]
      %v5228 = vld [vmem:[%s5219 + $0x20] sm:$0xf]
      %v5229 = vld [vmem:[%s5219 + $0x24] sm:$0xf]
      %v5230 = vld [vmem:[%s5219 + $0x28] sm:$0xf]
      %v5231 = vld [vmem:[%s5219 + $0x2c] sm:$0xf]
      %v5232 = vld [vmem:[%s5219 + $0x30] sm:$0xf]
      %v5233 = vld [vmem:[%s5219 + $0x34] sm:$0xf]
      %v5234 = vld [vmem:[%s5219 + $0x38] sm:$0xf]
      %v5235 = vld [vmem:[%s5219 + $0x3c] sm:$0xf]
      %v5236 = vunpack.c.l.b16 %v4848
      %v5237 = vunpack.c.l.b16 %v4858
      %v5238 = vunpack.c.l.b16 %v4872
      %v5239 = vunpack.c.l.b16 %v4882
      %v5240 = vunpack.c.l.b16 %v4896
      %v5241 = vunpack.c.l.b16 %v4906
      %v5242 = vunpack.c.l.b16 %v4920
      %v5243 = vunpack.c.l.b16 %v4930
      %v5244 = vunpack.c.l.b16 %v4944
      %v5245 = vunpack.c.l.b16 %v4954
      %v5246 = vunpack.c.l.b16 %v4968
      %v5247 = vunpack.c.l.b16 %v4978
      %v5248 = vunpack.c.l.b16 %v4992
      %v5249 = vunpack.c.l.b16 %v5002
      %v5250 = vunpack.c.l.b16 %v5016
      %v5251 = vunpack.c.l.b16 %v5026
      %v5252 = vunpack.c.l.b16 %v5040
      %v5253 = vunpack.c.l.b16 %v5050
      %v5254 = vunpack.c.l.b16 %v5064
      %v5255 = vunpack.c.l.b16 %v5074
      %v5256 = vunpack.c.l.b16 %v5088
      %v5257 = vunpack.c.l.b16 %v5098
      %v5258 = vunpack.c.l.b16 %v5112
      %v5259 = vunpack.c.l.b16 %v5122
      %v5260 = vunpack.c.l.b16 %v5136
      %v5261 = vunpack.c.l.b16 %v5146
      %v5262 = vunpack.c.l.b16 %v5160
      %v5263 = vunpack.c.l.b16 %v5170
      %v5264 = vunpack.c.l.b16 %v5184
      %v5265 = vunpack.c.l.b16 %v5194
      %v5266 = vunpack.c.l.b16 %v5208
      %v5267 = vunpack.c.l.b16 %v5218
      %v5268 = vpack.c.b16 %v5237, %v5236
      %v5269 = vpack.c.b16 %v5239, %v5238
      %v5270 = vpack.c.b16 %v5241, %v5240
      %v5271 = vpack.c.b16 %v5243, %v5242
      %v5272 = vpack.c.b16 %v5245, %v5244
      %v5273 = vpack.c.b16 %v5247, %v5246
      %v5274 = vpack.c.b16 %v5249, %v5248
      %v5275 = vpack.c.b16 %v5251, %v5250
      %v5276 = vpack.c.b16 %v5253, %v5252
      %v5277 = vpack.c.b16 %v5255, %v5254
      %v5278 = vpack.c.b16 %v5257, %v5256
      %v5279 = vpack.c.b16 %v5259, %v5258
      %v5280 = vpack.c.b16 %v5261, %v5260
      %v5281 = vpack.c.b16 %v5263, %v5262
      %v5282 = vpack.c.b16 %v5265, %v5264
      %v5283 = vpack.c.b16 %v5267, %v5266
      %v5316 = vunpack.c.l.b16 %v5220
      %v5317 = vunpack.c.l.b16 %v5221
      %v5318 = vunpack.c.l.b16 %v5222
      %v5319 = vunpack.c.l.b16 %v5223
      %v5320 = vunpack.c.l.b16 %v5224
      %v5321 = vunpack.c.l.b16 %v5225
      %v5322 = vunpack.c.l.b16 %v5226
      %v5323 = vunpack.c.l.b16 %v5227
      %v5324 = vunpack.c.l.b16 %v5228
      %v5325 = vunpack.c.l.b16 %v5229
      %v5326 = vunpack.c.l.b16 %v5230
      %v5327 = vunpack.c.l.b16 %v5231
      %v5328 = vunpack.c.l.b16 %v5232
      %v5329 = vunpack.c.l.b16 %v5233
      %v5330 = vunpack.c.l.b16 %v5234
      %v5331 = vunpack.c.l.b16 %v5235
      %v5332 = vpack.c.b16 %v5317, %v5316
      %v5333 = vpack.c.b16 %v5319, %v5318
      %v5334 = vpack.c.b16 %v5321, %v5320
      %v5335 = vpack.c.b16 %v5323, %v5322
      %v5336 = vpack.c.b16 %v5325, %v5324
      %v5337 = vpack.c.b16 %v5327, %v5326
      %v5338 = vpack.c.b16 %v5329, %v5328
      %v5339 = vpack.c.b16 %v5331, %v5330
      %5348 = vmatpush.bf16.msra.mxu0 %v5339
      %5349 = vmatpush.bf16.msra.mxu0 %v5338
      %5350 = vmatpush.bf16.msra.mxu0 %v5337
      %5351 = vmatpush.bf16.msra.mxu0 %v5336
      %5352 = vmatpush.bf16.msra.mxu0 %v5335
      %5353 = vmatpush.bf16.msra.mxu0 %v5334
      %5354 = vmatpush.bf16.msra.mxu0 %v5333
      %5355 = vmatpush.bf16.msra.mxu0 %v5332
      %5356 = vmatmul.bf16.gmra.mxu0 %v5268
      %v5357 = vpop.f32.mrf.mxu0
      %v5358 = vadd.f32 0.0, %v5357
      %v5359 = vpop.f32.mrf.mxu0
      %v5360 = vadd.f32 0.0, %v5359
      %5361 = vmatmul.bf16.gmra.mxu0 %v5269
      %v5362 = vpop.f32.mrf.mxu0
      %v5363 = vadd.f32 0.0, %v5362
      %v5364 = vpop.f32.mrf.mxu0
      %v5365 = vadd.f32 0.0, %v5364
      %5366 = vmatmul.bf16.gmra.mxu0 %v5270
      %v5367 = vpop.f32.mrf.mxu0
      %v5368 = vadd.f32 0.0, %v5367
      %v5369 = vpop.f32.mrf.mxu0
      %v5370 = vadd.f32 0.0, %v5369
      %5371 = vmatmul.bf16.gmra.mxu0 %v5271
      %v5372 = vpop.f32.mrf.mxu0
      %v5373 = vadd.f32 0.0, %v5372
      %v5374 = vpop.f32.mrf.mxu0
      %v5375 = vadd.f32 0.0, %v5374
      %5376 = vmatmul.bf16.gmra.mxu0 %v5272
      %v5377 = vpop.f32.mrf.mxu0
      %v5378 = vadd.f32 0.0, %v5377
      %v5379 = vpop.f32.mrf.mxu0
      %v5380 = vadd.f32 0.0, %v5379
      %5381 = vmatmul.bf16.gmra.mxu0 %v5273
      %v5382 = vpop.f32.mrf.mxu0
      %v5383 = vadd.f32 0.0, %v5382
      %v5384 = vpop.f32.mrf.mxu0
      %v5385 = vadd.f32 0.0, %v5384
      %5386 = vmatmul.bf16.gmra.mxu0 %v5274
      %v5387 = vpop.f32.mrf.mxu0
      %v5388 = vadd.f32 0.0, %v5387
      %v5389 = vpop.f32.mrf.mxu0
      %v5390 = vadd.f32 0.0, %v5389
      %5391 = vmatmul.bf16.gmra.mxu0 %v5275
      %v5392 = vpop.f32.mrf.mxu0
      %v5393 = vadd.f32 0.0, %v5392
      %v5394 = vpop.f32.mrf.mxu0
      %v5395 = vadd.f32 0.0, %v5394
      %5396 = vmatmul.bf16.gmra.mxu0 %v5276
      %v5397 = vpop.f32.mrf.mxu0
      %v5398 = vadd.f32 0.0, %v5397
      %v5399 = vpop.f32.mrf.mxu0
      %v5400 = vadd.f32 0.0, %v5399
      %5401 = vmatmul.bf16.gmra.mxu0 %v5277
      %v5402 = vpop.f32.mrf.mxu0
      %v5403 = vadd.f32 0.0, %v5402
      %v5404 = vpop.f32.mrf.mxu0
      %v5405 = vadd.f32 0.0, %v5404
      %5406 = vmatmul.bf16.gmra.mxu0 %v5278
      %v5407 = vpop.f32.mrf.mxu0
      %v5408 = vadd.f32 0.0, %v5407
      %v5409 = vpop.f32.mrf.mxu0
      %v5410 = vadd.f32 0.0, %v5409
      %5411 = vmatmul.bf16.gmra.mxu0 %v5279
      %v5412 = vpop.f32.mrf.mxu0
      %v5413 = vadd.f32 0.0, %v5412
      %v5414 = vpop.f32.mrf.mxu0
      %v5415 = vadd.f32 0.0, %v5414
      %5416 = vmatmul.bf16.gmra.mxu0 %v5280
      %v5417 = vpop.f32.mrf.mxu0
      %v5418 = vadd.f32 0.0, %v5417
      %v5419 = vpop.f32.mrf.mxu0
      %v5420 = vadd.f32 0.0, %v5419
      %5421 = vmatmul.bf16.gmra.mxu0 %v5281
      %v5422 = vpop.f32.mrf.mxu0
      %v5423 = vadd.f32 0.0, %v5422
      %v5424 = vpop.f32.mrf.mxu0
      %v5425 = vadd.f32 0.0, %v5424
      %5426 = vmatmul.bf16.gmra.mxu0 %v5282
      %v5427 = vpop.f32.mrf.mxu0
      %v5428 = vadd.f32 0.0, %v5427
      %v5429 = vpop.f32.mrf.mxu0
      %v5430 = vadd.f32 0.0, %v5429
      %5431 = vmatmul.bf16.gmra.mxu0 %v5283
      %v5432 = vpop.f32.mrf.mxu0
      %v5433 = vadd.f32 0.0, %v5432
      %v5434 = vpop.f32.mrf.mxu0
      %v5435 = vadd.f32 0.0, %v5434
      %5436 = vdwg.mxu0
      %v5437 = vadd.f32 %v4755, %v5358
      %v5438 = vadd.f32 %v4756, %v5360
      %v5439 = vadd.f32 %v4757, %v5363
      %v5440 = vadd.f32 %v4758, %v5365
      %v5441 = vadd.f32 %v4759, %v5368
      %v5442 = vadd.f32 %v4760, %v5370
      %v5443 = vadd.f32 %v4761, %v5373
      %v5444 = vadd.f32 %v4762, %v5375
      %v5445 = vadd.f32 %v4763, %v5378
      %v5446 = vadd.f32 %v4764, %v5380
      %v5447 = vadd.f32 %v4765, %v5383
      %v5448 = vadd.f32 %v4766, %v5385
      %v5449 = vadd.f32 %v4767, %v5388
      %v5450 = vadd.f32 %v4768, %v5390
      %v5451 = vadd.f32 %v4769, %v5393
      %v5452 = vadd.f32 %v4770, %v5395
      %v5453 = vadd.f32 %v4771, %v5398
      %v5454 = vadd.f32 %v4772, %v5400
      %v5455 = vadd.f32 %v4773, %v5403
      %v5456 = vadd.f32 %v4774, %v5405
      %v5457 = vadd.f32 %v4775, %v5408
      %v5458 = vadd.f32 %v4776, %v5410
      %v5459 = vadd.f32 %v4777, %v5413
      %v5460 = vadd.f32 %v4778, %v5415
      %v5461 = vadd.f32 %v4779, %v5418
      %v5462 = vadd.f32 %v4780, %v5420
      %v5463 = vadd.f32 %v4781, %v5423
      %v5464 = vadd.f32 %v4782, %v5425
      %v5465 = vadd.f32 %v4783, %v5428
      %v5466 = vadd.f32 %v4784, %v5430
      %v5467 = vadd.f32 %v4785, %v5433
      %v5468 = vadd.f32 %v4786, %v5435
      %v5469 = vld [vmem:[%s4] sm:$0x1]
      %v5471 = vperm.slane %v5469, 0
      %v5473 = vadd.f32 %v5437, %v5471
      %v5474 = vadd.f32 %v5438, %v5471
      %v5475 = vadd.f32 %v5439, %v5471
      %v5476 = vadd.f32 %v5440, %v5471
      %v5477 = vadd.f32 %v5441, %v5471
      %v5478 = vadd.f32 %v5442, %v5471
      %v5479 = vadd.f32 %v5443, %v5471
      %v5480 = vadd.f32 %v5444, %v5471
      %v5481 = vadd.f32 %v5445, %v5471
      %v5482 = vadd.f32 %v5446, %v5471
      %v5483 = vadd.f32 %v5447, %v5471
      %v5484 = vadd.f32 %v5448, %v5471
      %v5485 = vadd.f32 %v5449, %v5471
      %v5486 = vadd.f32 %v5450, %v5471
      %v5487 = vadd.f32 %v5451, %v5471
      %v5488 = vadd.f32 %v5452, %v5471
      %v5489 = vadd.f32 %v5453, %v5471
      %v5490 = vadd.f32 %v5454, %v5471
      %v5491 = vadd.f32 %v5455, %v5471
      %v5492 = vadd.f32 %v5456, %v5471
      %v5493 = vadd.f32 %v5457, %v5471
      %v5494 = vadd.f32 %v5458, %v5471
      %v5495 = vadd.f32 %v5459, %v5471
      %v5496 = vadd.f32 %v5460, %v5471
      %v5497 = vadd.f32 %v5461, %v5471
      %v5498 = vadd.f32 %v5462, %v5471
      %v5499 = vadd.f32 %v5463, %v5471
      %v5500 = vadd.f32 %v5464, %v5471
      %v5501 = vadd.f32 %v5465, %v5471
      %v5502 = vadd.f32 %v5466, %v5471
      %v5503 = vadd.f32 %v5467, %v5471
      %v5504 = vadd.f32 %v5468, %v5471
      %v5505 = vmax.f32 %v5473, 0.0
      %v5506 = vmax.f32 %v5474, 0.0
      %v5507 = vmax.f32 %v5475, 0.0
      %v5508 = vmax.f32 %v5476, 0.0
      %v5509 = vmax.f32 %v5477, 0.0
      %v5510 = vmax.f32 %v5478, 0.0
      %v5511 = vmax.f32 %v5479, 0.0
      %v5512 = vmax.f32 %v5480, 0.0
      %v5513 = vmax.f32 %v5481, 0.0
      %v5514 = vmax.f32 %v5482, 0.0
      %v5515 = vmax.f32 %v5483, 0.0
      %v5516 = vmax.f32 %v5484, 0.0
      %v5517 = vmax.f32 %v5485, 0.0
      %v5518 = vmax.f32 %v5486, 0.0
      %v5519 = vmax.f32 %v5487, 0.0
      %v5520 = vmax.f32 %v5488, 0.0
      %v5521 = vmax.f32 %v5489, 0.0
      %v5522 = vmax.f32 %v5490, 0.0
      %v5523 = vmax.f32 %v5491, 0.0
      %v5524 = vmax.f32 %v5492, 0.0
      %v5525 = vmax.f32 %v5493, 0.0
      %v5526 = vmax.f32 %v5494, 0.0
      %v5527 = vmax.f32 %v5495, 0.0
      %v5528 = vmax.f32 %v5496, 0.0
      %v5529 = vmax.f32 %v5497, 0.0
      %v5530 = vmax.f32 %v5498, 0.0
      %v5531 = vmax.f32 %v5499, 0.0
      %v5532 = vmax.f32 %v5500, 0.0
      %v5533 = vmax.f32 %v5501, 0.0
      %v5534 = vmax.f32 %v5502, 0.0
      %v5535 = vmax.f32 %v5503, 0.0
      %v5536 = vmax.f32 %v5504, 0.0
      %5537 = vst [vmem:[%s224] sm:$0xff] %v5505
      %5538 = vst [vmem:[%s224 + $0x8] sm:$0xff] %v5506
      %5539 = vst [vmem:[%s224 + $0x10] sm:$0xff] %v5507
      %5540 = vst [vmem:[%s224 + $0x18] sm:$0xff] %v5508
      %5541 = vst [vmem:[%s224 + $0x20] sm:$0xff] %v5509
      %5542 = vst [vmem:[%s224 + $0x28] sm:$0xff] %v5510
      %5543 = vst [vmem:[%s224 + $0x30] sm:$0xff] %v5511
      %5544 = vst [vmem:[%s224 + $0x38] sm:$0xff] %v5512
      %5545 = vst [vmem:[%s224 + $0x40] sm:$0xff] %v5513
      %5546 = vst [vmem:[%s224 + $0x48] sm:$0xff] %v5514
      %5547 = vst [vmem:[%s224 + $0x50] sm:$0xff] %v5515
      %5548 = vst [vmem:[%s224 + $0x58] sm:$0xff] %v5516
      %5549 = vst [vmem:[%s224 + $0x60] sm:$0xff] %v5517
      %5550 = vst [vmem:[%s224 + $0x68] sm:$0xff] %v5518
      %5551 = vst [vmem:[%s224 + $0x70] sm:$0xff] %v5519
      %5552 = vst [vmem:[%s224 + $0x78] sm:$0xff] %v5520
      %5553 = vst [vmem:[%s224 + $0x80] sm:$0xff] %v5521
      %5554 = vst [vmem:[%s224 + $0x88] sm:$0xff] %v5522
      %5555 = vst [vmem:[%s224 + $0x90] sm:$0xff] %v5523
      %5556 = vst [vmem:[%s224 + $0x98] sm:$0xff] %v5524
      %5557 = vst [vmem:[%s224 + $0xa0] sm:$0xff] %v5525
      %5558 = vst [vmem:[%s224 + $0xa8] sm:$0xff] %v5526
      %5559 = vst [vmem:[%s224 + $0xb0] sm:$0xff] %v5527
      %5560 = vst [vmem:[%s224 + $0xb8] sm:$0xff] %v5528
      %5561 = vst [vmem:[%s224 + $0xc0] sm:$0xff] %v5529
      %5562 = vst [vmem:[%s224 + $0xc8] sm:$0xff] %v5530
      %5563 = vst [vmem:[%s224 + $0xd0] sm:$0xff] %v5531
      %5564 = vst [vmem:[%s224 + $0xd8] sm:$0xff] %v5532
      %5565 = vst [vmem:[%s224 + $0xe0] sm:$0xff] %v5533
      %5566 = vst [vmem:[%s224 + $0xe8] sm:$0xff] %v5534
      %5567 = vst [vmem:[%s224 + $0xf0] sm:$0xff] %v5535
      %5568 = vst [vmem:[%s224 + $0xf8] sm:$0xff] %v5536
      %p5569 = scmp.lt.s32.totalorder %s16, 1
      %s5570 = scalar_select %p5569, %s16, 1
      %s5571 = smul.addr %s5570, 32
      %s5572 = smul.addr %s5571, 8
      %s5573 = scalar_lea.vmem %s5, %s5572
      // Predicated region
      $region41: #{double_conv_pallas.1} parent=39 // pred_check
        %p5574 = pneg %p144
      $region42: #{double_conv_pallas.1} parent=39 // pred_check_branch
        %5576 = sbr.rel (%p5574) target = $region44
      $region43: #{double_conv_pallas.1} parent=39 // pred_region
        _
      $region44: #{double_conv_pallas.1} parent=39 // pred_fallthru
        _
    $region40: #{double_conv_pallas.1} parent=5 // pred_fallthru
      _
    %p5577 = scmp.le.s32.totalorder 2, %s11
    // Predicated region
    $region45: #{double_conv_pallas.1} parent=5 // pred_check
      %p5578 = pneg %p5577
    $region46: #{double_conv_pallas.1} parent=5 // pred_check_branch
      %5580 = sbr.rel (%p5578) target = $region48
    $region47: #{double_conv_pallas.1} parent=5 // pred_region
      %s5581 = ssub.s32 %s11, 2
      // Predicated region
      $region49: #{double_conv_pallas.1} parent=47 // pred_check
        %p5582 = pneg %p150
      $region50: #{double_conv_pallas.1} parent=47 // pred_check_branch
        %5584 = sbr.rel (%p5582) target = $region52
      $region51: #{double_conv_pallas.1} parent=47 // pred_region
        %p5585 = scmp.lt.s32.totalorder %s17, 1
        %s5586 = scalar_select %p5585, %s17, 1
        %s5587 = smul.addr %s5586, 32
        %s5588 = smul.addr %s5587, 8
        %s5589 = scalar_lea.vmem %s5, %s5588
      $region52: #{double_conv_pallas.1} parent=47 // pred_fallthru
        _
    $region48: #{double_conv_pallas.1} parent=5 // pred_fallthru
      _
  $region6: #{double_conv_pallas.1} parent=0 // loop_footer
    %s15 = sadd.s32 1, %s11
  $region7: #{double_conv_pallas.1} parent=0 // loop_footer_branch
    %10 = sbr.rel target = $region3
  $region8: #{double_conv_pallas.1} parent=0 // loop_exit
    _

</llo_original>
